<compile_context>
chip_gen: v7x
topology: tpu7x:2x2x1
jax: 0.10.0
libtpu: 0.0.40
codegen_flags: <defaults>
</compile_context>

<pallas_src>
import functools
import math

import jax
import jax.numpy as jnp
import numpy as np
from jax.experimental import pallas as pl
from jax.experimental.pallas import tpu as pltpu

_INV_SQRT_2PI = 1.0 / math.sqrt(2.0 * math.pi)
_LN3 = math.log(3.0)


# ----------------------------------------------------------------------------
# Head relayout: (Bt*L, H*width) row-major over (b, l) -> (Bt*H, L, width).
# fast=True : single reshape + transpose (one relayout per tensor).
# fast=False: per-head lane slices + leading-axis concat (conservative, known-good).
# ----------------------------------------------------------------------------
def _to_heads(mat, H, width, Bt, L, fast):
    if fast:
        x = mat.reshape(Bt, L, H, width)
        return jnp.transpose(x, (0, 2, 1, 3)).reshape(Bt * H, L, width)
    parts = [mat[:, h * width:(h + 1) * width].reshape(Bt, 1, L, width) for h in range(H)]
    return jnp.concatenate(parts, axis=1).reshape(Bt * H, L, width)


# ----------------------------------------------------------------------------
# Pallas kernel: fused projections + head-batched attention + prior + out proj.
# ----------------------------------------------------------------------------
def _diff_attn_kernel(*refs, H, dk, dv, Bt, L, self_attn, use_bf16, fast):
    if self_attn:
        (xq_ref, sac_ref, nd2_ref, w_all_ref, b_all_ref, wo_ref, bo_ref,
         out_ref, series_ref, prior_ref, sigma_ref) = refs
    else:
        (xq_ref, xk_ref, xv_ref, sac_ref, nd2_ref, w_all_ref, b_all_ref, wo_ref, bo_ref,
         out_ref, series_ref, prior_ref, sigma_ref) = refs

    n_q = H * dk          # fused weight columns are [wq | wk | wv | ws] (sigma last)
    n_k = H * dk
    n_v = H * dv
    mxu_dtype = jnp.bfloat16 if use_bf16 else jnp.float32

    w_all = w_all_ref[...]                    # (D, n_q + n_k + n_v + H)
    b_all = b_all_ref[...]                    # (1, Ntot)
    xq = xq_ref[...]                          # (Bt*L, D)

    # ---- projections (1/sqrt(dk) already folded into wq/bq host-side) ----
    if self_attn:
        proj = jnp.dot(xq, w_all, preferred_element_type=jnp.float32) + b_all
        q = proj[:, :n_q]                                     # lane-aligned slices
        k = proj[:, n_q:n_q + n_k]
        v = proj[:, n_q + n_k:n_q + n_k + n_v]
        sig = proj[:, n_q + n_k + n_v:]
    else:
        xk = xk_ref[...]
        xv = xv_ref[...]
        q = jnp.dot(xq, w_all[:, :n_q], preferred_element_type=jnp.float32) + b_all[:, :n_q]
        k = (jnp.dot(xk, w_all[:, n_q:n_q + n_k], preferred_element_type=jnp.float32)
             + b_all[:, n_q:n_q + n_k])
        v = (jnp.dot(xv, w_all[:, n_q + n_k:n_q + n_k + n_v], preferred_element_type=jnp.float32)
             + b_all[:, n_q + n_k:n_q + n_k + n_v])
        sig = (jnp.dot(xq, w_all[:, n_q + n_k + n_v:], preferred_element_type=jnp.float32)
               + b_all[:, n_q + n_k + n_v:])

    # ---- sigma_t (vectorized over all rows / heads) ----
    sg = 1.0 / (1.0 + jnp.exp(-5.0 * sig)) + 1e-5             # sigmoid(5x) + eps
    sgt = (jnp.exp(sg * _LN3) - 1.0) * sac_ref[...]           # (Bt*L, H) * (Bt*L, 1)
    sigma_ref[...] = sgt                                      # tiny tensor; wrapper reorders

    # ---- head-major staging: one relayout per tensor ----
    qh = _to_heads(q, H, dk, Bt, L, fast)                     # (Bt*H, L, dk)
    kh = _to_heads(k, H, dk, Bt, L, fast)
    vh = _to_heads(v, H, dv, Bt, L, fast)
    sgt_h = _to_heads(sgt, H, 1, Bt, L, fast)                 # (Bt*H, L, 1)

    # ---- scores / softmax: head-batched MXU matmul (bf16 in, f32 accumulate) ----
    scores = jnp.einsum('gld,gsd->gls', qh.astype(mxu_dtype), kh.astype(mxu_dtype),
                        preferred_element_type=jnp.float32)   # (Bt*H, L, L)
    m = jnp.max(scores, axis=-1, keepdims=True)
    e = jnp.exp(scores - m)
    series = e * pl.reciprocal(jnp.sum(e, axis=-1, keepdims=True), approx=True)
    series_ref[...] = series.astype(series_ref.dtype)         # bf16 HBM writeback

    # ---- Gaussian prior (exact reciprocal; -0.5*dist^2 precomputed host-side) ----
    r = 1.0 / sgt_h                                           # (Bt*H, L, 1), tiny
    prior = (_INV_SQRT_2PI * r) * jnp.exp(nd2_ref[...][None, :, :] * (r * r))
    prior_ref[...] = prior.astype(prior_ref.dtype)            # bf16 HBM writeback

    # ---- out = (series @ V) -> out_projection ----
    o = jnp.einsum('gls,gsd->gld', series.astype(mxu_dtype), vh.astype(mxu_dtype),
                   preferred_element_type=jnp.float32)        # (Bt*H, L, dv)
    if fast:
        # single K=H*dv MXU matmul: relayout o back to (Bt*L, H*dv) rows
        o_rows = jnp.transpose(o.reshape(Bt, H, L, dv), (0, 2, 1, 3)).reshape(Bt * L, H * dv)
        out_ref[...] = (jnp.dot(o_rows, wo_ref[...], preferred_element_type=jnp.float32)
                        + bo_ref[...])
    else:
        # conservative fallback: per-head K=dv einsum + head reduction (known-good lowering)
        wo3 = wo_ref[...].reshape(H, dv, -1)
        D = wo3.shape[-1]
        wo_b = wo3
        if Bt > 1:
            wo_b = jnp.broadcast_to(wo3[None], (Bt, H, dv, D)).reshape(Bt * H, dv, D)
        contrib = jnp.einsum('gld,gdn->gln', o, wo_b, preferred_element_type=jnp.float32)
        out = jnp.sum(contrib.reshape(Bt, H, L, D), axis=1) + bo_ref[...]
        out_ref[...] = out.reshape(Bt * L, D)


# ----------------------------------------------------------------------------
# Generation-aware helpers.
# ----------------------------------------------------------------------------
def _device_kind():
    try:
        return jax.devices()[0].device_kind.lower()
    except Exception:  # pragma: no cover
        return ""


def _choose_bt(B, L, device_kind=""):
    """Batch tile: fill the MXU M-dim, keep >= 2 'parallel' grid steps (even count on v7x)."""
    target_rows = 128 if "v5" in device_kind else 256     # v5e MXU is 128 deep
    need_even_grid = "7" in device_kind                   # v7x: 2 TensorCores / chip
    target = max(1, pl.cdiv(target_rows, L))
    cands = [bt for bt in range(1, B + 1)
             if B % bt == 0 and (bt == B or (bt * L) % 8 == 0)]

    def ok(bt, even_req):
        g = B // bt
        return bt <= target and g >= 2 and (not even_req or g % 2 == 0)

    good = [bt for bt in cands if ok(bt, need_even_grid)]
    if not good:
        good = [bt for bt in cands if ok(bt, False)]
    if good:
        return max(good)
    return min(cands, key=lambda c: abs(c - target))


def _vmem_limit_bytes(Bt, L, D, H, dk, dv, n_in, assoc_itemsize):
    """Rough per-step VMEM footprint; raise the scoped limit only when needed."""
    f32 = 4
    rows = Bt * L
    ntot = H * (dk + dk + dv + 1)
    est = 0
    est += 2 * n_in * rows * D * f32                               # activation inputs (x2 buf)
    est += 2 * rows * f32                                          # sac
    est += (D * ntot + ntot + (H * dv) * D + D + L * L) * f32      # constants (single-buffered)
    est += 2 * rows * D * f32                                      # out block (x2 buf)
    est += 2 * 2 * Bt * H * L * L * assoc_itemsize                 # series + prior (x2 buf)
    est += 2 * rows * H * f32                                      # sigma
    est += 6 * Bt * H * L * L * f32                                # scores/e/series/prior temps
    est += 8 * rows * max(H * dk, H * dv, ntot) * f32              # proj/q/k/v/o temps
    est = int(est * 1.25)
    if est <= (32 << 20):
        return None
    # TODO(synk): at very large L, add a query-tile grid axis instead of only raising the limit.
    return min(est, 128 << 20)


# ----------------------------------------------------------------------------
# Wrapper (glue): weight fusion, schedule gather, pallas_call, reshapes.
# ----------------------------------------------------------------------------
def diffusion_attention_layer(params, queries, keys, values, attn_mask,
                              sqrt_alphas_cumprod, t, n_heads,
                              use_bf16=True, assoc_dtype=jnp.bfloat16):
    del attn_mask  # TODO(synk): attn_mask / dropout unused (eval-mode full attention)
    B, L, D = queries.shape
    S = keys.shape[1]
    assert S == L, "prior is defined on a square |i-j| grid (self-attention usage)"
    H = n_heads
    dk = params["wq"].shape[1] // H
    dv = params["wv"].shape[1] // H

    # NOTE: object-identity check; equal-but-distinct arrays take the (slower) multi-matmul path.
    self_attn = (queries is keys) and (queries is values)

    # per-row diffusion scale (glue, plain JAX)
    sac = sqrt_alphas_cumprod[t].astype(jnp.float32)                          # (B,)
    sac_rows = jnp.broadcast_to(sac[:, None, None], (B, L, 1)).reshape(B * L, 1)

    # fused projection weight [wq | wk | wv | ws]; 1/sqrt(dk) folded into wq/bq
    inv_sqrt_dk = 1.0 / math.sqrt(dk)
    w_all = jnp.concatenate([params["wq"] * inv_sqrt_dk, params["wk"],
                             params["wv"], params["ws"]], axis=1)
    b_all = jnp.concatenate([params["bq"] * inv_sqrt_dk, params["bk"],
                             params["bv"], params["bs"]], axis=1)
    wo = params["wo"]                                                          # (H*dv, D)
    bo = params["bo"]                                                          # (1, D)

    idx = jnp.arange(L, dtype=jnp.float32)
    neg_half_dist2 = -0.5 * jnp.square(idx[:, None] - idx[None, :])            # (L, L) constant

    kind = _device_kind()
    Bt = _choose_bt(B, L, kind)
    G = B // Bt

    n_in = 1 if self_attn else 3
    vmem_limit = _vmem_limit_bytes(Bt, L, D, H, dk, dv, n_in, jnp.dtype(assoc_dtype).itemsize)
    cparams = pltpu.CompilerParams(dimension_semantics=("parallel",),
                                   vmem_limit_bytes=vmem_limit)

    out_shapes = (
        jax.ShapeDtypeStruct((B * L, D), jnp.float32),        # out_projection(out), row-major
        jax.ShapeDtypeStruct((B * H, L, L), assoc_dtype),     # series (head-major, lane-dense L)
        jax.ShapeDtypeStruct((B * H, L, L), assoc_dtype),     # prior
        jax.ShapeDtypeStruct((B * L, H), jnp.float32),        # sigma_t (row-major; tiny)
    )
    out_specs = (
        pl.BlockSpec((Bt * L, D), lambda g: (g, 0)),
        pl.BlockSpec((Bt * H, L, L), lambda g: (g, 0, 0)),
        pl.BlockSpec((Bt * H, L, L), lambda g: (g, 0, 0)),
        pl.BlockSpec((Bt * L, H), lambda g: (g, 0)),
    )
    row_spec = pl.BlockSpec((Bt * L, D), lambda g: (g, 0))
    consts = (neg_half_dist2, w_all, b_all, wo, bo)

    def _const_spec(shape, single_buffer):
        ndim = len(shape)
        imap = lambda g: (0,) * ndim
        if single_buffer:
            # block index is constant across the grid -> fetch once, no double-buffering
            return pl.BlockSpec(shape, imap, pipeline_mode=pl.Buffered(1))
        return pl.BlockSpec(shape, imap)

    def _run(fast, single_buffer_consts):
        kernel = functools.partial(_diff_attn_kernel, H=H, dk=dk, dv=dv, Bt=Bt, L=L,
                                   self_attn=self_attn, use_bf16=use_bf16, fast=fast)
        in_specs = [row_spec]
        args = [queries.reshape(B * L, D)]
        if not self_attn:
            in_specs += [row_spec, row_spec]
            args += [keys.reshape(B * L, D), values.reshape(B * L, D)]
        in_specs.append(pl.BlockSpec((Bt * L, 1), lambda g: (g, 0)))
        args.append(sac_rows)
        for cst in consts:
            in_specs.append(_const_spec(cst.shape, single_buffer_consts))
            args.append(cst)
        return pl.pallas_call(
            kernel,
            out_shape=out_shapes,
            grid=(G,),
            in_specs=in_specs,
            out_specs=out_specs,
            compiler_params=cparams,
        )(*args)

    # Try the fast configuration first (fused relayouts, K=H*dv out-proj matmul,
    # single-buffered constants); fall back to more conservative lowerings if rejected.
    res, last_err = None, None
    for fast, single_buf in ((True, True), (True, False), (False, False)):
        try:
            res = jax.block_until_ready(_run(fast, single_buf))
            break
        except Exception as err:  # noqa: BLE001 - deliberate lowering fallback
            res, last_err = None, err
    if res is None:
        raise last_err

    out_rows, series_g, prior_g, sigma_rows = res
    out = out_rows.reshape(B, L, D)
    series = series_g.reshape(B, H, L, L)
    prior = prior_g.reshape(B, H, L, L)
    sigma_t = jnp.transpose(sigma_rows.reshape(B, L, H), (0, 2, 1))           # (B, H, L)
    return out, series, prior, sigma_t


# ----------------------------------------------------------------------------
# Pure-JAX reference (correctness sanity check).
# ----------------------------------------------------------------------------
def reference_forward(p, xq, xk, xv, sac, H):
    B, L, D = xq.shape
    dk = p["wq"].shape[1] // H
    dv = p["wv"].shape[1] // H
    q = (xq @ p["wq"] + p["bq"]).reshape(B, L, H, dk)
    k = (xk @ p["wk"] + p["bk"]).reshape(B, L, H, dk)
    v = (xv @ p["wv"] + p["bv"]).reshape(B, L, H, dv)
    sig = xq @ p["ws"] + p["bs"]                              # (B, L, H)

    scores = jnp.einsum("blhe,bshe->bhls", q, k) / math.sqrt(dk)
    series = jax.nn.softmax(scores, axis=-1)

    sg = jax.nn.sigmoid(5.0 * sig) + 1e-5
    sg = jnp.exp(sg * math.log(3.0)) - 1.0
    sgt = jnp.transpose(sg * sac[:, None, None], (0, 2, 1))   # (B, H, L)

    i = jnp.arange(L)
    dist = jnp.abs(i[:, None] - i[None, :]).astype(jnp.float32)
    s4 = sgt[..., None]
    prior = (1.0 / (math.sqrt(2.0 * math.pi) * s4)) * jnp.exp(-(dist ** 2) / (2.0 * s4 ** 2))

    o = jnp.einsum("bhls,bshd->blhd", series, v).reshape(B, L, H * dv)
    out = o @ p["wo"] + p["bo"]
    return out, series, prior, sgt


def init_params(key, d_model, n_heads, d_keys, d_values):
    ks = jax.random.split(key, 5)
    std = 1.0 / math.sqrt(d_model)
    return {
        "wq": jax.random.normal(ks[0], (d_model, d_keys * n_heads), jnp.float32) * std,
        "bq": jnp.zeros((1, d_keys * n_heads), jnp.float32),
        "wk": jax.random.normal(ks[1], (d_model, d_keys * n_heads), jnp.float32) * std,
        "bk": jnp.zeros((1, d_keys * n_heads), jnp.float32),
        "wv": jax.random.normal(ks[2], (d_model, d_values * n_heads), jnp.float32) * std,
        "bv": jnp.zeros((1, d_values * n_heads), jnp.float32),
        "ws": jax.random.normal(ks[3], (d_model, n_heads), jnp.float32) * std,
        "bs": jnp.zeros((1, n_heads), jnp.float32),
        "wo": jax.random.normal(ks[4], (d_values * n_heads, d_model), jnp.float32)
              * (1.0 / math.sqrt(d_values * n_heads)),
        "bo": jnp.zeros((1, d_model), jnp.float32),
    }


if __name__ == "__main__":
    B, L, d_model, n_heads = 2, 8, 32, 4
    d_keys = d_values = d_model // n_heads
    T_diff = 10

    root = jax.random.PRNGKey(0)
    kx, kp, kt = jax.random.split(root, 3)
    x = jax.random.normal(kx, (B, L, d_model), jnp.float32)
    queries = keys_in = values_in = x          # self-attention -> fused single-matmul path
    params = init_params(kp, d_model, n_heads, d_keys, d_values)

    # deterministic diffusion schedule
    betas = jnp.linspace(1e-4, 2e-2, T_diff, dtype=jnp.float32)
    alphas_cumprod = jnp.cumprod(1.0 - betas)
    sqrt_alphas_cumprod = jnp.sqrt(alphas_cumprod)            # (T_diff,)
    t = jnp.array([3, 7], dtype=jnp.int32)                    # (B,)

    out, series, prior, sigma_t = jax.block_until_ready(
        diffusion_attention_layer(params, queries, keys_in, values_in, None,
                                  sqrt_alphas_cumprod, t, n_heads))

    # sanity check against the pure-JAX reference
    sac = sqrt_alphas_cumprod[t]
    r_out, r_series, r_prior, r_sigma = reference_forward(
        params, queries, keys_in, values_in, sac, n_heads)

    np.testing.assert_allclose(np.asarray(out), np.asarray(r_out), rtol=1e-2, atol=1e-2)
    np.testing.assert_allclose(np.asarray(series.astype(jnp.float32)),
                               np.asarray(r_series), rtol=1e-2, atol=1e-2)
    np.testing.assert_allclose(np.asarray(prior.astype(jnp.float32)),
                               np.asarray(r_prior), rtol=1e-2, atol=1e-2)
    np.testing.assert_allclose(np.asarray(sigma_t), np.asarray(r_sigma), rtol=1e-2, atol=1e-2)

    assert out.shape == (B, L, d_model)
    assert series.shape == (B, n_heads, L, L)
    assert prior.shape == (B, n_heads, L, L)
    assert sigma_t.shape == (B, n_heads, L)
    print("KERNEL_OK")
</pallas_src>

<mosaic_0001>
module attributes {stable_mosaic.version = 11 : i64} {
  func.func @_diff_attn_kernel(%arg0: i32, %arg1: memref<8x32xf32, #tpu.memory_space<vmem>>, %arg2: memref<8x1xf32, #tpu.memory_space<vmem>>, %arg3: memref<8x8xf32, #tpu.memory_space<vmem>>, %arg4: memref<32x100xf32, #tpu.memory_space<vmem>>, %arg5: memref<1x100xf32, #tpu.memory_space<vmem>>, %arg6: memref<32x32xf32, #tpu.memory_space<vmem>>, %arg7: memref<1x32xf32, #tpu.memory_space<vmem>>, %arg8: memref<8x32xf32, #tpu.memory_space<vmem>>, %arg9: memref<4x8x8xbf16, #tpu.memory_space<vmem>>, %arg10: memref<4x8x8xbf16, #tpu.memory_space<vmem>>, %arg11: memref<8x4xf32, #tpu.memory_space<vmem>>) attributes {dimension_semantics = [#tpu.dimension_semantics<parallel>], iteration_bounds = array<i64: 2>, scalar_prefetch = 0 : i64, scratch_operands = 0 : i64, tpu.core_type = #tpu.core_type<tc>, window_params = [{transform_indices = @transform_0, window_bounds = array<i64: 8, 32>}, {transform_indices = @transform_1, window_bounds = array<i64: 8, 1>}, {pipeline_mode = #tpu.pipeline_mode<synchronous>, transform_indices = @transform_2, window_bounds = array<i64: 8, 8>}, {pipeline_mode = #tpu.pipeline_mode<synchronous>, transform_indices = @transform_3, window_bounds = array<i64: 32, 100>}, {pipeline_mode = #tpu.pipeline_mode<synchronous>, transform_indices = @transform_4, window_bounds = array<i64: 1, 100>}, {pipeline_mode = #tpu.pipeline_mode<synchronous>, transform_indices = @transform_5, window_bounds = array<i64: 32, 32>}, {pipeline_mode = #tpu.pipeline_mode<synchronous>, transform_indices = @transform_6, window_bounds = array<i64: 1, 32>}, {transform_indices = @transform_7, window_bounds = array<i64: 8, 32>}, {transform_indices = @transform_8, window_bounds = array<i64: 4, 8, 8>}, {transform_indices = @transform_9, window_bounds = array<i64: 4, 8, 8>}, {transform_indices = @transform_10, window_bounds = array<i64: 8, 4>}]} {
    %c0 = arith.constant 0 : index
    %c0_0 = arith.constant 0 : index
    %0 = vector.load %arg4[%c0, %c0_0] : memref<32x100xf32, #tpu.memory_space<vmem>>, vector<32x100xf32>
    %c0_1 = arith.constant 0 : index
    %c0_2 = arith.constant 0 : index
    %1 = vector.load %arg5[%c0_1, %c0_2] : memref<1x100xf32, #tpu.memory_space<vmem>>, vector<1x100xf32>
    %c0_3 = arith.constant 0 : index
    %c0_4 = arith.constant 0 : index
    %2 = vector.load %arg1[%c0_3, %c0_4] : memref<8x32xf32, #tpu.memory_space<vmem>>, vector<8x32xf32>
    %cst = arith.constant dense<0.000000e+00> : vector<8x100xf32>
    %3 = tpu.matmul %2, %0, %cst {dimension_numbers = #tpu.dot_dimension_numbers<[1], [0], [0], [1], [0, 0, 1, 1], [], []>} : vector<8x32xf32>, vector<32x100xf32>, vector<8x100xf32> -> vector<8x100xf32>
    %4 = vector.broadcast %1 : vector<1x100xf32> to vector<8x100xf32>
    %5 = arith.addf %3, %4 : vector<8x100xf32>
    %6 = vector.extract_strided_slice %5 {offsets = [0, 0], sizes = [8, 32], strides = [1, 1]} : vector<8x100xf32> to vector<8x32xf32>
    %7 = vector.extract_strided_slice %5 {offsets = [0, 32], sizes = [8, 32], strides = [1, 1]} : vector<8x100xf32> to vector<8x32xf32>
    %8 = vector.extract_strided_slice %5 {offsets = [0, 64], sizes = [8, 32], strides = [1, 1]} : vector<8x100xf32> to vector<8x32xf32>
    %9 = vector.extract_strided_slice %5 {offsets = [0, 96], sizes = [8, 4], strides = [1, 1]} : vector<8x100xf32> to vector<8x4xf32>
    %cst_5 = arith.constant -5.000000e+00 : f32
    %10 = vector.broadcast %cst_5 : f32 to vector<8x4xf32>
    %11 = arith.mulf %10, %9 : vector<8x4xf32>
    %12 = math.exp %11 : vector<8x4xf32>
    %cst_6 = arith.constant 1.000000e+00 : f32
    %13 = vector.broadcast %cst_6 : f32 to vector<8x4xf32>
    %14 = arith.addf %13, %12 : vector<8x4xf32>
    %cst_7 = arith.constant 1.000000e+00 : f32
    %15 = vector.broadcast %cst_7 : f32 to vector<8x4xf32>
    %16 = arith.divf %15, %14 : vector<8x4xf32>
    %cst_8 = arith.constant 9.99999974E-6 : f32
    %17 = vector.broadcast %cst_8 : f32 to vector<8x4xf32>
    %18 = arith.addf %16, %17 : vector<8x4xf32>
    %cst_9 = arith.constant 1.09861231 : f32
    %19 = vector.broadcast %cst_9 : f32 to vector<8x4xf32>
    %20 = arith.mulf %18, %19 : vector<8x4xf32>
    %21 = math.exp %20 : vector<8x4xf32>
    %cst_10 = arith.constant 1.000000e+00 : f32
    %22 = vector.broadcast %cst_10 : f32 to vector<8x4xf32>
    %23 = arith.subf %21, %22 : vector<8x4xf32>
    %c0_11 = arith.constant 0 : index
    %c0_12 = arith.constant 0 : index
    %24 = vector.load %arg2[%c0_11, %c0_12] : memref<8x1xf32, #tpu.memory_space<vmem>>, vector<8x1xf32>
    %25 = vector.broadcast %24 : vector<8x1xf32> to vector<8x4xf32>
    %26 = arith.mulf %23, %25 : vector<8x4xf32>
    %c0_13 = arith.constant 0 : index
    %c0_14 = arith.constant 0 : index
    %27 = vector.load %arg11[%c0_13, %c0_14] : memref<8x4xf32, #tpu.memory_space<vmem>>, vector<8x4xf32>
    tpu.vector_store %arg11[%c0_13, %c0_14], %26 {strides = array<i32>} : memref<8x4xf32, #tpu.memory_space<vmem>>, vector<8x4xf32>,
    %28 = vector.shape_cast %6 : vector<8x32xf32> to vector<1x8x4x8xf32>
    %29 = tpu.transpose %28, [0, 2, 1, 3] : vector<1x8x4x8xf32> -> vector<1x4x8x8xf32>
    %30 = vector.shape_cast %29 : vector<1x4x8x8xf32> to vector<4x8x8xf32>
    %31 = vector.shape_cast %7 : vector<8x32xf32> to vector<1x8x4x8xf32>
    %32 = tpu.transpose %31, [0, 2, 1, 3] : vector<1x8x4x8xf32> -> vector<1x4x8x8xf32>
    %33 = vector.shape_cast %32 : vector<1x4x8x8xf32> to vector<4x8x8xf32>
    %34 = vector.shape_cast %8 : vector<8x32xf32> to vector<1x8x4x8xf32>
    %35 = tpu.transpose %34, [0, 2, 1, 3] : vector<1x8x4x8xf32> -> vector<1x4x8x8xf32>
    %36 = vector.shape_cast %35 : vector<1x4x8x8xf32> to vector<4x8x8xf32>
    %37 = vector.shape_cast %26 : vector<8x4xf32> to vector<1x8x4x1xf32>
    %38 = tpu.transpose %37, [0, 2, 1, 3] : vector<1x8x4x1xf32> -> vector<1x4x8x1xf32>
    %39 = vector.shape_cast %38 : vector<1x4x8x1xf32> to vector<4x8x1xf32>
    %40 = arith.truncf %30 : vector<4x8x8xf32> to vector<4x8x8xbf16>
    %41 = arith.truncf %33 : vector<4x8x8xf32> to vector<4x8x8xbf16>
    "tpu.trace_start"() <{level = 10 : i32, message = "gld,gsd->gls"}> : () -> ()
    %cst_15 = arith.constant dense<0.000000e+00> : vector<4x8x8xf32>
    %42 = tpu.matmul %40, %41, %cst_15 {dimension_numbers = #tpu.dot_dimension_numbers<[2], [2], [1], [1], [0, 0, 0, 1, 1, 1], [0], [0]>} : vector<4x8x8xbf16>, vector<4x8x8xbf16>, vector<4x8x8xf32> -> vector<4x8x8xf32>
    "tpu.trace_stop"() : () -> ()
    %cst_16 = arith.constant dense<0xFF800000> : vector<4x8xf32>
    %43 = vector.multi_reduction <maximumf>, %42, %cst_16 [2] : vector<4x8x8xf32> to vector<4x8xf32>
    %44 = vector.shape_cast %43 : vector<4x8xf32> to vector<4x8x1xf32>
    %45 = vector.broadcast %44 : vector<4x8x1xf32> to vector<4x8x8xf32>
    %46 = arith.subf %42, %45 : vector<4x8x8xf32>
    %47 = math.exp %46 : vector<4x8x8xf32>
    %cst_17 = arith.constant dense<0.000000e+00> : vector<4x8xf32>
    %48 = vector.multi_reduction <add>, %47, %cst_17 [2] : vector<4x8x8xf32> to vector<4x8xf32>
    %49 = vector.shape_cast %48 : vector<4x8xf32> to vector<4x8x1xf32>
    %50 = tpu.reciprocal %49 {approx = true} : vector<4x8x1xf32> -> vector<4x8x1xf32>
    %51 = vector.broadcast %50 : vector<4x8x1xf32> to vector<4x8x8xf32>
    %52 = arith.mulf %47, %51 : vector<4x8x8xf32>
    %53 = arith.truncf %52 : vector<4x8x8xf32> to vector<4x8x8xbf16>
    %c0_18 = arith.constant 0 : index
    %c0_19 = arith.constant 0 : index
    %c0_20 = arith.constant 0 : index
    %54 = vector.load %arg9[%c0_18, %c0_19, %c0_20] : memref<4x8x8xbf16, #tpu.memory_space<vmem>>, vector<4x8x8xbf16>
    tpu.vector_store %arg9[%c0_18, %c0_19, %c0_20], %53 {strides = array<i32>} : memref<4x8x8xbf16, #tpu.memory_space<vmem>>, vector<4x8x8xbf16>,
    %cst_21 = arith.constant 1.000000e+00 : f32
    %55 = vector.broadcast %cst_21 : f32 to vector<4x8x1xf32>
    %56 = arith.divf %55, %39 : vector<4x8x1xf32>
    %cst_22 = arith.constant 0.398942292 : f32
    %57 = vector.broadcast %cst_22 : f32 to vector<4x8x1xf32>
    %58 = arith.mulf %57, %56 : vector<4x8x1xf32>
    %c0_23 = arith.constant 0 : index
    %c0_24 = arith.constant 0 : index
    %59 = vector.load %arg3[%c0_23, %c0_24] : memref<8x8xf32, #tpu.memory_space<vmem>>, vector<8x8xf32>
    %60 = vector.shape_cast %59 : vector<8x8xf32> to vector<1x8x8xf32>
    %61 = arith.mulf %56, %56 : vector<4x8x1xf32>
    %62 = vector.broadcast %60 : vector<1x8x8xf32> to vector<4x8x8xf32>
    %63 = vector.broadcast %61 : vector<4x8x1xf32> to vector<4x8x8xf32>
    %64 = arith.mulf %62, %63 : vector<4x8x8xf32>
    %65 = math.exp %64 : vector<4x8x8xf32>
    %66 = vector.broadcast %58 : vector<4x8x1xf32> to vector<4x8x8xf32>
    %67 = arith.mulf %66, %65 : vector<4x8x8xf32>
    %68 = arith.truncf %67 : vector<4x8x8xf32> to vector<4x8x8xbf16>
    %c0_25 = arith.constant 0 : index
    %c0_26 = arith.constant 0 : index
    %c0_27 = arith.constant 0 : index
    %69 = vector.load %arg10[%c0_25, %c0_26, %c0_27] : memref<4x8x8xbf16, #tpu.memory_space<vmem>>, vector<4x8x8xbf16>
    tpu.vector_store %arg10[%c0_25, %c0_26, %c0_27], %68 {strides = array<i32>} : memref<4x8x8xbf16, #tpu.memory_space<vmem>>, vector<4x8x8xbf16>,
    %70 = arith.truncf %52 : vector<4x8x8xf32> to vector<4x8x8xbf16>
    %71 = arith.truncf %36 : vector<4x8x8xf32> to vector<4x8x8xbf16>
    "tpu.trace_start"() <{level = 10 : i32, message = "gls,gsd->gld"}> : () -> ()
    %cst_28 = arith.constant dense<0.000000e+00> : vector<4x8x8xf32>
    %72 = tpu.matmul %70, %71, %cst_28 {dimension_numbers = #tpu.dot_dimension_numbers<[2], [1], [1], [2], [0, 0, 0, 1, 1, 2], [0], [0]>} : vector<4x8x8xbf16>, vector<4x8x8xbf16>, vector<4x8x8xf32> -> vector<4x8x8xf32>
    "tpu.trace_stop"() : () -> ()
    %73 = vector.shape_cast %72 : vector<4x8x8xf32> to vector<1x4x8x8xf32>
    %74 = tpu.transpose %73, [0, 2, 1, 3] : vector<1x4x8x8xf32> -> vector<1x8x4x8xf32>
    %75 = vector.shape_cast %74 : vector<1x8x4x8xf32> to vector<8x32xf32>
    %c0_29 = arith.constant 0 : index
    %c0_30 = arith.constant 0 : index
    %76 = vector.load %arg6[%c0_29, %c0_30] : memref<32x32xf32, #tpu.memory_space<vmem>>, vector<32x32xf32>
    %cst_31 = arith.constant dense<0.000000e+00> : vector<8x32xf32>
    %77 = tpu.matmul %75, %76, %cst_31 {dimension_numbers = #tpu.dot_dimension_numbers<[1], [0], [0], [1], [0, 0, 1, 1], [], []>} : vector<8x32xf32>, vector<32x32xf32>, vector<8x32xf32> -> vector<8x32xf32>
    %c0_32 = arith.constant 0 : index
    %c0_33 = arith.constant 0 : index
    %78 = vector.load %arg7[%c0_32, %c0_33] : memref<1x32xf32, #tpu.memory_space<vmem>>, vector<1x32xf32>
    %79 = vector.broadcast %78 : vector<1x32xf32> to vector<8x32xf32>
    %80 = arith.addf %77, %79 : vector<8x32xf32>
    %c0_34 = arith.constant 0 : index
    %c0_35 = arith.constant 0 : index
    %81 = vector.load %arg8[%c0_34, %c0_35] : memref<8x32xf32, #tpu.memory_space<vmem>>, vector<8x32xf32>
    tpu.vector_store %arg8[%c0_34, %c0_35], %80 {strides = array<i32>} : memref<8x32xf32, #tpu.memory_space<vmem>>, vector<8x32xf32>,
    return
  }
  func.func @transform_0(%arg0: i32) -> (i32, i32) {
    %c0_i32 = arith.constant 0 : i32
    %c0_i32_0 = arith.constant 0 : i32
    return %arg0, %c0_i32 : i32, i32
  }
  func.func @transform_1(%arg0: i32) -> (i32, i32) {
    %c0_i32 = arith.constant 0 : i32
    %c0_i32_0 = arith.constant 0 : i32
    return %arg0, %c0_i32 : i32, i32
  }
  func.func @transform_2(%arg0: i32) -> (i32, i32) {
    %c0_i32 = arith.constant 0 : i32
    %c0_i32_0 = arith.constant 0 : i32
    %c0_i32_1 = arith.constant 0 : i32
    return %c0_i32, %c0_i32_0 : i32, i32
  }
  func.func @transform_3(%arg0: i32) -> (i32, i32) {
    %c0_i32 = arith.constant 0 : i32
    %c0_i32_0 = arith.constant 0 : i32
    %c0_i32_1 = arith.constant 0 : i32
    return %c0_i32, %c0_i32_0 : i32, i32
  }
  func.func @transform_4(%arg0: i32) -> (i32, i32) {
    %c0_i32 = arith.constant 0 : i32
    %c0_i32_0 = arith.constant 0 : i32
    %c0_i32_1 = arith.constant 0 : i32
    return %c0_i32, %c0_i32_0 : i32, i32
  }
  func.func @transform_5(%arg0: i32) -> (i32, i32) {
    %c0_i32 = arith.constant 0 : i32
    %c0_i32_0 = arith.constant 0 : i32
    %c0_i32_1 = arith.constant 0 : i32
    return %c0_i32, %c0_i32_0 : i32, i32
  }
  func.func @transform_6(%arg0: i32) -> (i32, i32) {
    %c0_i32 = arith.constant 0 : i32
    %c0_i32_0 = arith.constant 0 : i32
    %c0_i32_1 = arith.constant 0 : i32
    return %c0_i32, %c0_i32_0 : i32, i32
  }
  func.func @transform_7(%arg0: i32) -> (i32, i32) {
    %c0_i32 = arith.constant 0 : i32
    %c0_i32_0 = arith.constant 0 : i32
    return %arg0, %c0_i32 : i32, i32
  }
  func.func @transform_8(%arg0: i32) -> (i32, i32, i32) {
    %c0_i32 = arith.constant 0 : i32
    %c0_i32_0 = arith.constant 0 : i32
    %c0_i32_1 = arith.constant 0 : i32
    return %arg0, %c0_i32, %c0_i32_0 : i32, i32, i32
  }
  func.func @transform_9(%arg0: i32) -> (i32, i32, i32) {
    %c0_i32 = arith.constant 0 : i32
    %c0_i32_0 = arith.constant 0 : i32
    %c0_i32_1 = arith.constant 0 : i32
    return %arg0, %c0_i32, %c0_i32_0 : i32, i32, i32
  }
  func.func @transform_10(%arg0: i32) -> (i32, i32) {
    %c0_i32 = arith.constant 0 : i32
    %c0_i32_0 = arith.constant 0 : i32
    return %arg0, %c0_i32 : i32, i32
  }
}

module attributes {stable_mosaic.version = 11 : i64} {
  func.func @_diff_attn_kernel(%arg0: i32, %arg1: memref<8x32xf32, #tpu.memory_space<vmem>>, %arg2: memref<8x1xf32, #tpu.memory_space<vmem>>, %arg3: memref<8x8xf32, #tpu.memory_space<vmem>>, %arg4: memref<32x100xf32, #tpu.memory_space<vmem>>, %arg5: memref<1x100xf32, #tpu.memory_space<vmem>>, %arg6: memref<32x32xf32, #tpu.memory_space<vmem>>, %arg7: memref<1x32xf32, #tpu.memory_space<vmem>>, %arg8: memref<8x32xf32, #tpu.memory_space<vmem>>, %arg9: memref<4x8x8xbf16, #tpu.memory_space<vmem>>, %arg10: memref<4x8x8xbf16, #tpu.memory_space<vmem>>, %arg11: memref<8x4xf32, #tpu.memory_space<vmem>>) attributes {dimension_semantics = [#tpu.dimension_semantics<parallel>], iteration_bounds = array<i64: 2>, scalar_prefetch = 0 : i64, scratch_operands = 0 : i64, tpu.core_type = #tpu.core_type<tc>, window_params = [{transform_indices = @transform_0, window_bounds = array<i64: 8, 32>}, {transform_indices = @transform_1, window_bounds = array<i64: 8, 1>}, {pipeline_mode = #tpu.pipeline_mode<synchronous>, transform_indices = @transform_2, window_bounds = array<i64: 8, 8>}, {pipeline_mode = #tpu.pipeline_mode<synchronous>, transform_indices = @transform_3, window_bounds = array<i64: 32, 100>}, {pipeline_mode = #tpu.pipeline_mode<synchronous>, transform_indices = @transform_4, window_bounds = array<i64: 1, 100>}, {pipeline_mode = #tpu.pipeline_mode<synchronous>, transform_indices = @transform_5, window_bounds = array<i64: 32, 32>}, {pipeline_mode = #tpu.pipeline_mode<synchronous>, transform_indices = @transform_6, window_bounds = array<i64: 1, 32>}, {transform_indices = @transform_7, window_bounds = array<i64: 8, 32>}, {transform_indices = @transform_8, window_bounds = array<i64: 4, 8, 8>}, {transform_indices = @transform_9, window_bounds = array<i64: 4, 8, 8>}, {transform_indices = @transform_10, window_bounds = array<i64: 8, 4>}]} {
    %c0 = arith.constant 0 : index
    %c0_0 = arith.constant 0 : index
    %0 = vector.load %arg4[%c0, %c0_0] : memref<32x100xf32, #tpu.memory_space<vmem>>, vector<32x100xf32>
    %c0_1 = arith.constant 0 : index
    %c0_2 = arith.constant 0 : index
    %1 = vector.load %arg5[%c0_1, %c0_2] : memref<1x100xf32, #tpu.memory_space<vmem>>, vector<1x100xf32>
    %c0_3 = arith.constant 0 : index
    %c0_4 = arith.constant 0 : index
    %2 = vector.load %arg1[%c0_3, %c0_4] : memref<8x32xf32, #tpu.memory_space<vmem>>, vector<8x32xf32>
    %cst = arith.constant dense<0.000000e+00> : vector<8x100xf32>
    %3 = tpu.matmul %2, %0, %cst {dimension_numbers = #tpu.dot_dimension_numbers<[1], [0], [0], [1], [0, 0, 1, 1], [], []>} : vector<8x32xf32>, vector<32x100xf32>, vector<8x100xf32> -> vector<8x100xf32>
    %4 = vector.broadcast %1 : vector<1x100xf32> to vector<8x100xf32>
    %5 = arith.addf %3, %4 : vector<8x100xf32>
    %6 = vector.extract_strided_slice %5 {offsets = [0, 0], sizes = [8, 32], strides = [1, 1]} : vector<8x100xf32> to vector<8x32xf32>
    %7 = vector.extract_strided_slice %5 {offsets = [0, 32], sizes = [8, 32], strides = [1, 1]} : vector<8x100xf32> to vector<8x32xf32>
    %8 = vector.extract_strided_slice %5 {offsets = [0, 64], sizes = [8, 32], strides = [1, 1]} : vector<8x100xf32> to vector<8x32xf32>
    %9 = vector.extract_strided_slice %5 {offsets = [0, 96], sizes = [8, 4], strides = [1, 1]} : vector<8x100xf32> to vector<8x4xf32>
    %cst_5 = arith.constant -5.000000e+00 : f32
    %10 = vector.broadcast %cst_5 : f32 to vector<8x4xf32>
    %11 = arith.mulf %10, %9 : vector<8x4xf32>
    %12 = math.exp %11 : vector<8x4xf32>
    %cst_6 = arith.constant 1.000000e+00 : f32
    %13 = vector.broadcast %cst_6 : f32 to vector<8x4xf32>
    %14 = arith.addf %13, %12 : vector<8x4xf32>
    %cst_7 = arith.constant 1.000000e+00 : f32
    %15 = vector.broadcast %cst_7 : f32 to vector<8x4xf32>
    %16 = arith.divf %15, %14 : vector<8x4xf32>
    %cst_8 = arith.constant 9.99999974E-6 : f32
    %17 = vector.broadcast %cst_8 : f32 to vector<8x4xf32>
    %18 = arith.addf %16, %17 : vector<8x4xf32>
    %cst_9 = arith.constant 1.09861231 : f32
    %19 = vector.broadcast %cst_9 : f32 to vector<8x4xf32>
    %20 = arith.mulf %18, %19 : vector<8x4xf32>
    %21 = math.exp %20 : vector<8x4xf32>
    %cst_10 = arith.constant 1.000000e+00 : f32
    %22 = vector.broadcast %cst_10 : f32 to vector<8x4xf32>
    %23 = arith.subf %21, %22 : vector<8x4xf32>
    %c0_11 = arith.constant 0 : index
    %c0_12 = arith.constant 0 : index
    %24 = vector.load %arg2[%c0_11, %c0_12] : memref<8x1xf32, #tpu.memory_space<vmem>>, vector<8x1xf32>
    %25 = vector.broadcast %24 : vector<8x1xf32> to vector<8x4xf32>
    %26 = arith.mulf %23, %25 : vector<8x4xf32>
    %c0_13 = arith.constant 0 : index
    %c0_14 = arith.constant 0 : index
    %27 = vector.load %arg11[%c0_13, %c0_14] : memref<8x4xf32, #tpu.memory_space<vmem>>, vector<8x4xf32>
    tpu.vector_store %arg11[%c0_13, %c0_14], %26 {strides = array<i32>} : memref<8x4xf32, #tpu.memory_space<vmem>>, vector<8x4xf32>,
    %28 = vector.shape_cast %6 : vector<8x32xf32> to vector<1x8x4x8xf32>
    %29 = tpu.transpose %28, [0, 2, 1, 3] : vector<1x8x4x8xf32> -> vector<1x4x8x8xf32>
    %30 = vector.shape_cast %29 : vector<1x4x8x8xf32> to vector<4x8x8xf32>
    %31 = vector.shape_cast %7 : vector<8x32xf32> to vector<1x8x4x8xf32>
    %32 = tpu.transpose %31, [0, 2, 1, 3] : vector<1x8x4x8xf32> -> vector<1x4x8x8xf32>
    %33 = vector.shape_cast %32 : vector<1x4x8x8xf32> to vector<4x8x8xf32>
    %34 = vector.shape_cast %8 : vector<8x32xf32> to vector<1x8x4x8xf32>
    %35 = tpu.transpose %34, [0, 2, 1, 3] : vector<1x8x4x8xf32> -> vector<1x4x8x8xf32>
    %36 = vector.shape_cast %35 : vector<1x4x8x8xf32> to vector<4x8x8xf32>
    %37 = vector.shape_cast %26 : vector<8x4xf32> to vector<1x8x4x1xf32>
    %38 = tpu.transpose %37, [0, 2, 1, 3] : vector<1x8x4x1xf32> -> vector<1x4x8x1xf32>
    %39 = vector.shape_cast %38 : vector<1x4x8x1xf32> to vector<4x8x1xf32>
    %40 = arith.truncf %30 : vector<4x8x8xf32> to vector<4x8x8xbf16>
    %41 = arith.truncf %33 : vector<4x8x8xf32> to vector<4x8x8xbf16>
    "tpu.trace_start"() <{level = 10 : i32, message = "gld,gsd->gls"}> : () -> ()
    %cst_15 = arith.constant dense<0.000000e+00> : vector<4x8x8xf32>
    %42 = tpu.matmul %40, %41, %cst_15 {dimension_numbers = #tpu.dot_dimension_numbers<[2], [2], [1], [1], [0, 0, 0, 1, 1, 1], [0], [0]>} : vector<4x8x8xbf16>, vector<4x8x8xbf16>, vector<4x8x8xf32> -> vector<4x8x8xf32>
    "tpu.trace_stop"() : () -> ()
    %cst_16 = arith.constant dense<0xFF800000> : vector<4x8xf32>
    %43 = vector.multi_reduction <maximumf>, %42, %cst_16 [2] : vector<4x8x8xf32> to vector<4x8xf32>
    %44 = vector.shape_cast %43 : vector<4x8xf32> to vector<4x8x1xf32>
    %45 = vector.broadcast %44 : vector<4x8x1xf32> to vector<4x8x8xf32>
    %46 = arith.subf %42, %45 : vector<4x8x8xf32>
    %47 = math.exp %46 : vector<4x8x8xf32>
    %cst_17 = arith.constant dense<0.000000e+00> : vector<4x8xf32>
    %48 = vector.multi_reduction <add>, %47, %cst_17 [2] : vector<4x8x8xf32> to vector<4x8xf32>
    %49 = vector.shape_cast %48 : vector<4x8xf32> to vector<4x8x1xf32>
    %50 = tpu.reciprocal %49 {approx = true} : vector<4x8x1xf32> -> vector<4x8x1xf32>
    %51 = vector.broadcast %50 : vector<4x8x1xf32> to vector<4x8x8xf32>
    %52 = arith.mulf %47, %51 : vector<4x8x8xf32>
    %53 = arith.truncf %52 : vector<4x8x8xf32> to vector<4x8x8xbf16>
    %c0_18 = arith.constant 0 : index
    %c0_19 = arith.constant 0 : index
    %c0_20 = arith.constant 0 : index
    %54 = vector.load %arg9[%c0_18, %c0_19, %c0_20] : memref<4x8x8xbf16, #tpu.memory_space<vmem>>, vector<4x8x8xbf16>
    tpu.vector_store %arg9[%c0_18, %c0_19, %c0_20], %53 {strides = array<i32>} : memref<4x8x8xbf16, #tpu.memory_space<vmem>>, vector<4x8x8xbf16>,
    %cst_21 = arith.constant 1.000000e+00 : f32
    %55 = vector.broadcast %cst_21 : f32 to vector<4x8x1xf32>
    %56 = arith.divf %55, %39 : vector<4x8x1xf32>
    %cst_22 = arith.constant 0.398942292 : f32
    %57 = vector.broadcast %cst_22 : f32 to vector<4x8x1xf32>
    %58 = arith.mulf %57, %56 : vector<4x8x1xf32>
    %c0_23 = arith.constant 0 : index
    %c0_24 = arith.constant 0 : index
    %59 = vector.load %arg3[%c0_23, %c0_24] : memref<8x8xf32, #tpu.memory_space<vmem>>, vector<8x8xf32>
    %60 = vector.shape_cast %59 : vector<8x8xf32> to vector<1x8x8xf32>
    %61 = arith.mulf %56, %56 : vector<4x8x1xf32>
    %62 = vector.broadcast %60 : vector<1x8x8xf32> to vector<4x8x8xf32>
    %63 = vector.broadcast %61 : vector<4x8x1xf32> to vector<4x8x8xf32>
    %64 = arith.mulf %62, %63 : vector<4x8x8xf32>
    %65 = math.exp %64 : vector<4x8x8xf32>
    %66 = vector.broadcast %58 : vector<4x8x1xf32> to vector<4x8x8xf32>
    %67 = arith.mulf %66, %65 : vector<4x8x8xf32>
    %68 = arith.truncf %67 : vector<4x8x8xf32> to vector<4x8x8xbf16>
    %c0_25 = arith.constant 0 : index
    %c0_26 = arith.constant 0 : index
    %c0_27 = arith.constant 0 : index
    %69 = vector.load %arg10[%c0_25, %c0_26, %c0_27] : memref<4x8x8xbf16, #tpu.memory_space<vmem>>, vector<4x8x8xbf16>
    tpu.vector_store %arg10[%c0_25, %c0_26, %c0_27], %68 {strides = array<i32>} : memref<4x8x8xbf16, #tpu.memory_space<vmem>>, vector<4x8x8xbf16>,
    %70 = arith.truncf %52 : vector<4x8x8xf32> to vector<4x8x8xbf16>
    %71 = arith.truncf %36 : vector<4x8x8xf32> to vector<4x8x8xbf16>
    "tpu.trace_start"() <{level = 10 : i32, message = "gls,gsd->gld"}> : () -> ()
    %cst_28 = arith.constant dense<0.000000e+00> : vector<4x8x8xf32>
    %72 = tpu.matmul %70, %71, %cst_28 {dimension_numbers = #tpu.dot_dimension_numbers<[2], [1], [1], [2], [0, 0, 0, 1, 1, 2], [0], [0]>} : vector<4x8x8xbf16>, vector<4x8x8xbf16>, vector<4x8x8xf32> -> vector<4x8x8xf32>
    "tpu.trace_stop"() : () -> ()
    %73 = vector.shape_cast %72 : vector<4x8x8xf32> to vector<1x4x8x8xf32>
    %74 = tpu.transpose %73, [0, 2, 1, 3] : vector<1x4x8x8xf32> -> vector<1x8x4x8xf32>
    %75 = vector.shape_cast %74 : vector<1x8x4x8xf32> to vector<8x32xf32>
    %c0_29 = arith.constant 0 : index
    %c0_30 = arith.constant 0 : index
    %76 = vector.load %arg6[%c0_29, %c0_30] : memref<32x32xf32, #tpu.memory_space<vmem>>, vector<32x32xf32>
    %cst_31 = arith.constant dense<0.000000e+00> : vector<8x32xf32>
    %77 = tpu.matmul %75, %76, %cst_31 {dimension_numbers = #tpu.dot_dimension_numbers<[1], [0], [0], [1], [0, 0, 1, 1], [], []>} : vector<8x32xf32>, vector<32x32xf32>, vector<8x32xf32> -> vector<8x32xf32>
    %c0_32 = arith.constant 0 : index
    %c0_33 = arith.constant 0 : index
    %78 = vector.load %arg7[%c0_32, %c0_33] : memref<1x32xf32, #tpu.memory_space<vmem>>, vector<1x32xf32>
    %79 = vector.broadcast %78 : vector<1x32xf32> to vector<8x32xf32>
    %80 = arith.addf %77, %79 : vector<8x32xf32>
    %c0_34 = arith.constant 0 : index
    %c0_35 = arith.constant 0 : index
    %81 = vector.load %arg8[%c0_34, %c0_35] : memref<8x32xf32, #tpu.memory_space<vmem>>, vector<8x32xf32>
    tpu.vector_store %arg8[%c0_34, %c0_35], %80 {strides = array<i32>} : memref<8x32xf32, #tpu.memory_space<vmem>>, vector<8x32xf32>,
    return
  }
  func.func @transform_0(%arg0: i32) -> (i32, i32) {
    %c0_i32 = arith.constant 0 : i32
    %c0_i32_0 = arith.constant 0 : i32
    return %arg0, %c0_i32 : i32, i32
  }
  func.func @transform_1(%arg0: i32) -> (i32, i32) {
    %c0_i32 = arith.constant 0 : i32
    %c0_i32_0 = arith.constant 0 : i32
    return %arg0, %c0_i32 : i32, i32
  }
  func.func @transform_2(%arg0: i32) -> (i32, i32) {
    %c0_i32 = arith.constant 0 : i32
    %c0_i32_0 = arith.constant 0 : i32
    %c0_i32_1 = arith.constant 0 : i32
    return %c0_i32, %c0_i32_0 : i32, i32
  }
  func.func @transform_3(%arg0: i32) -> (i32, i32) {
    %c0_i32 = arith.constant 0 : i32
    %c0_i32_0 = arith.constant 0 : i32
    %c0_i32_1 = arith.constant 0 : i32
    return %c0_i32, %c0_i32_0 : i32, i32
  }
  func.func @transform_4(%arg0: i32) -> (i32, i32) {
    %c0_i32 = arith.constant 0 : i32
    %c0_i32_0 = arith.constant 0 : i32
    %c0_i32_1 = arith.constant 0 : i32
    return %c0_i32, %c0_i32_0 : i32, i32
  }
  func.func @transform_5(%arg0: i32) -> (i32, i32) {
    %c0_i32 = arith.constant 0 : i32
    %c0_i32_0 = arith.constant 0 : i32
    %c0_i32_1 = arith.constant 0 : i32
    return %c0_i32, %c0_i32_0 : i32, i32
  }
  func.func @transform_6(%arg0: i32) -> (i32, i32) {
    %c0_i32 = arith.constant 0 : i32
    %c0_i32_0 = arith.constant 0 : i32
    %c0_i32_1 = arith.constant 0 : i32
    return %c0_i32, %c0_i32_0 : i32, i32
  }
  func.func @transform_7(%arg0: i32) -> (i32, i32) {
    %c0_i32 = arith.constant 0 : i32
    %c0_i32_0 = arith.constant 0 : i32
    return %arg0, %c0_i32 : i32, i32
  }
  func.func @transform_8(%arg0: i32) -> (i32, i32, i32) {
    %c0_i32 = arith.constant 0 : i32
    %c0_i32_0 = arith.constant 0 : i32
    %c0_i32_1 = arith.constant 0 : i32
    return %arg0, %c0_i32, %c0_i32_0 : i32, i32, i32
  }
  func.func @transform_9(%arg0: i32) -> (i32, i32, i32) {
    %c0_i32 = arith.constant 0 : i32
    %c0_i32_0 = arith.constant 0 : i32
    %c0_i32_1 = arith.constant 0 : i32
    return %arg0, %c0_i32, %c0_i32_0 : i32, i32, i32
  }
  func.func @transform_10(%arg0: i32) -> (i32, i32) {
    %c0_i32 = arith.constant 0 : i32
    %c0_i32_0 = arith.constant 0 : i32
    return %arg0, %c0_i32 : i32, i32
  }
}

module attributes {stable_mosaic.version = 11 : i64} {
  func.func @_diff_attn_kernel(%arg0: i32, %arg1: memref<8x32xf32, #tpu.memory_space<vmem>>, %arg2: memref<8x1xf32, #tpu.memory_space<vmem>>, %arg3: memref<8x8xf32, #tpu.memory_space<vmem>>, %arg4: memref<32x100xf32, #tpu.memory_space<vmem>>, %arg5: memref<1x100xf32, #tpu.memory_space<vmem>>, %arg6: memref<32x32xf32, #tpu.memory_space<vmem>>, %arg7: memref<1x32xf32, #tpu.memory_space<vmem>>, %arg8: memref<8x32xf32, #tpu.memory_space<vmem>>, %arg9: memref<4x8x8xbf16, #tpu.memory_space<vmem>>, %arg10: memref<4x8x8xbf16, #tpu.memory_space<vmem>>, %arg11: memref<8x4xf32, #tpu.memory_space<vmem>>) attributes {dimension_semantics = [#tpu.dimension_semantics<parallel>], iteration_bounds = array<i64: 2>, scalar_prefetch = 0 : i64, scratch_operands = 0 : i64, tpu.core_type = #tpu.core_type<tc>, window_params = [{transform_indices = @transform_0, window_bounds = array<i64: 8, 32>}, {transform_indices = @transform_1, window_bounds = array<i64: 8, 1>}, {pipeline_mode = #tpu.pipeline_mode<synchronous>, transform_indices = @transform_2, window_bounds = array<i64: 8, 8>}, {pipeline_mode = #tpu.pipeline_mode<synchronous>, transform_indices = @transform_3, window_bounds = array<i64: 32, 100>}, {pipeline_mode = #tpu.pipeline_mode<synchronous>, transform_indices = @transform_4, window_bounds = array<i64: 1, 100>}, {pipeline_mode = #tpu.pipeline_mode<synchronous>, transform_indices = @transform_5, window_bounds = array<i64: 32, 32>}, {pipeline_mode = #tpu.pipeline_mode<synchronous>, transform_indices = @transform_6, window_bounds = array<i64: 1, 32>}, {transform_indices = @transform_7, window_bounds = array<i64: 8, 32>}, {transform_indices = @transform_8, window_bounds = array<i64: 4, 8, 8>}, {transform_indices = @transform_9, window_bounds = array<i64: 4, 8, 8>}, {transform_indices = @transform_10, window_bounds = array<i64: 8, 4>}]} {
    %c0 = arith.constant 0 : index
    %c0_0 = arith.constant 0 : index
    %0 = vector.load %arg4[%c0, %c0_0] : memref<32x100xf32, #tpu.memory_space<vmem>>, vector<32x100xf32>
    %c0_1 = arith.constant 0 : index
    %c0_2 = arith.constant 0 : index
    %1 = vector.load %arg5[%c0_1, %c0_2] : memref<1x100xf32, #tpu.memory_space<vmem>>, vector<1x100xf32>
    %c0_3 = arith.constant 0 : index
    %c0_4 = arith.constant 0 : index
    %2 = vector.load %arg1[%c0_3, %c0_4] : memref<8x32xf32, #tpu.memory_space<vmem>>, vector<8x32xf32>
    %cst = arith.constant dense<0.000000e+00> : vector<8x100xf32>
    %3 = tpu.matmul %2, %0, %cst {dimension_numbers = #tpu.dot_dimension_numbers<[1], [0], [0], [1], [0, 0, 1, 1], [], []>} : vector<8x32xf32>, vector<32x100xf32>, vector<8x100xf32> -> vector<8x100xf32>
    %4 = vector.broadcast %1 : vector<1x100xf32> to vector<8x100xf32>
    %5 = arith.addf %3, %4 : vector<8x100xf32>
    %6 = vector.extract_strided_slice %5 {offsets = [0, 0], sizes = [8, 32], strides = [1, 1]} : vector<8x100xf32> to vector<8x32xf32>
    %7 = vector.extract_strided_slice %5 {offsets = [0, 32], sizes = [8, 32], strides = [1, 1]} : vector<8x100xf32> to vector<8x32xf32>
    %8 = vector.extract_strided_slice %5 {offsets = [0, 64], sizes = [8, 32], strides = [1, 1]} : vector<8x100xf32> to vector<8x32xf32>
    %9 = vector.extract_strided_slice %5 {offsets = [0, 96], sizes = [8, 4], strides = [1, 1]} : vector<8x100xf32> to vector<8x4xf32>
    %cst_5 = arith.constant -5.000000e+00 : f32
    %10 = vector.broadcast %cst_5 : f32 to vector<8x4xf32>
    %11 = arith.mulf %10, %9 : vector<8x4xf32>
    %12 = math.exp %11 : vector<8x4xf32>
    %cst_6 = arith.constant 1.000000e+00 : f32
    %13 = vector.broadcast %cst_6 : f32 to vector<8x4xf32>
    %14 = arith.addf %13, %12 : vector<8x4xf32>
    %cst_7 = arith.constant 1.000000e+00 : f32
    %15 = vector.broadcast %cst_7 : f32 to vector<8x4xf32>
    %16 = arith.divf %15, %14 : vector<8x4xf32>
    %cst_8 = arith.constant 9.99999974E-6 : f32
    %17 = vector.broadcast %cst_8 : f32 to vector<8x4xf32>
    %18 = arith.addf %16, %17 : vector<8x4xf32>
    %cst_9 = arith.constant 1.09861231 : f32
    %19 = vector.broadcast %cst_9 : f32 to vector<8x4xf32>
    %20 = arith.mulf %18, %19 : vector<8x4xf32>
    %21 = math.exp %20 : vector<8x4xf32>
    %cst_10 = arith.constant 1.000000e+00 : f32
    %22 = vector.broadcast %cst_10 : f32 to vector<8x4xf32>
    %23 = arith.subf %21, %22 : vector<8x4xf32>
    %c0_11 = arith.constant 0 : index
    %c0_12 = arith.constant 0 : index
    %24 = vector.load %arg2[%c0_11, %c0_12] : memref<8x1xf32, #tpu.memory_space<vmem>>, vector<8x1xf32>
    %25 = vector.broadcast %24 : vector<8x1xf32> to vector<8x4xf32>
    %26 = arith.mulf %23, %25 : vector<8x4xf32>
    %c0_13 = arith.constant 0 : index
    %c0_14 = arith.constant 0 : index
    %27 = vector.load %arg11[%c0_13, %c0_14] : memref<8x4xf32, #tpu.memory_space<vmem>>, vector<8x4xf32>
    tpu.vector_store %arg11[%c0_13, %c0_14], %26 {strides = array<i32>} : memref<8x4xf32, #tpu.memory_space<vmem>>, vector<8x4xf32>,
    %28 = vector.extract_strided_slice %6 {offsets = [0, 0], sizes = [8, 8], strides = [1, 1]} : vector<8x32xf32> to vector<8x8xf32>
    %29 = vector.shape_cast %28 : vector<8x8xf32> to vector<1x1x8x8xf32>
    %30 = vector.extract_strided_slice %6 {offsets = [0, 8], sizes = [8, 8], strides = [1, 1]} : vector<8x32xf32> to vector<8x8xf32>
    %31 = vector.shape_cast %30 : vector<8x8xf32> to vector<1x1x8x8xf32>
    %32 = vector.extract_strided_slice %6 {offsets = [0, 16], sizes = [8, 8], strides = [1, 1]} : vector<8x32xf32> to vector<8x8xf32>
    %33 = vector.shape_cast %32 : vector<8x8xf32> to vector<1x1x8x8xf32>
    %34 = vector.extract_strided_slice %6 {offsets = [0, 24], sizes = [8, 8], strides = [1, 1]} : vector<8x32xf32> to vector<8x8xf32>
    %35 = vector.shape_cast %34 : vector<8x8xf32> to vector<1x1x8x8xf32>
    %36 = tpu.concatenate %29, %31, %33, %35 in 1 : vector<1x1x8x8xf32>, vector<1x1x8x8xf32>, vector<1x1x8x8xf32>, vector<1x1x8x8xf32> -> vector<1x4x8x8xf32>
    %37 = vector.shape_cast %36 : vector<1x4x8x8xf32> to vector<4x8x8xf32>
    %38 = vector.extract_strided_slice %7 {offsets = [0, 0], sizes = [8, 8], strides = [1, 1]} : vector<8x32xf32> to vector<8x8xf32>
    %39 = vector.shape_cast %38 : vector<8x8xf32> to vector<1x1x8x8xf32>
    %40 = vector.extract_strided_slice %7 {offsets = [0, 8], sizes = [8, 8], strides = [1, 1]} : vector<8x32xf32> to vector<8x8xf32>
    %41 = vector.shape_cast %40 : vector<8x8xf32> to vector<1x1x8x8xf32>
    %42 = vector.extract_strided_slice %7 {offsets = [0, 16], sizes = [8, 8], strides = [1, 1]} : vector<8x32xf32> to vector<8x8xf32>
    %43 = vector.shape_cast %42 : vector<8x8xf32> to vector<1x1x8x8xf32>
    %44 = vector.extract_strided_slice %7 {offsets = [0, 24], sizes = [8, 8], strides = [1, 1]} : vector<8x32xf32> to vector<8x8xf32>
    %45 = vector.shape_cast %44 : vector<8x8xf32> to vector<1x1x8x8xf32>
    %46 = tpu.concatenate %39, %41, %43, %45 in 1 : vector<1x1x8x8xf32>, vector<1x1x8x8xf32>, vector<1x1x8x8xf32>, vector<1x1x8x8xf32> -> vector<1x4x8x8xf32>
    %47 = vector.shape_cast %46 : vector<1x4x8x8xf32> to vector<4x8x8xf32>
    %48 = vector.extract_strided_slice %8 {offsets = [0, 0], sizes = [8, 8], strides = [1, 1]} : vector<8x32xf32> to vector<8x8xf32>
    %49 = vector.shape_cast %48 : vector<8x8xf32> to vector<1x1x8x8xf32>
    %50 = vector.extract_strided_slice %8 {offsets = [0, 8], sizes = [8, 8], strides = [1, 1]} : vector<8x32xf32> to vector<8x8xf32>
    %51 = vector.shape_cast %50 : vector<8x8xf32> to vector<1x1x8x8xf32>
    %52 = vector.extract_strided_slice %8 {offsets = [0, 16], sizes = [8, 8], strides = [1, 1]} : vector<8x32xf32> to vector<8x8xf32>
    %53 = vector.shape_cast %52 : vector<8x8xf32> to vector<1x1x8x8xf32>
    %54 = vector.extract_strided_slice %8 {offsets = [0, 24], sizes = [8, 8], strides = [1, 1]} : vector<8x32xf32> to vector<8x8xf32>
    %55 = vector.shape_cast %54 : vector<8x8xf32> to vector<1x1x8x8xf32>
    %56 = tpu.concatenate %49, %51, %53, %55 in 1 : vector<1x1x8x8xf32>, vector<1x1x8x8xf32>, vector<1x1x8x8xf32>, vector<1x1x8x8xf32> -> vector<1x4x8x8xf32>
    %57 = vector.shape_cast %56 : vector<1x4x8x8xf32> to vector<4x8x8xf32>
    %58 = vector.extract_strided_slice %26 {offsets = [0, 0], sizes = [8, 1], strides = [1, 1]} : vector<8x4xf32> to vector<8x1xf32>
    %59 = vector.shape_cast %58 : vector<8x1xf32> to vector<1x1x8x1xf32>
    %60 = vector.extract_strided_slice %26 {offsets = [0, 1], sizes = [8, 1], strides = [1, 1]} : vector<8x4xf32> to vector<8x1xf32>
    %61 = vector.shape_cast %60 : vector<8x1xf32> to vector<1x1x8x1xf32>
    %62 = vector.extract_strided_slice %26 {offsets = [0, 2], sizes = [8, 1], strides = [1, 1]} : vector<8x4xf32> to vector<8x1xf32>
    %63 = vector.shape_cast %62 : vector<8x1xf32> to vector<1x1x8x1xf32>
    %64 = vector.extract_strided_slice %26 {offsets = [0, 3], sizes = [8, 1], strides = [1, 1]} : vector<8x4xf32> to vector<8x1xf32>
    %65 = vector.shape_cast %64 : vector<8x1xf32> to vector<1x1x8x1xf32>
    %66 = tpu.concatenate %59, %61, %63, %65 in 1 : vector<1x1x8x1xf32>, vector<1x1x8x1xf32>, vector<1x1x8x1xf32>, vector<1x1x8x1xf32> -> vector<1x4x8x1xf32>
    %67 = vector.shape_cast %66 : vector<1x4x8x1xf32> to vector<4x8x1xf32>
    %68 = arith.truncf %37 : vector<4x8x8xf32> to vector<4x8x8xbf16>
    %69 = arith.truncf %47 : vector<4x8x8xf32> to vector<4x8x8xbf16>
    "tpu.trace_start"() <{level = 10 : i32, message = "gld,gsd->gls"}> : () -> ()
    %cst_15 = arith.constant dense<0.000000e+00> : vector<4x8x8xf32>
    %70 = tpu.matmul %68, %69, %cst_15 {dimension_numbers = #tpu.dot_dimension_numbers<[2], [2], [1], [1], [0, 0, 0, 1, 1, 1], [0], [0]>} : vector<4x8x8xbf16>, vector<4x8x8xbf16>, vector<4x8x8xf32> -> vector<4x8x8xf32>
    "tpu.trace_stop"() : () -> ()
    %cst_16 = arith.constant dense<0xFF800000> : vector<4x8xf32>
    %71 = vector.multi_reduction <maximumf>, %70, %cst_16 [2] : vector<4x8x8xf32> to vector<4x8xf32>
    %72 = vector.shape_cast %71 : vector<4x8xf32> to vector<4x8x1xf32>
    %73 = vector.broadcast %72 : vector<4x8x1xf32> to vector<4x8x8xf32>
    %74 = arith.subf %70, %73 : vector<4x8x8xf32>
    %75 = math.exp %74 : vector<4x8x8xf32>
    %cst_17 = arith.constant dense<0.000000e+00> : vector<4x8xf32>
    %76 = vector.multi_reduction <add>, %75, %cst_17 [2] : vector<4x8x8xf32> to vector<4x8xf32>
    %77 = vector.shape_cast %76 : vector<4x8xf32> to vector<4x8x1xf32>
    %78 = tpu.reciprocal %77 {approx = true} : vector<4x8x1xf32> -> vector<4x8x1xf32>
    %79 = vector.broadcast %78 : vector<4x8x1xf32> to vector<4x8x8xf32>
    %80 = arith.mulf %75, %79 : vector<4x8x8xf32>
    %81 = arith.truncf %80 : vector<4x8x8xf32> to vector<4x8x8xbf16>
    %c0_18 = arith.constant 0 : index
    %c0_19 = arith.constant 0 : index
    %c0_20 = arith.constant 0 : index
    %82 = vector.load %arg9[%c0_18, %c0_19, %c0_20] : memref<4x8x8xbf16, #tpu.memory_space<vmem>>, vector<4x8x8xbf16>
    tpu.vector_store %arg9[%c0_18, %c0_19, %c0_20], %81 {strides = array<i32>} : memref<4x8x8xbf16, #tpu.memory_space<vmem>>, vector<4x8x8xbf16>,
    %cst_21 = arith.constant 1.000000e+00 : f32
    %83 = vector.broadcast %cst_21 : f32 to vector<4x8x1xf32>
    %84 = arith.divf %83, %67 : vector<4x8x1xf32>
    %cst_22 = arith.constant 0.398942292 : f32
    %85 = vector.broadcast %cst_22 : f32 to vector<4x8x1xf32>
    %86 = arith.mulf %85, %84 : vector<4x8x1xf32>
    %c0_23 = arith.constant 0 : index
    %c0_24 = arith.constant 0 : index
    %87 = vector.load %arg3[%c0_23, %c0_24] : memref<8x8xf32, #tpu.memory_space<vmem>>, vector<8x8xf32>
    %88 = vector.shape_cast %87 : vector<8x8xf32> to vector<1x8x8xf32>
    %89 = arith.mulf %84, %84 : vector<4x8x1xf32>
    %90 = vector.broadcast %88 : vector<1x8x8xf32> to vector<4x8x8xf32>
    %91 = vector.broadcast %89 : vector<4x8x1xf32> to vector<4x8x8xf32>
    %92 = arith.mulf %90, %91 : vector<4x8x8xf32>
    %93 = math.exp %92 : vector<4x8x8xf32>
    %94 = vector.broadcast %86 : vector<4x8x1xf32> to vector<4x8x8xf32>
    %95 = arith.mulf %94, %93 : vector<4x8x8xf32>
    %96 = arith.truncf %95 : vector<4x8x8xf32> to vector<4x8x8xbf16>
    %c0_25 = arith.constant 0 : index
    %c0_26 = arith.constant 0 : index
    %c0_27 = arith.constant 0 : index
    %97 = vector.load %arg10[%c0_25, %c0_26, %c0_27] : memref<4x8x8xbf16, #tpu.memory_space<vmem>>, vector<4x8x8xbf16>
    tpu.vector_store %arg10[%c0_25, %c0_26, %c0_27], %96 {strides = array<i32>} : memref<4x8x8xbf16, #tpu.memory_space<vmem>>, vector<4x8x8xbf16>,
    %98 = arith.truncf %80 : vector<4x8x8xf32> to vector<4x8x8xbf16>
    %99 = arith.truncf %57 : vector<4x8x8xf32> to vector<4x8x8xbf16>
    "tpu.trace_start"() <{level = 10 : i32, message = "gls,gsd->gld"}> : () -> ()
    %cst_28 = arith.constant dense<0.000000e+00> : vector<4x8x8xf32>
    %100 = tpu.matmul %98, %99, %cst_28 {dimension_numbers = #tpu.dot_dimension_numbers<[2], [1], [1], [2], [0, 0, 0, 1, 1, 2], [0], [0]>} : vector<4x8x8xbf16>, vector<4x8x8xbf16>, vector<4x8x8xf32> -> vector<4x8x8xf32>
    "tpu.trace_stop"() : () -> ()
    %c0_29 = arith.constant 0 : index
    %c0_30 = arith.constant 0 : index
    %101 = vector.load %arg6[%c0_29, %c0_30] : memref<32x32xf32, #tpu.memory_space<vmem>>, vector<32x32xf32>
    %102 = vector.shape_cast %101 : vector<32x32xf32> to vector<4x8x32xf32>
    "tpu.trace_start"() <{level = 10 : i32, message = "gld,gdn->gln"}> : () -> ()
    %cst_31 = arith.constant dense<0.000000e+00> : vector<4x8x32xf32>
    %103 = tpu.matmul %100, %102, %cst_31 {dimension_numbers = #tpu.dot_dimension_numbers<[2], [1], [1], [2], [0, 0, 0, 1, 1, 2], [0], [0]>} : vector<4x8x8xf32>, vector<4x8x32xf32>, vector<4x8x32xf32> -> vector<4x8x32xf32>
    "tpu.trace_stop"() : () -> ()
    %104 = vector.shape_cast %103 : vector<4x8x32xf32> to vector<1x4x8x32xf32>
    %cst_32 = arith.constant dense<0.000000e+00> : vector<1x8x32xf32>
    %105 = vector.multi_reduction <add>, %104, %cst_32 [1] : vector<1x4x8x32xf32> to vector<1x8x32xf32>
    %c0_33 = arith.constant 0 : index
    %c0_34 = arith.constant 0 : index
    %106 = vector.load %arg7[%c0_33, %c0_34] : memref<1x32xf32, #tpu.memory_space<vmem>>, vector<1x32xf32>
    %107 = vector.shape_cast %106 : vector<1x32xf32> to vector<1x1x32xf32>
    %108 = vector.broadcast %107 : vector<1x1x32xf32> to vector<1x8x32xf32>
    %109 = arith.addf %105, %108 : vector<1x8x32xf32>
    %110 = vector.shape_cast %109 : vector<1x8x32xf32> to vector<8x32xf32>
    %c0_35 = arith.constant 0 : index
    %c0_36 = arith.constant 0 : index
    %111 = vector.load %arg8[%c0_35, %c0_36] : memref<8x32xf32, #tpu.memory_space<vmem>>, vector<8x32xf32>
    tpu.vector_store %arg8[%c0_35, %c0_36], %110 {strides = array<i32>} : memref<8x32xf32, #tpu.memory_space<vmem>>, vector<8x32xf32>,
    return
  }
  func.func @transform_0(%arg0: i32) -> (i32, i32) {
    %c0_i32 = arith.constant 0 : i32
    %c0_i32_0 = arith.constant 0 : i32
    return %arg0, %c0_i32 : i32, i32
  }
  func.func @transform_1(%arg0: i32) -> (i32, i32) {
    %c0_i32 = arith.constant 0 : i32
    %c0_i32_0 = arith.constant 0 : i32
    return %arg0, %c0_i32 : i32, i32
  }
  func.func @transform_2(%arg0: i32) -> (i32, i32) {
    %c0_i32 = arith.constant 0 : i32
    %c0_i32_0 = arith.constant 0 : i32
    %c0_i32_1 = arith.constant 0 : i32
    return %c0_i32, %c0_i32_0 : i32, i32
  }
  func.func @transform_3(%arg0: i32) -> (i32, i32) {
    %c0_i32 = arith.constant 0 : i32
    %c0_i32_0 = arith.constant 0 : i32
    %c0_i32_1 = arith.constant 0 : i32
    return %c0_i32, %c0_i32_0 : i32, i32
  }
  func.func @transform_4(%arg0: i32) -> (i32, i32) {
    %c0_i32 = arith.constant 0 : i32
    %c0_i32_0 = arith.constant 0 : i32
    %c0_i32_1 = arith.constant 0 : i32
    return %c0_i32, %c0_i32_0 : i32, i32
  }
  func.func @transform_5(%arg0: i32) -> (i32, i32) {
    %c0_i32 = arith.constant 0 : i32
    %c0_i32_0 = arith.constant 0 : i32
    %c0_i32_1 = arith.constant 0 : i32
    return %c0_i32, %c0_i32_0 : i32, i32
  }
  func.func @transform_6(%arg0: i32) -> (i32, i32) {
    %c0_i32 = arith.constant 0 : i32
    %c0_i32_0 = arith.constant 0 : i32
    %c0_i32_1 = arith.constant 0 : i32
    return %c0_i32, %c0_i32_0 : i32, i32
  }
  func.func @transform_7(%arg0: i32) -> (i32, i32) {
    %c0_i32 = arith.constant 0 : i32
    %c0_i32_0 = arith.constant 0 : i32
    return %arg0, %c0_i32 : i32, i32
  }
  func.func @transform_8(%arg0: i32) -> (i32, i32, i32) {
    %c0_i32 = arith.constant 0 : i32
    %c0_i32_0 = arith.constant 0 : i32
    %c0_i32_1 = arith.constant 0 : i32
    return %arg0, %c0_i32, %c0_i32_0 : i32, i32, i32
  }
  func.func @transform_9(%arg0: i32) -> (i32, i32, i32) {
    %c0_i32 = arith.constant 0 : i32
    %c0_i32_0 = arith.constant 0 : i32
    %c0_i32_1 = arith.constant 0 : i32
    return %arg0, %c0_i32, %c0_i32_0 : i32, i32, i32
  }
  func.func @transform_10(%arg0: i32) -> (i32, i32) {
    %c0_i32 = arith.constant 0 : i32
    %c0_i32_0 = arith.constant 0 : i32
    return %arg0, %c0_i32 : i32, i32
  }
}

</mosaic_0001>

<llo_original>
// kernel: tpu_custom_call.1
$region0: #{tpu_custom_call.1}
  #allocation0 [shape = 'u32[]', space=smem, size = 0x4, offset = 0x4, fixed_abs, tag = 'smem constant byte address 0x4 - core index']
  #allocation1 [shape = 'u32[144,128]{1,0:T(1,128)}', space=vmem, size = 0x12000, scoped, tag = 'internal scratch']
  %s0 = inlined_call_operand.hbm [shape: f32[16,32], index: 0, kind: input, shape index: {}]
  %s1 = inlined_call_operand.vmem [shape: f32[16,1], index: 1, kind: input, shape index: {}]
  %s2 = inlined_call_operand.hbm [shape: f32[8,8], index: 2, kind: input, shape index: {}]
  %s3 = inlined_call_operand.hbm [shape: f32[32,100], index: 3, kind: input, shape index: {}]
  %s4 = inlined_call_operand.vmem [shape: f32[1,100], index: 4, kind: input, shape index: {}]
  %s5 = inlined_call_operand.vmem [shape: f32[32,32], index: 5, kind: input, shape index: {}]
  %s6 = inlined_call_operand.vmem [shape: f32[1,32], index: 6, kind: input, shape index: {}]
  %s7 = inlined_call_operand.hbm [shape: f32[16,32], index: 7, kind: output, shape index: {0}]
  %s8 = inlined_call_operand.hbm [shape: bf16[8,8,8], index: 8, kind: output, shape index: {1}]
  %s9 = inlined_call_operand.hbm [shape: bf16[8,8,8], index: 9, kind: output, shape index: {2}]
  %s10 = inlined_call_operand.vmem [shape: f32[16,4], index: 10, kind: output, shape index: {3}]
  %11 = xla_tuple %s7, %s8, %s9, %s10
  %s12 = sld [smem:[#allocation0]]
  $region97: #{tpu_custom_call.1} parent=0
    _
  %s14 = ssub.s32 1, %s12
  %s15 = scalar_select 0, %s14, %s12
  $region1: #{tpu_custom_call.1} parent=0
    #allocation2 [shape = 'u8[8192]{0}', space=vmem, size = 0x2000, scoped, tag = 'input window, operand 0']
    #allocation3 [shape = 's32[2]{0}', space=sflag, size = 0x8, scoped, tag = 'scoped memory for tpu_custom_call.1']
    #allocation4 [shape = 's32[2]{0}', space=sflag, size = 0x8, scoped, tag = 'scoped memory for tpu_custom_call.1']
    #allocation5 [shape = 'u8[4096]{0}', space=vmem, size = 0x1000, scoped, tag = 'input window, operand 2, single buffered']
    #allocation6 [shape = 's32[1]{0}', space=sflag, size = 0x4, scoped, tag = 'scoped memory for tpu_custom_call.1']
    #allocation7 [shape = 'u8[16384]{0}', space=vmem, size = 0x4000, scoped, tag = 'input window, operand 3, single buffered']
    #allocation8 [shape = 'u8[8192]{0}', space=vmem, size = 0x2000, scoped, tag = 'output window, operand 0']
    #allocation9 [shape = 'u8[16384]{0}', space=vmem, size = 0x4000, scoped, tag = 'output window, operand 1']
    #allocation10 [shape = 's32[2]{0}', space=sflag, size = 0x8, scoped, tag = 'scoped memory for tpu_custom_call.1']
    #allocation11 [shape = 'u8[16384]{0}', space=vmem, size = 0x4000, scoped, tag = 'output window, operand 2']
    %16 = vsyncpa [#allocation3], 0
    %s17 = scalar_lea.sflag [#allocation3], 1
    %18 = vsyncpa %s17, 0
    %19 = vsyncpa [#allocation6], 0
    %20 = vsyncpa [#allocation4], 0
    %s21 = scalar_lea.sflag [#allocation4], 1
    %22 = vsyncpa %s21, 0
    %23 = vsyncpa [#allocation10], 0
    %s24 = scalar_lea.sflag [#allocation10], 1
    %25 = vsyncpa %s24, 0
    loop: start=0, step=1, limit=4
    $region2: #{tpu_custom_call.1} parent=1 // loop_pre_header
      _
    $region3: #{tpu_custom_call.1} parent=1 // loop_header
      %s27 = sphi 0, %s31
      %p28 = scmp.ge.s32.totalorder %s27, 4
      %s37 = sphi 0, %s39
      %s40 = sphi 0, %s37
      %s41 = sphi 0, %s40
      %s57 = sphi 0, %s41
      %s63 = sphi 0, %s65
      %s66 = sphi 0, %s63
      %s67 = sphi 0, %s66
      %s83 = sphi 0, %s67
      %s87 = sphi 0, %s87
      %s89 = sphi 0, %s87
      %s90 = sphi 0, %s89
      %s104 = sphi 0, %s90
      %s108 = sphi 0, %s108
      %s110 = sphi 0, %s108
      %s111 = sphi 0, %s110
      %s125 = sphi 0, %s111
      %s129 = sphi 0, %s129
      %s131 = sphi 0, %s129
      %s132 = sphi 0, %s131
      %s146 = sphi 0, %s132
      %s150 = sphi 0, %s150
      %s152 = sphi 0, %s150
      %s153 = sphi 0, %s152
      %s167 = sphi 0, %s153
      %s171 = sphi 0, %s171
      %s173 = sphi 0, %s171
      %s174 = sphi 0, %s173
      %s188 = sphi 0, %s174
      %s194 = sphi 0, %s196
      %s197 = sphi 0, %s194
      %s198 = sphi 0, %s197
      %s214 = sphi 0, %s198
      %s220 = sphi 0, %s222
      %s223 = sphi 0, %s220
      %s224 = sphi 0, %s223
      %s240 = sphi 0, %s224
      %s246 = sphi 0, %s248
      %s249 = sphi 0, %s246
      %s250 = sphi 0, %s249
      %s266 = sphi 0, %s250
      %s272 = sphi 0, %s274
      %s275 = sphi 0, %s272
      %s276 = sphi 0, %s275
      %s292 = sphi 0, %s276
    $region4: #{tpu_custom_call.1} parent=1 // loop_header_branch
      %30 = sbr.rel (%p28) target = $region8
    $region5: #{tpu_custom_call.1} parent=1 // loop_body
      %s32 = ssub.s32 %s27, 1
      %s33 = ssub.s32 %s27, 2
      %s34 = sadd.s32 %s27, 1
      %s35 = ssub.s32 %s27, %s34
      %p36 = scmp.eq.s32.totalorder %s35, 0
      %s38 = sadd.s32 %s37, 1
      %s39 = scalar_select %p36, %s37, %s38
      %p42 = pneg %p36
      %p43 = scmp.eq.s32.totalorder %s27, 1
      %p44 = por %p42, %p43
      %p45 = scmp.ne.s32.totalorder %s37, %s40
      %p46 = scmp.eq.s32.totalorder %s27, 0
      %p47 = por %p45, %p46
      %p48 = scmp.ne.s32.totalorder %s37, %s40
      %p49 = scmp.eq.s32.totalorder %s32, 1
      %p50 = por %p48, %p49
      %p51 = scmp.ne.s32.totalorder %s40, %s41
      %p52 = scmp.eq.s32.totalorder %s32, 0
      %p53 = por %p51, %p52
      %p54 = scmp.ne.s32.totalorder %s40, %s41
      %p55 = scmp.eq.s32.totalorder %s33, 1
      %p56 = por %p54, %p55
      %p58 = scmp.ne.s32.totalorder %s41, %s57
      %p59 = scmp.eq.s32.totalorder %s33, 0
      %p60 = por %p58, %p59
      %s61 = ssub.s32 %s27, %s34
      %p62 = scmp.eq.s32.totalorder %s61, 0
      %s64 = sadd.s32 %s63, 1
      %s65 = scalar_select %p62, %s63, %s64
      %p68 = pneg %p62
      %p69 = scmp.eq.s32.totalorder %s27, 1
      %p70 = por %p68, %p69
      %p71 = scmp.ne.s32.totalorder %s63, %s66
      %p72 = scmp.eq.s32.totalorder %s27, 0
      %p73 = por %p71, %p72
      %p74 = scmp.ne.s32.totalorder %s63, %s66
      %p75 = scmp.eq.s32.totalorder %s32, 1
      %p76 = por %p74, %p75
      %p77 = scmp.ne.s32.totalorder %s66, %s67
      %p78 = scmp.eq.s32.totalorder %s32, 0
      %p79 = por %p77, %p78
      %p80 = scmp.ne.s32.totalorder %s66, %s67
      %p81 = scmp.eq.s32.totalorder %s33, 1
      %p82 = por %p80, %p81
      %p84 = scmp.ne.s32.totalorder %s67, %s83
      %p85 = scmp.eq.s32.totalorder %s33, 0
      %p86 = por %p84, %p85
      %s88 = sadd.s32 %s87, 1
      %p91 = scmp.eq.s32.totalorder %s27, 1
      %p92 = scmp.ne.s32.totalorder %s87, %s89
      %p93 = scmp.eq.s32.totalorder %s27, 0
      %p94 = por %p92, %p93
      %p95 = scmp.ne.s32.totalorder %s87, %s89
      %p96 = scmp.eq.s32.totalorder %s32, 1
      %p97 = por %p95, %p96
      %p98 = scmp.ne.s32.totalorder %s89, %s90
      %p99 = scmp.eq.s32.totalorder %s32, 0
      %p100 = por %p98, %p99
      %p101 = scmp.ne.s32.totalorder %s89, %s90
      %p102 = scmp.eq.s32.totalorder %s33, 1
      %p103 = por %p101, %p102
      %p105 = scmp.ne.s32.totalorder %s90, %s104
      %p106 = scmp.eq.s32.totalorder %s33, 0
      %p107 = por %p105, %p106
      %s109 = sadd.s32 %s108, 1
      %p112 = scmp.eq.s32.totalorder %s27, 1
      %p113 = scmp.ne.s32.totalorder %s108, %s110
      %p114 = scmp.eq.s32.totalorder %s27, 0
      %p115 = por %p113, %p114
      %p116 = scmp.ne.s32.totalorder %s108, %s110
      %p117 = scmp.eq.s32.totalorder %s32, 1
      %p118 = por %p116, %p117
      %p119 = scmp.ne.s32.totalorder %s110, %s111
      %p120 = scmp.eq.s32.totalorder %s32, 0
      %p121 = por %p119, %p120
      %p122 = scmp.ne.s32.totalorder %s110, %s111
      %p123 = scmp.eq.s32.totalorder %s33, 1
      %p124 = por %p122, %p123
      %p126 = scmp.ne.s32.totalorder %s111, %s125
      %p127 = scmp.eq.s32.totalorder %s33, 0
      %p128 = por %p126, %p127
      %s130 = sadd.s32 %s129, 1
      %p133 = scmp.eq.s32.totalorder %s27, 1
      %p134 = scmp.ne.s32.totalorder %s129, %s131
      %p135 = scmp.eq.s32.totalorder %s27, 0
      %p136 = por %p134, %p135
      %p137 = scmp.ne.s32.totalorder %s129, %s131
      %p138 = scmp.eq.s32.totalorder %s32, 1
      %p139 = por %p137, %p138
      %p140 = scmp.ne.s32.totalorder %s131, %s132
      %p141 = scmp.eq.s32.totalorder %s32, 0
      %p142 = por %p140, %p141
      %p143 = scmp.ne.s32.totalorder %s131, %s132
      %p144 = scmp.eq.s32.totalorder %s33, 1
      %p145 = por %p143, %p144
      %p147 = scmp.ne.s32.totalorder %s132, %s146
      %p148 = scmp.eq.s32.totalorder %s33, 0
      %p149 = por %p147, %p148
      %s151 = sadd.s32 %s150, 1
      %p154 = scmp.eq.s32.totalorder %s27, 1
      %p155 = scmp.ne.s32.totalorder %s150, %s152
      %p156 = scmp.eq.s32.totalorder %s27, 0
      %p157 = por %p155, %p156
      %p158 = scmp.ne.s32.totalorder %s150, %s152
      %p159 = scmp.eq.s32.totalorder %s32, 1
      %p160 = por %p158, %p159
      %p161 = scmp.ne.s32.totalorder %s152, %s153
      %p162 = scmp.eq.s32.totalorder %s32, 0
      %p163 = por %p161, %p162
      %p164 = scmp.ne.s32.totalorder %s152, %s153
      %p165 = scmp.eq.s32.totalorder %s33, 1
      %p166 = por %p164, %p165
      %p168 = scmp.ne.s32.totalorder %s153, %s167
      %p169 = scmp.eq.s32.totalorder %s33, 0
      %p170 = por %p168, %p169
      %s172 = sadd.s32 %s171, 1
      %p175 = scmp.eq.s32.totalorder %s27, 1
      %p176 = scmp.ne.s32.totalorder %s171, %s173
      %p177 = scmp.eq.s32.totalorder %s27, 0
      %p178 = por %p176, %p177
      %p179 = scmp.ne.s32.totalorder %s171, %s173
      %p180 = scmp.eq.s32.totalorder %s32, 1
      %p181 = por %p179, %p180
      %p182 = scmp.ne.s32.totalorder %s173, %s174
      %p183 = scmp.eq.s32.totalorder %s32, 0
      %p184 = por %p182, %p183
      %p185 = scmp.ne.s32.totalorder %s173, %s174
      %p186 = scmp.eq.s32.totalorder %s33, 1
      %p187 = por %p185, %p186
      %p189 = scmp.ne.s32.totalorder %s174, %s188
      %p190 = scmp.eq.s32.totalorder %s33, 0
      %p191 = por %p189, %p190
      %s192 = ssub.s32 %s27, %s34
      %p193 = scmp.eq.s32.totalorder %s192, 0
      %s195 = sadd.s32 %s194, 1
      %s196 = scalar_select %p193, %s194, %s195
      %p199 = pneg %p193
      %p200 = scmp.eq.s32.totalorder %s27, 1
      %p201 = por %p199, %p200
      %p202 = scmp.ne.s32.totalorder %s194, %s197
      %p203 = scmp.eq.s32.totalorder %s27, 0
      %p204 = por %p202, %p203
      %p205 = scmp.ne.s32.totalorder %s194, %s197
      %p206 = scmp.eq.s32.totalorder %s32, 1
      %p207 = por %p205, %p206
      %p208 = scmp.ne.s32.totalorder %s197, %s198
      %p209 = scmp.eq.s32.totalorder %s32, 0
      %p210 = por %p208, %p209
      %p211 = scmp.ne.s32.totalorder %s197, %s198
      %p212 = scmp.eq.s32.totalorder %s33, 1
      %p213 = por %p211, %p212
      %p215 = scmp.ne.s32.totalorder %s198, %s214
      %p216 = scmp.eq.s32.totalorder %s33, 0
      %p217 = por %p215, %p216
      %s218 = ssub.s32 %s27, %s34
      %p219 = scmp.eq.s32.totalorder %s218, 0
      %s221 = sadd.s32 %s220, 1
      %s222 = scalar_select %p219, %s220, %s221
      %p225 = pneg %p219
      %p226 = scmp.eq.s32.totalorder %s27, 1
      %p227 = por %p225, %p226
      %p228 = scmp.ne.s32.totalorder %s220, %s223
      %p229 = scmp.eq.s32.totalorder %s27, 0
      %p230 = por %p228, %p229
      %p231 = scmp.ne.s32.totalorder %s220, %s223
      %p232 = scmp.eq.s32.totalorder %s32, 1
      %p233 = por %p231, %p232
      %p234 = scmp.ne.s32.totalorder %s223, %s224
      %p235 = scmp.eq.s32.totalorder %s32, 0
      %p236 = por %p234, %p235
      %p237 = scmp.ne.s32.totalorder %s223, %s224
      %p238 = scmp.eq.s32.totalorder %s33, 1
      %p239 = por %p237, %p238
      %p241 = scmp.ne.s32.totalorder %s224, %s240
      %p242 = scmp.eq.s32.totalorder %s33, 0
      %p243 = por %p241, %p242
      %s244 = ssub.s32 %s27, %s34
      %p245 = scmp.eq.s32.totalorder %s244, 0
      %s247 = sadd.s32 %s246, 1
      %s248 = scalar_select %p245, %s246, %s247
      %p251 = pneg %p245
      %p252 = scmp.eq.s32.totalorder %s27, 1
      %p253 = por %p251, %p252
      %p254 = scmp.ne.s32.totalorder %s246, %s249
      %p255 = scmp.eq.s32.totalorder %s27, 0
      %p256 = por %p254, %p255
      %p257 = scmp.ne.s32.totalorder %s246, %s249
      %p258 = scmp.eq.s32.totalorder %s32, 1
      %p259 = por %p257, %p258
      %p260 = scmp.ne.s32.totalorder %s249, %s250
      %p261 = scmp.eq.s32.totalorder %s32, 0
      %p262 = por %p260, %p261
      %p263 = scmp.ne.s32.totalorder %s249, %s250
      %p264 = scmp.eq.s32.totalorder %s33, 1
      %p265 = por %p263, %p264
      %p267 = scmp.ne.s32.totalorder %s250, %s266
      %p268 = scmp.eq.s32.totalorder %s33, 0
      %p269 = por %p267, %p268
      %s270 = ssub.s32 %s27, %s34
      %p271 = scmp.eq.s32.totalorder %s270, 0
      %s273 = sadd.s32 %s272, 1
      %s274 = scalar_select %p271, %s272, %s273
      %p277 = pneg %p271
      %p278 = scmp.eq.s32.totalorder %s27, 1
      %p279 = por %p277, %p278
      %p280 = scmp.ne.s32.totalorder %s272, %s275
      %p281 = scmp.eq.s32.totalorder %s27, 0
      %p282 = por %p280, %p281
      %p283 = scmp.ne.s32.totalorder %s272, %s275
      %p284 = scmp.eq.s32.totalorder %s32, 1
      %p285 = por %p283, %p284
      %p286 = scmp.ne.s32.totalorder %s275, %s276
      %p287 = scmp.eq.s32.totalorder %s32, 0
      %p288 = por %p286, %p287
      %p289 = scmp.ne.s32.totalorder %s275, %s276
      %p290 = scmp.eq.s32.totalorder %s33, 1
      %p291 = por %p289, %p290
      %p293 = scmp.ne.s32.totalorder %s276, %s292
      %p294 = scmp.eq.s32.totalorder %s33, 0
      %p295 = por %p293, %p294
      %p296 = scmp.le.s32.totalorder 1, %s27
      %p297 = scmp.lt.s32.totalorder %s27, 3
      %p298 = pnand %p296, %p297
      %p299 = pneg %p298
      // Predicated region
      $region9: #{tpu_custom_call.1} parent=5 // pred_check
        _
      $region10: #{tpu_custom_call.1} parent=5 // pred_check_branch
        %301 = sbr.rel (%p298) target = $region12
      $region11: #{tpu_custom_call.1} parent=5 // pred_region
        %s302 = ssub.s32 %s27, 1
        // Predicated region
        $region13: #{tpu_custom_call.1} parent=11 // pred_check
          %p303 = pneg %p100
        $region14: #{tpu_custom_call.1} parent=11 // pred_check_branch
          %305 = sbr.rel (%p303) target = $region16
        $region15: #{tpu_custom_call.1} parent=11 // pred_region
          %s307 = ssub.s32 128, 128
          %308 = vsyncadd [#allocation6], %s307
          %s310 = sshll.u32 [#allocation5], 4
          %s311 = int_to_ptr.vmem [resolvable:$true] %s310
          %313 = dma.hbm_to_vmem [thread:$0]  %s2, 128, %s311, [#allocation6]
        $region16: #{tpu_custom_call.1} parent=11 // pred_fallthru
          _
        // Predicated region
        $region17: #{tpu_custom_call.1} parent=11 // pred_check
          %p314 = pneg %p121
        $region18: #{tpu_custom_call.1} parent=11 // pred_check_branch
          %316 = sbr.rel (%p314) target = $region20
        $region19: #{tpu_custom_call.1} parent=11 // pred_region
          %s318 = ssub.s32 512, 512
          %319 = vsyncadd [#allocation6], %s318
          %s320 = sshll.u32 [#allocation7], 4
          %s321 = int_to_ptr.vmem [resolvable:$true] %s320
          %326 = dma.hbm_to_vmem [thread:$0]  %s3, 512, %s321, [#allocation6], 128, 128, 8
        $region20: #{tpu_custom_call.1} parent=11 // pred_fallthru
          _
        // Predicated region
        $region21: #{tpu_custom_call.1} parent=11 // pred_check
          %p327 = pneg %p142
        $region22: #{tpu_custom_call.1} parent=11 // pred_check_branch
          %329 = sbr.rel (%p327) target = $region24
        $region23: #{tpu_custom_call.1} parent=11 // pred_region
          _
        $region24: #{tpu_custom_call.1} parent=11 // pred_fallthru
          _
        // Predicated region
        $region25: #{tpu_custom_call.1} parent=11 // pred_check
          %p330 = pneg %p163
        $region26: #{tpu_custom_call.1} parent=11 // pred_check_branch
          %332 = sbr.rel (%p330) target = $region28
        $region27: #{tpu_custom_call.1} parent=11 // pred_region
          _
        $region28: #{tpu_custom_call.1} parent=11 // pred_fallthru
          _
        // Predicated region
        $region29: #{tpu_custom_call.1} parent=11 // pred_check
          %p333 = pneg %p184
        $region30: #{tpu_custom_call.1} parent=11 // pred_check_branch
          %335 = sbr.rel (%p333) target = $region32
        $region31: #{tpu_custom_call.1} parent=11 // pred_region
          _
        $region32: #{tpu_custom_call.1} parent=11 // pred_fallthru
          _
      $region12: #{tpu_custom_call.1} parent=5 // pred_fallthru
        _
      %p336 = scmp.lt.s32.totalorder %s27, 2
      // Predicated region
      $region33: #{tpu_custom_call.1} parent=5 // pred_check
        %p337 = pneg %p336
      $region34: #{tpu_custom_call.1} parent=5 // pred_check_branch
        %339 = sbr.rel (%p337) target = $region36
      $region35: #{tpu_custom_call.1} parent=5 // pred_region
        // Predicated region
        $region37: #{tpu_custom_call.1} parent=35 // pred_check
          %p340 = pneg %p47
        $region38: #{tpu_custom_call.1} parent=35 // pred_check_branch
          %342 = sbr.rel (%p340) target = $region40
        $region39: #{tpu_custom_call.1} parent=35 // pred_region
          %s343 = sand.u32 %s37, 1
          %s344 = scalar_lea.sflag [#allocation3], %s343
          %s345 = sand.u32 %s37, 1
          %s346 = smul.addr %s345, 8
          %s347 = scalar_lea.vmem [#allocation2], %s346
          %s349 = ssub.s32 128, 128
          %350 = vsyncadd %s344, %s349
          %s351 = smul.addr %s27, 128
          %s352 = scalar_lea.hbm %s0, %s351
          %s354 = sshll.u32 %s347, 4
          %s355 = int_to_ptr.vmem [resolvable:$true] %s354
          %357 = dma.hbm_to_vmem [thread:$0]  %s352, 128, %s355, %s344
        $region40: #{tpu_custom_call.1} parent=35 // pred_fallthru
          _
        // Predicated region
        $region41: #{tpu_custom_call.1} parent=35 // pred_check
          %p358 = pneg %p73
        $region42: #{tpu_custom_call.1} parent=35 // pred_check_branch
          %360 = sbr.rel (%p358) target = $region44
        $region43: #{tpu_custom_call.1} parent=35 // pred_region
          %p361 = scmp.lt.s32.totalorder %s27, 1
          %s362 = scalar_select %p361, %s27, 1
          %s363 = smul.addr %s362, 8
          %s364 = scalar_lea.vmem %s1, %s363
        $region44: #{tpu_custom_call.1} parent=35 // pred_fallthru
          _
      $region36: #{tpu_custom_call.1} parent=5 // pred_fallthru
        _
      %p365 = scmp.le.s32.totalorder 1, %s27
      %p366 = scmp.lt.s32.totalorder %s27, 3
      %p367 = pnand %p365, %p366
      %p368 = pneg %p367
      // Predicated region
      $region45: #{tpu_custom_call.1} parent=5 // pred_check
        _
      $region46: #{tpu_custom_call.1} parent=5 // pred_check_branch
        %370 = sbr.rel (%p367) target = $region48
      $region47: #{tpu_custom_call.1} parent=5 // pred_region
        %s371 = ssub.s32 %s27, 1
        %s372 = sand.u32 %s40, 1
        %s373 = scalar_lea.sflag [#allocation3], %s372
        %s374 = sand.u32 %s40, 1
        %s375 = smul.addr %s374, 8
        %s376 = scalar_lea.vmem [#allocation2], %s375
        // Predicated region
        $region49: #{tpu_custom_call.1} parent=47 // pred_check
          %p377 = pneg %p53
        $region50: #{tpu_custom_call.1} parent=47 // pred_check_branch
          %379 = sbr.rel (%p377) target = $region52
        $region51: #{tpu_custom_call.1} parent=47 // pred_region
          %380 = dma.done %s373, 128
        $region52: #{tpu_custom_call.1} parent=47 // pred_fallthru
          _
        // Predicated region
        $region53: #{tpu_custom_call.1} parent=47 // pred_check
          %p381 = pneg %p100
        $region54: #{tpu_custom_call.1} parent=47 // pred_check_branch
          %383 = sbr.rel (%p381) target = $region56
        $region55: #{tpu_custom_call.1} parent=47 // pred_region
          %384 = dma.done [#allocation6], 128
        $region56: #{tpu_custom_call.1} parent=47 // pred_fallthru
          _
        // Predicated region
        $region57: #{tpu_custom_call.1} parent=47 // pred_check
          %p385 = pneg %p121
        $region58: #{tpu_custom_call.1} parent=47 // pred_check_branch
          %387 = sbr.rel (%p385) target = $region60
        $region59: #{tpu_custom_call.1} parent=47 // pred_region
          %388 = dma.done [#allocation6], 512
        $region60: #{tpu_custom_call.1} parent=47 // pred_fallthru
          _
        %s389 = sand.u32 %s40, 1
        %s390 = scalar_lea.sflag [#allocation3], %s389
        %s391 = sand.u32 %s40, 1
        %s392 = smul.addr %s391, 8
        %s393 = scalar_lea.vmem [#allocation2], %s392
        %p394 = pneg %p53
        %p395 = pneg %p50
        %p396 = scmp.lt.s32.totalorder %s32, 1
        %s397 = scalar_select %p396, %s32, 1
        %s398 = smul.addr %s397, 8
        %s399 = scalar_lea.vmem %s1, %s398
        %p400 = pneg %p79
        %p401 = pneg %p76
        %p402 = pneg %p100
        %p403 = pneg %p97
        %p404 = pneg %p121
        %p405 = pneg %p118
        %p406 = pneg %p142
        %p407 = pneg %p139
        %p408 = pneg %p163
        %p409 = pneg %p160
        %p410 = pneg %p184
        %p411 = pneg %p181
        %p412 = pneg %p210
        %p413 = pneg %p207
        %s414 = sand.u32 %s197, 1
        %s415 = scalar_lea.sflag [#allocation4], %s414
        %s416 = sand.u32 %s197, 1
        %s417 = smul.addr %s416, 8
        %s418 = scalar_lea.vmem [#allocation8], %s417
        %p419 = pneg %p236
        %p420 = pneg %p233
        %s421 = sand.u32 %s32, 1
        %s422 = scalar_lea.sflag [#allocation10], %s421
        %s423 = sand.u32 %s223, 1
        %s424 = smul.addr %s423, 16
        %s425 = scalar_lea.vmem [#allocation9], %s424
        %p426 = pneg %p262
        %p427 = pneg %p259
        %s428 = sand.u32 %s32, 1
        %s429 = scalar_lea.sflag [#allocation10], %s428
        %s430 = sand.u32 %s249, 1
        %s431 = smul.addr %s430, 16
        %s432 = scalar_lea.vmem [#allocation11], %s431
        %p433 = pneg %p288
        %p434 = pneg %p285
        %p435 = scmp.lt.s32.totalorder %s32, 1
        %s436 = scalar_select %p435, %s32, 1
        %s437 = smul.addr %s436, 8
        %s438 = scalar_lea.vmem %s10, %s437
        %p439 = scmp.lt.s32.totalorder %s32, 1
        %s440 = scalar_select %p439, %s32, 1
        %s441 = smul.addr %s440, 8
        %s442 = scalar_lea.vmem %s1, %s441
        %s443 = smul.u32 4, %s32
        %s444 = smul.u32 4, %s32
        %p445 = scmp.lt.s32.totalorder %s32, 1
        %s446 = scalar_select %p445, %s32, 1
        %s447 = smul.addr %s446, 8
        %s448 = scalar_lea.vmem %s10, %s447
        %v450 = vld [vmem:[#allocation7] sm:$0xff]
        %v451 = vld [vmem:[#allocation7 + $0x8] sm:$0xff]
        %v452 = vld [vmem:[#allocation7 + $0x10] sm:$0xff]
        %v453 = vld [vmem:[#allocation7 + $0x18] sm:$0xff]
        %v454 = vld [vmem:[%s4] sm:$0x1]
        %v455 = vld [vmem:[%s376] sm:$0xff]
        %v457 = vlaneseq
        %v458 = vshrl.u32 %v457, 7
        %v459 = vsub.s32 0, %v458
        %v460 = vrot.slane %v454, %v459
        %vm462 = vcmask 261120
        %v464 = vsel %vm462, %v455, 0
        %466 = vmatprep.subr.mxu0 0.0
        %467 = vmatpush1.msra.mxu0 %v450
        %468 = vmatprep.subr.mxu0 0.0
        %469 = vmatpush1.msra.mxu0 %v451
        %470 = vmatprep.subr.mxu0 0.0
        %471 = vmatpush1.msra.mxu0 %v452
        %472 = vmatprep.subr.mxu0 0.0
        %473 = vmatpush1.msra.mxu0 %v453
        %474 = vmatprep.subr.mxu0 0.0
        %475 = vmatpush1.msra.mxu0 0.0
        %476 = vmatprep.subr.mxu0 0.0
        %477 = vmatpush1.msra.mxu0 0.0
        %478 = vmatprep.subr.mxu0 0.0
        %479 = vmatpush1.msra.mxu0 0.0
        %480 = vmatprep.subr.mxu0 0.0
        %481 = vmatpush1.msra.mxu0 0.0
        %482 = vmatprep.subr.mxu0 0.0
        %483 = vmatpush1.msra.mxu0 0.0
        %484 = vmatprep.subr.mxu0 0.0
        %485 = vmatpush1.msra.mxu0 0.0
        %486 = vmatprep.subr.mxu0 0.0
        %487 = vmatpush1.msra.mxu0 0.0
        %488 = vmatprep.subr.mxu0 0.0
        %489 = vmatpush1.msra.mxu0 0.0
        %490 = vmatprep.subr.mxu0 0.0
        %491 = vmatpush1.msra.mxu0 0.0
        %492 = vmatprep.subr.mxu0 0.0
        %493 = vmatpush1.msra.mxu0 0.0
        %494 = vmatprep.subr.mxu0 0.0
        %495 = vmatpush1.msra.mxu0 0.0
        %496 = vmatprep.subr.mxu0 0.0
        %497 = vmatpush1.msra.mxu0 0.0
        %498 = vmatprep.subr.mxu0 0.0
        %499 = vmatpush1.msra.mxu0 0.0
        %500 = vmatprep.subr.mxu0 0.0
        %501 = vmatpush1.msra.mxu0 0.0
        %502 = vmatprep.subr.mxu0 0.0
        %503 = vmatpush1.msra.mxu0 0.0
        %504 = vmatprep.subr.mxu0 0.0
        %505 = vmatpush1.msra.mxu0 0.0
        %506 = vmatprep.subr.mxu0 0.0
        %507 = vmatpush1.msra.mxu0 0.0
        %508 = vmatprep.subr.mxu0 0.0
        %509 = vmatpush1.msra.mxu0 0.0
        %510 = vmatprep.subr.mxu0 0.0
        %511 = vmatpush1.msra.mxu0 0.0
        %512 = vmatprep.subr.mxu0 0.0
        %513 = vmatpush1.msra.mxu0 0.0
        %514 = vmatprep.subr.mxu0 0.0
        %515 = vmatpush1.msra.mxu0 0.0
        %516 = vmatprep.subr.mxu0 0.0
        %517 = vmatpush1.msra.mxu0 0.0
        %518 = vmatprep.subr.mxu0 0.0
        %519 = vmatpush1.msra.mxu0 0.0
        %520 = vmatprep.subr.mxu0 0.0
        %521 = vmatpush1.msra.mxu0 0.0
        %522 = vmatprep.subr.mxu0 0.0
        %523 = vmatpush1.msra.mxu0 0.0
        %524 = vmatprep.subr.mxu0 0.0
        %525 = vmatpush1.msra.mxu0 0.0
        %526 = vmatprep.subr.mxu0 0.0
        %527 = vmatpush1.msra.mxu0 0.0
        %528 = vmatprep.subr.mxu0 0.0
        %529 = vmatpush1.msra.mxu0 0.0
        %530 = vmatprep.mubr.f32.mxu0 0.0
        %531 = vmatmul.mubr.f32.gmra.mrb[0].mxu0 %v464
        %v532 = vpop.f32.mrb[0].mxu0
        %v533 = vadd.f32 %v460, %v532
        %v534 = vpop.f32.mrb[0].mxu0
        %535 = vdwg.mxu0
        %v536 = vmul.f32 %v533, -5.0
        %v537 = vmul.f32 %v536, 1.442695
        %v538 = vpow.pop %v537
        %v539 = vadd.f32 %v538, 1.0
        %v540 = vrcp.pop %v539
        %v541 = vmul.f32 1.0, %v540
        %v542 = vadd.f32 %v541, 1e-05
        %v543 = vmul.f32 %v542, 1.0986123
        %v544 = vmul.f32 %v543, 1.442695
        %v545 = vpow.pop %v544
        %v546 = vsub.f32 %v545, 1.0
        %v547 = vld [vmem:[%s442] sm:$0xff]
        %549 = vset.pattern.permute.xlu0 0
        %550 = vperm.xlu0 %549, %v547
        %v551 = vpop.permute.xlu0 %550
        %v553 = vmul.f32 %v546, %v551
        %555 = vrot.lane.b32.xlu0 %v553, 32
        %v556 = vpop.permute.xlu0 %555
        %vm558 = vcmask 31744
        %559 = vst.msk [vmem:[%s448] sm:$0xff] %vm558, %v556
        %561 = vrot.lane.b32.xlu0 %v533, 120
        %v562 = vpop.permute.xlu0 %561
        %564 = vrot.lane.b32.xlu0 %v533, 112
        %v565 = vpop.permute.xlu0 %564
        %567 = vrot.lane.b32.xlu0 %v533, 104
        %v568 = vpop.permute.xlu0 %567
        %v570 = vcombine.low %v533, %v565
        %v571 = vcombine.high %v533, %v565
        %v573 = vunpack.c.l.s4 1983009808
        %v574 = vunpack.c.0.s8 %v573
        %v575 = vlaneseq
        %v576 = vshrl.u32 %v575, 7
        %v577 = vsub.s32 %v574, %v576
        %v578 = vrot.slane %v570, %v577
        %v580 = vunpack.c.l.s4 1983009808
        %v581 = vunpack.c.0.s8 %v580
        %v582 = vlaneseq
        %v583 = vshrl.u32 %v582, 7
        %v584 = vsub.s32 %v581, %v583
        %v585 = vrot.slane %v571, %v584
        %v586 = vcombine.low %v562, %v568
        %v587 = vcombine.high %v562, %v568
        %v589 = vunpack.c.l.s4 1983009808
        %v590 = vunpack.c.0.s8 %v589
        %v591 = vlaneseq
        %v592 = vshrl.u32 %v591, 7
        %v593 = vsub.s32 %v590, %v592
        %v594 = vrot.slane %v586, %v593
        %v596 = vunpack.c.l.s4 1983009808
        %v597 = vunpack.c.0.s8 %v596
        %v598 = vlaneseq
        %v599 = vshrl.u32 %v598, 7
        %v600 = vsub.s32 %v597, %v599
        %v601 = vrot.slane %v587, %v600
        %v602 = vcombine.low %v578, %v594
        %v603 = vcombine.high %v578, %v594
        %v605 = vunpack.c.l.s4 1934713408
        %v606 = vunpack.c.0.s8 %v605
        %v607 = vlaneseq
        %v608 = vshrl.u32 %v607, 7
        %v609 = vsub.s32 %v606, %v608
        %v610 = vrot.slane %v602, %v609
        %v612 = vunpack.c.l.s4 1934713408
        %v613 = vunpack.c.0.s8 %v612
        %v614 = vlaneseq
        %v615 = vshrl.u32 %v614, 7
        %v616 = vsub.s32 %v613, %v615
        %v617 = vrot.slane %v603, %v616
        %v618 = vcombine.low %v585, %v601
        %v619 = vcombine.high %v585, %v601
        %v621 = vunpack.c.l.s4 1934713408
        %v622 = vunpack.c.0.s8 %v621
        %v623 = vlaneseq
        %v624 = vshrl.u32 %v623, 7
        %v625 = vsub.s32 %v622, %v624
        %v626 = vrot.slane %v618, %v625
        %v628 = vunpack.c.l.s4 1934713408
        %v629 = vunpack.c.0.s8 %v628
        %v630 = vlaneseq
        %v631 = vshrl.u32 %v630, 7
        %v632 = vsub.s32 %v629, %v631
        %v633 = vrot.slane %v619, %v632
        %v634 = vcombine.high %v610, 0.0
        %v635 = vcombine.high %v617, 0.0
        %v636 = vcombine.high %v626, 0.0
        %v637 = vcombine.high %v633, 0.0
        %v638 = vcombine.low %v610, %v617
        %v640 = vunpack.c.l.s4 1983009808
        %v641 = vunpack.c.0.s8 %v640
        %v642 = vlaneseq
        %v643 = vshrl.u32 %v642, 7
        %v644 = vsub.s32 %v641, %v643
        %v645 = vrot.slane %v638, %v644
        %v646 = vcombine.low %v634, %v635
        %v648 = vunpack.c.l.s4 1983009808
        %v649 = vunpack.c.0.s8 %v648
        %v650 = vlaneseq
        %v651 = vshrl.u32 %v650, 7
        %v652 = vsub.s32 %v649, %v651
        %v653 = vrot.slane %v646, %v652
        %v654 = vcombine.low %v626, %v633
        %v656 = vunpack.c.l.s4 1983009808
        %v657 = vunpack.c.0.s8 %v656
        %v658 = vlaneseq
        %v659 = vshrl.u32 %v658, 7
        %v660 = vsub.s32 %v657, %v659
        %v661 = vrot.slane %v654, %v660
        %v662 = vcombine.low %v636, %v637
        %v664 = vunpack.c.l.s4 1983009808
        %v665 = vunpack.c.0.s8 %v664
        %v666 = vlaneseq
        %v667 = vshrl.u32 %v666, 7
        %v668 = vsub.s32 %v665, %v667
        %v669 = vrot.slane %v662, %v668
        %v670 = vcombine.low %v645, %v653
        %v671 = vcombine.high %v645, %v653
        %v673 = vunpack.c.l.s4 1934713408
        %v674 = vunpack.c.0.s8 %v673
        %v675 = vlaneseq
        %v676 = vshrl.u32 %v675, 7
        %v677 = vsub.s32 %v674, %v676
        %v678 = vrot.slane %v670, %v677
        %v680 = vunpack.c.l.s4 1934713408
        %v681 = vunpack.c.0.s8 %v680
        %v682 = vlaneseq
        %v683 = vshrl.u32 %v682, 7
        %v684 = vsub.s32 %v681, %v683
        %v685 = vrot.slane %v671, %v684
        %v686 = vcombine.low %v661, %v669
        %v687 = vcombine.high %v661, %v669
        %v689 = vunpack.c.l.s4 1934713408
        %v690 = vunpack.c.0.s8 %v689
        %v691 = vlaneseq
        %v692 = vshrl.u32 %v691, 7
        %v693 = vsub.s32 %v690, %v692
        %v694 = vrot.slane %v686, %v693
        %v696 = vunpack.c.l.s4 1934713408
        %v697 = vunpack.c.0.s8 %v696
        %v698 = vlaneseq
        %v699 = vshrl.u32 %v698, 7
        %v700 = vsub.s32 %v697, %v699
        %v701 = vrot.slane %v687, %v700
        %v702 = vcombine.low %v678, %v694
        %v703 = vcombine.high %v678, %v694
        %v704 = vcombine.low %v685, %v701
        %v705 = vcombine.high %v685, %v701
        %706 = vrot.lane.b32.xlu0 %v533, 96
        %v707 = vpop.permute.xlu0 %706
        %708 = vrot.lane.b32.xlu0 %v562, 96
        %v709 = vpop.permute.xlu0 %708
        %710 = vrot.lane.b32.xlu0 %v565, 96
        %v711 = vpop.permute.xlu0 %710
        %712 = vrot.lane.b32.xlu0 %v568, 96
        %v713 = vpop.permute.xlu0 %712
        %v718 = vcombine.low %v707, %v711
        %v719 = vcombine.high %v707, %v711
        %v721 = vunpack.c.l.s4 1983009808
        %v722 = vunpack.c.0.s8 %v721
        %v723 = vlaneseq
        %v724 = vshrl.u32 %v723, 7
        %v725 = vsub.s32 %v722, %v724
        %v726 = vrot.slane %v718, %v725
        %v728 = vunpack.c.l.s4 1983009808
        %v729 = vunpack.c.0.s8 %v728
        %v730 = vlaneseq
        %v731 = vshrl.u32 %v730, 7
        %v732 = vsub.s32 %v729, %v731
        %v733 = vrot.slane %v719, %v732
        %v734 = vcombine.low %v709, %v713
        %v735 = vcombine.high %v709, %v713
        %v737 = vunpack.c.l.s4 1983009808
        %v738 = vunpack.c.0.s8 %v737
        %v739 = vlaneseq
        %v740 = vshrl.u32 %v739, 7
        %v741 = vsub.s32 %v738, %v740
        %v742 = vrot.slane %v734, %v741
        %v744 = vunpack.c.l.s4 1983009808
        %v745 = vunpack.c.0.s8 %v744
        %v746 = vlaneseq
        %v747 = vshrl.u32 %v746, 7
        %v748 = vsub.s32 %v745, %v747
        %v749 = vrot.slane %v735, %v748
        %v750 = vcombine.low %v726, %v742
        %v751 = vcombine.high %v726, %v742
        %v753 = vunpack.c.l.s4 1934713408
        %v754 = vunpack.c.0.s8 %v753
        %v755 = vlaneseq
        %v756 = vshrl.u32 %v755, 7
        %v757 = vsub.s32 %v754, %v756
        %v758 = vrot.slane %v750, %v757
        %v760 = vunpack.c.l.s4 1934713408
        %v761 = vunpack.c.0.s8 %v760
        %v762 = vlaneseq
        %v763 = vshrl.u32 %v762, 7
        %v764 = vsub.s32 %v761, %v763
        %v765 = vrot.slane %v751, %v764
        %v766 = vcombine.low %v733, %v749
        %v767 = vcombine.high %v733, %v749
        %v769 = vunpack.c.l.s4 1934713408
        %v770 = vunpack.c.0.s8 %v769
        %v771 = vlaneseq
        %v772 = vshrl.u32 %v771, 7
        %v773 = vsub.s32 %v770, %v772
        %v774 = vrot.slane %v766, %v773
        %v776 = vunpack.c.l.s4 1934713408
        %v777 = vunpack.c.0.s8 %v776
        %v778 = vlaneseq
        %v779 = vshrl.u32 %v778, 7
        %v780 = vsub.s32 %v777, %v779
        %v781 = vrot.slane %v767, %v780
        %v782 = vcombine.high %v758, 0.0
        %v783 = vcombine.high %v765, 0.0
        %v784 = vcombine.high %v774, 0.0
        %v785 = vcombine.high %v781, 0.0
        %v786 = vcombine.low %v758, %v765
        %v788 = vunpack.c.l.s4 1983009808
        %v789 = vunpack.c.0.s8 %v788
        %v790 = vlaneseq
        %v791 = vshrl.u32 %v790, 7
        %v792 = vsub.s32 %v789, %v791
        %v793 = vrot.slane %v786, %v792
        %v794 = vcombine.low %v782, %v783
        %v796 = vunpack.c.l.s4 1983009808
        %v797 = vunpack.c.0.s8 %v796
        %v798 = vlaneseq
        %v799 = vshrl.u32 %v798, 7
        %v800 = vsub.s32 %v797, %v799
        %v801 = vrot.slane %v794, %v800
        %v802 = vcombine.low %v774, %v781
        %v804 = vunpack.c.l.s4 1983009808
        %v805 = vunpack.c.0.s8 %v804
        %v806 = vlaneseq
        %v807 = vshrl.u32 %v806, 7
        %v808 = vsub.s32 %v805, %v807
        %v809 = vrot.slane %v802, %v808
        %v810 = vcombine.low %v784, %v785
        %v812 = vunpack.c.l.s4 1983009808
        %v813 = vunpack.c.0.s8 %v812
        %v814 = vlaneseq
        %v815 = vshrl.u32 %v814, 7
        %v816 = vsub.s32 %v813, %v815
        %v817 = vrot.slane %v810, %v816
        %v818 = vcombine.low %v793, %v801
        %v819 = vcombine.high %v793, %v801
        %v821 = vunpack.c.l.s4 1934713408
        %v822 = vunpack.c.0.s8 %v821
        %v823 = vlaneseq
        %v824 = vshrl.u32 %v823, 7
        %v825 = vsub.s32 %v822, %v824
        %v826 = vrot.slane %v818, %v825
        %v828 = vunpack.c.l.s4 1934713408
        %v829 = vunpack.c.0.s8 %v828
        %v830 = vlaneseq
        %v831 = vshrl.u32 %v830, 7
        %v832 = vsub.s32 %v829, %v831
        %v833 = vrot.slane %v819, %v832
        %v834 = vcombine.low %v809, %v817
        %v835 = vcombine.high %v809, %v817
        %v837 = vunpack.c.l.s4 1934713408
        %v838 = vunpack.c.0.s8 %v837
        %v839 = vlaneseq
        %v840 = vshrl.u32 %v839, 7
        %v841 = vsub.s32 %v838, %v840
        %v842 = vrot.slane %v834, %v841
        %v844 = vunpack.c.l.s4 1934713408
        %v845 = vunpack.c.0.s8 %v844
        %v846 = vlaneseq
        %v847 = vshrl.u32 %v846, 7
        %v848 = vsub.s32 %v845, %v847
        %v849 = vrot.slane %v835, %v848
        %v850 = vcombine.low %v826, %v842
        %v851 = vcombine.high %v826, %v842
        %v852 = vcombine.low %v833, %v849
        %v853 = vcombine.high %v833, %v849
        %854 = vrot.lane.b32.xlu0 %v533, 64
        %v855 = vpop.permute.xlu0 %854
        %856 = vrot.lane.b32.xlu0 %v562, 64
        %v857 = vpop.permute.xlu0 %856
        %858 = vrot.lane.b32.xlu0 %v565, 64
        %v859 = vpop.permute.xlu0 %858
        %860 = vrot.lane.b32.xlu0 %v568, 64
        %v861 = vpop.permute.xlu0 %860
        %v866 = vcombine.low %v855, %v859
        %v867 = vcombine.high %v855, %v859
        %v869 = vunpack.c.l.s4 1983009808
        %v870 = vunpack.c.0.s8 %v869
        %v871 = vlaneseq
        %v872 = vshrl.u32 %v871, 7
        %v873 = vsub.s32 %v870, %v872
        %v874 = vrot.slane %v866, %v873
        %v876 = vunpack.c.l.s4 1983009808
        %v877 = vunpack.c.0.s8 %v876
        %v878 = vlaneseq
        %v879 = vshrl.u32 %v878, 7
        %v880 = vsub.s32 %v877, %v879
        %v881 = vrot.slane %v867, %v880
        %v882 = vcombine.low %v857, %v861
        %v883 = vcombine.high %v857, %v861
        %v885 = vunpack.c.l.s4 1983009808
        %v886 = vunpack.c.0.s8 %v885
        %v887 = vlaneseq
        %v888 = vshrl.u32 %v887, 7
        %v889 = vsub.s32 %v886, %v888
        %v890 = vrot.slane %v882, %v889
        %v892 = vunpack.c.l.s4 1983009808
        %v893 = vunpack.c.0.s8 %v892
        %v894 = vlaneseq
        %v895 = vshrl.u32 %v894, 7
        %v896 = vsub.s32 %v893, %v895
        %v897 = vrot.slane %v883, %v896
        %v898 = vcombine.low %v874, %v890
        %v899 = vcombine.high %v874, %v890
        %v901 = vunpack.c.l.s4 1934713408
        %v902 = vunpack.c.0.s8 %v901
        %v903 = vlaneseq
        %v904 = vshrl.u32 %v903, 7
        %v905 = vsub.s32 %v902, %v904
        %v906 = vrot.slane %v898, %v905
        %v908 = vunpack.c.l.s4 1934713408
        %v909 = vunpack.c.0.s8 %v908
        %v910 = vlaneseq
        %v911 = vshrl.u32 %v910, 7
        %v912 = vsub.s32 %v909, %v911
        %v913 = vrot.slane %v899, %v912
        %v914 = vcombine.low %v881, %v897
        %v915 = vcombine.high %v881, %v897
        %v917 = vunpack.c.l.s4 1934713408
        %v918 = vunpack.c.0.s8 %v917
        %v919 = vlaneseq
        %v920 = vshrl.u32 %v919, 7
        %v921 = vsub.s32 %v918, %v920
        %v922 = vrot.slane %v914, %v921
        %v924 = vunpack.c.l.s4 1934713408
        %v925 = vunpack.c.0.s8 %v924
        %v926 = vlaneseq
        %v927 = vshrl.u32 %v926, 7
        %v928 = vsub.s32 %v925, %v927
        %v929 = vrot.slane %v915, %v928
        %v930 = vcombine.high %v906, 0.0
        %v931 = vcombine.high %v913, 0.0
        %v932 = vcombine.high %v922, 0.0
        %v933 = vcombine.high %v929, 0.0
        %v934 = vcombine.low %v906, %v913
        %v936 = vunpack.c.l.s4 1983009808
        %v937 = vunpack.c.0.s8 %v936
        %v938 = vlaneseq
        %v939 = vshrl.u32 %v938, 7
        %v940 = vsub.s32 %v937, %v939
        %v941 = vrot.slane %v934, %v940
        %v942 = vcombine.low %v930, %v931
        %v944 = vunpack.c.l.s4 1983009808
        %v945 = vunpack.c.0.s8 %v944
        %v946 = vlaneseq
        %v947 = vshrl.u32 %v946, 7
        %v948 = vsub.s32 %v945, %v947
        %v949 = vrot.slane %v942, %v948
        %v950 = vcombine.low %v922, %v929
        %v952 = vunpack.c.l.s4 1983009808
        %v953 = vunpack.c.0.s8 %v952
        %v954 = vlaneseq
        %v955 = vshrl.u32 %v954, 7
        %v956 = vsub.s32 %v953, %v955
        %v957 = vrot.slane %v950, %v956
        %v958 = vcombine.low %v932, %v933
        %v960 = vunpack.c.l.s4 1983009808
        %v961 = vunpack.c.0.s8 %v960
        %v962 = vlaneseq
        %v963 = vshrl.u32 %v962, 7
        %v964 = vsub.s32 %v961, %v963
        %v965 = vrot.slane %v958, %v964
        %v966 = vcombine.low %v941, %v949
        %v967 = vcombine.high %v941, %v949
        %v969 = vunpack.c.l.s4 1934713408
        %v970 = vunpack.c.0.s8 %v969
        %v971 = vlaneseq
        %v972 = vshrl.u32 %v971, 7
        %v973 = vsub.s32 %v970, %v972
        %v974 = vrot.slane %v966, %v973
        %v976 = vunpack.c.l.s4 1934713408
        %v977 = vunpack.c.0.s8 %v976
        %v978 = vlaneseq
        %v979 = vshrl.u32 %v978, 7
        %v980 = vsub.s32 %v977, %v979
        %v981 = vrot.slane %v967, %v980
        %v982 = vcombine.low %v957, %v965
        %v983 = vcombine.high %v957, %v965
        %v985 = vunpack.c.l.s4 1934713408
        %v986 = vunpack.c.0.s8 %v985
        %v987 = vlaneseq
        %v988 = vshrl.u32 %v987, 7
        %v989 = vsub.s32 %v986, %v988
        %v990 = vrot.slane %v982, %v989
        %v992 = vunpack.c.l.s4 1934713408
        %v993 = vunpack.c.0.s8 %v992
        %v994 = vlaneseq
        %v995 = vshrl.u32 %v994, 7
        %v996 = vsub.s32 %v993, %v995
        %v997 = vrot.slane %v983, %v996
        %v998 = vcombine.low %v974, %v990
        %v999 = vcombine.high %v974, %v990
        %v1000 = vcombine.low %v981, %v997
        %v1001 = vcombine.high %v981, %v997
        %v1002 = vlaneseq
        %v1003 = vshrl.u32 %v1002, 7
        %v1004 = vsub.s32 0, %v1003
        %v1005 = vrot.slane %v553, %v1004
        %s1007 = sor.u32 256, 96
        %1008 = vbcast.lane.b32.xlu0 %v1005, %s1007
        %v1009 = vpop.permute.xlu0 %1008
        %v1010 = vlaneseq
        %v1011 = vshrl.u32 %v1010, 7
        %v1012 = vsub.s32 1, %v1011
        %v1013 = vrot.slane %v553, %v1012
        %s1015 = sor.u32 256, 96
        %1016 = vbcast.lane.b32.xlu0 %v1013, %s1015
        %v1017 = vpop.permute.xlu0 %1016
        %v1018 = vlaneseq
        %v1019 = vshrl.u32 %v1018, 7
        %v1020 = vsub.s32 2, %v1019
        %v1021 = vrot.slane %v553, %v1020
        %s1023 = sor.u32 256, 96
        %1024 = vbcast.lane.b32.xlu0 %v1021, %s1023
        %v1025 = vpop.permute.xlu0 %1024
        %v1026 = vlaneseq
        %v1027 = vshrl.u32 %v1026, 7
        %v1028 = vsub.s32 3, %v1027
        %v1029 = vrot.slane %v553, %v1028
        %s1031 = sor.u32 256, 96
        %1032 = vbcast.lane.b32.xlu0 %v1029, %s1031
        %v1033 = vpop.permute.xlu0 %1032
        %v1034 = vlaneseq
        %v1035 = vshrl.u32 %v1034, 7
        %v1036 = vsub.s32 4, %v1035
        %v1037 = vrot.slane %v553, %v1036
        %s1039 = sor.u32 256, 96
        %1040 = vbcast.lane.b32.xlu0 %v1037, %s1039
        %v1041 = vpop.permute.xlu0 %1040
        %v1042 = vlaneseq
        %v1043 = vshrl.u32 %v1042, 7
        %v1044 = vsub.s32 5, %v1043
        %v1045 = vrot.slane %v553, %v1044
        %s1047 = sor.u32 256, 96
        %1048 = vbcast.lane.b32.xlu0 %v1045, %s1047
        %v1049 = vpop.permute.xlu0 %1048
        %v1050 = vlaneseq
        %v1051 = vshrl.u32 %v1050, 7
        %v1052 = vsub.s32 6, %v1051
        %v1053 = vrot.slane %v553, %v1052
        %s1055 = sor.u32 256, 96
        %1056 = vbcast.lane.b32.xlu0 %v1053, %s1055
        %v1057 = vpop.permute.xlu0 %1056
        %v1058 = vlaneseq
        %v1059 = vshrl.u32 %v1058, 7
        %v1060 = vsub.s32 7, %v1059
        %v1061 = vrot.slane %v553, %v1060
        %s1063 = sor.u32 256, 96
        %1064 = vbcast.lane.b32.xlu0 %v1061, %s1063
        %v1065 = vpop.permute.xlu0 %1064
        %v1066 = vcombine.low %v1009, %v1025
        %v1068 = vunpack.c.l.s4 1983009808
        %v1069 = vunpack.c.0.s8 %v1068
        %v1070 = vlaneseq
        %v1071 = vshrl.u32 %v1070, 7
        %v1072 = vsub.s32 %v1069, %v1071
        %v1073 = vrot.slane %v1066, %v1072
        %v1074 = vcombine.low %v1017, %v1033
        %v1076 = vunpack.c.l.s4 1983009808
        %v1077 = vunpack.c.0.s8 %v1076
        %v1078 = vlaneseq
        %v1079 = vshrl.u32 %v1078, 7
        %v1080 = vsub.s32 %v1077, %v1079
        %v1081 = vrot.slane %v1074, %v1080
        %v1082 = vcombine.low %v1041, %v1057
        %v1084 = vunpack.c.l.s4 1983009808
        %v1085 = vunpack.c.0.s8 %v1084
        %v1086 = vlaneseq
        %v1087 = vshrl.u32 %v1086, 7
        %v1088 = vsub.s32 %v1085, %v1087
        %v1089 = vrot.slane %v1082, %v1088
        %v1090 = vcombine.low %v1049, %v1065
        %v1092 = vunpack.c.l.s4 1983009808
        %v1093 = vunpack.c.0.s8 %v1092
        %v1094 = vlaneseq
        %v1095 = vshrl.u32 %v1094, 7
        %v1096 = vsub.s32 %v1093, %v1095
        %v1097 = vrot.slane %v1090, %v1096
        %v1098 = vcombine.low %v1073, %v1081
        %v1099 = vcombine.high %v1073, %v1081
        %v1101 = vunpack.c.l.s4 1934713408
        %v1102 = vunpack.c.0.s8 %v1101
        %v1103 = vlaneseq
        %v1104 = vshrl.u32 %v1103, 7
        %v1105 = vsub.s32 %v1102, %v1104
        %v1106 = vrot.slane %v1098, %v1105
        %v1108 = vunpack.c.l.s4 1934713408
        %v1109 = vunpack.c.0.s8 %v1108
        %v1110 = vlaneseq
        %v1111 = vshrl.u32 %v1110, 7
        %v1112 = vsub.s32 %v1109, %v1111
        %v1113 = vrot.slane %v1099, %v1112
        %v1114 = vcombine.low %v1089, %v1097
        %v1115 = vcombine.high %v1089, %v1097
        %v1117 = vunpack.c.l.s4 1934713408
        %v1118 = vunpack.c.0.s8 %v1117
        %v1119 = vlaneseq
        %v1120 = vshrl.u32 %v1119, 7
        %v1121 = vsub.s32 %v1118, %v1120
        %v1122 = vrot.slane %v1114, %v1121
        %v1124 = vunpack.c.l.s4 1934713408
        %v1125 = vunpack.c.0.s8 %v1124
        %v1126 = vlaneseq
        %v1127 = vshrl.u32 %v1126, 7
        %v1128 = vsub.s32 %v1125, %v1127
        %v1129 = vrot.slane %v1115, %v1128
        %v1130 = vcombine.low %v1106, %v1122
        %v1131 = vcombine.high %v1106, %v1122
        %v1132 = vcombine.low %v1113, %v1129
        %v1133 = vcombine.high %v1113, %v1129
        %v1134 = vpack.c.bf16 %v702, %v702
        %v1135 = vpack.c.bf16 %v703, %v703
        %v1136 = vpack.c.bf16 %v704, %v704
        %v1137 = vpack.c.bf16 %v705, %v705
        %v1138 = vpack.c.bf16 %v850, %v850
        %v1139 = vpack.c.bf16 %v851, %v851
        %v1140 = vpack.c.bf16 %v852, %v852
        %v1141 = vpack.c.bf16 %v853, %v853
        %vm1142 = vcmask 64512
        %v1144 = vsel %vm1142, %v1134, 0
        %v1147 = vsel %vm1142, %v1138, 0
        %1149 = vmatprep.subr.bf16.mxu0 0
        %1150 = vmatpush1.bf16.xpose.msra.mxu0 %v1147
        %1151 = vmatprep.subr.bf16.mxu0 0
        %1152 = vmatpush1.bf16.xpose.msra.mxu0 0
        %1153 = vmatprep.subr.bf16.mxu0 0
        %1154 = vmatpush1.bf16.xpose.msra.mxu0 0
        %1155 = vmatprep.subr.bf16.mxu0 0
        %1156 = vmatpush1.bf16.xpose.msra.mxu0 0
        %1157 = vmatprep.subr.bf16.mxu0 0
        %1158 = vmatpush1.bf16.xpose.msra.mxu0 0
        %1159 = vmatprep.subr.bf16.mxu0 0
        %1160 = vmatpush1.bf16.xpose.msra.mxu0 0
        %1161 = vmatprep.subr.bf16.mxu0 0
        %1162 = vmatpush1.bf16.xpose.msra.mxu0 0
        %1163 = vmatprep.subr.bf16.mxu0 0
        %1164 = vmatpush1.bf16.xpose.msra.mxu0 0
        %1165 = vmatprep.subr.bf16.mxu0 0
        %1166 = vmatpush1.bf16.xpose.msra.mxu0 0
        %1167 = vmatprep.subr.bf16.mxu0 0
        %1168 = vmatpush1.bf16.xpose.msra.mxu0 0
        %1169 = vmatprep.subr.bf16.mxu0 0
        %1170 = vmatpush1.bf16.xpose.msra.mxu0 0
        %1171 = vmatprep.subr.bf16.mxu0 0
        %1172 = vmatpush1.bf16.xpose.msra.mxu0 0
        %1173 = vmatprep.subr.bf16.mxu0 0
        %1174 = vmatpush1.bf16.xpose.msra.mxu0 0
        %1175 = vmatprep.subr.bf16.mxu0 0
        %1176 = vmatpush1.bf16.xpose.msra.mxu0 0
        %1177 = vmatprep.subr.bf16.mxu0 0
        %1178 = vmatpush1.bf16.xpose.msra.mxu0 0
        %1179 = vmatprep.subr.bf16.mxu0 0
        %1180 = vmatpush1.bf16.xpose.msra.mxu0 0
        %1181 = vmatprep.mubr.bf16.mxu0 0
        %1182 = vmatmul.mubr.bf16.gmra.mrb[0].mxu0 %v1144
        %v1183 = vpop.f32.mrb[0].mxu0
        %v1184 = vadd.f32 0.0, %v1183
        %v1185 = vpop.f32.mrb[0].mxu0
        %v1186 = vpop.f32.mrb[0].mxu0
        %v1187 = vpop.f32.mrb[0].mxu0
        %1188 = vdwg.mxu0
        %v1190 = vsel %vm1142, %v1135, 0
        %v1193 = vsel %vm1142, %v1139, 0
        %1195 = vmatprep.subr.bf16.mxu0 0
        %1196 = vmatpush1.bf16.xpose.msra.mxu0 %v1193
        %1197 = vmatprep.subr.bf16.mxu0 0
        %1198 = vmatpush1.bf16.xpose.msra.mxu0 0
        %1199 = vmatprep.subr.bf16.mxu0 0
        %1200 = vmatpush1.bf16.xpose.msra.mxu0 0
        %1201 = vmatprep.subr.bf16.mxu0 0
        %1202 = vmatpush1.bf16.xpose.msra.mxu0 0
        %1203 = vmatprep.subr.bf16.mxu0 0
        %1204 = vmatpush1.bf16.xpose.msra.mxu0 0
        %1205 = vmatprep.subr.bf16.mxu0 0
        %1206 = vmatpush1.bf16.xpose.msra.mxu0 0
        %1207 = vmatprep.subr.bf16.mxu0 0
        %1208 = vmatpush1.bf16.xpose.msra.mxu0 0
        %1209 = vmatprep.subr.bf16.mxu0 0
        %1210 = vmatpush1.bf16.xpose.msra.mxu0 0
        %1211 = vmatprep.subr.bf16.mxu0 0
        %1212 = vmatpush1.bf16.xpose.msra.mxu0 0
        %1213 = vmatprep.subr.bf16.mxu0 0
        %1214 = vmatpush1.bf16.xpose.msra.mxu0 0
        %1215 = vmatprep.subr.bf16.mxu0 0
        %1216 = vmatpush1.bf16.xpose.msra.mxu0 0
        %1217 = vmatprep.subr.bf16.mxu0 0
        %1218 = vmatpush1.bf16.xpose.msra.mxu0 0
        %1219 = vmatprep.subr.bf16.mxu0 0
        %1220 = vmatpush1.bf16.xpose.msra.mxu0 0
        %1221 = vmatprep.subr.bf16.mxu0 0
        %1222 = vmatpush1.bf16.xpose.msra.mxu0 0
        %1223 = vmatprep.subr.bf16.mxu0 0
        %1224 = vmatpush1.bf16.xpose.msra.mxu0 0
        %1225 = vmatprep.subr.bf16.mxu0 0
        %1226 = vmatpush1.bf16.xpose.msra.mxu0 0
        %1227 = vmatprep.mubr.bf16.mxu0 0
        %1228 = vmatmul.mubr.bf16.gmra.mrb[0].mxu0 %v1190
        %v1229 = vpop.f32.mrb[0].mxu0
        %v1230 = vadd.f32 0.0, %v1229
        %v1231 = vpop.f32.mrb[0].mxu0
        %v1232 = vpop.f32.mrb[0].mxu0
        %v1233 = vpop.f32.mrb[0].mxu0
        %1234 = vdwg.mxu0
        %v1236 = vsel %vm1142, %v1136, 0
        %v1239 = vsel %vm1142, %v1140, 0
        %1241 = vmatprep.subr.bf16.mxu0 0
        %1242 = vmatpush1.bf16.xpose.msra.mxu0 %v1239
        %1243 = vmatprep.subr.bf16.mxu0 0
        %1244 = vmatpush1.bf16.xpose.msra.mxu0 0
        %1245 = vmatprep.subr.bf16.mxu0 0
        %1246 = vmatpush1.bf16.xpose.msra.mxu0 0
        %1247 = vmatprep.subr.bf16.mxu0 0
        %1248 = vmatpush1.bf16.xpose.msra.mxu0 0
        %1249 = vmatprep.subr.bf16.mxu0 0
        %1250 = vmatpush1.bf16.xpose.msra.mxu0 0
        %1251 = vmatprep.subr.bf16.mxu0 0
        %1252 = vmatpush1.bf16.xpose.msra.mxu0 0
        %1253 = vmatprep.subr.bf16.mxu0 0
        %1254 = vmatpush1.bf16.xpose.msra.mxu0 0
        %1255 = vmatprep.subr.bf16.mxu0 0
        %1256 = vmatpush1.bf16.xpose.msra.mxu0 0
        %1257 = vmatprep.subr.bf16.mxu0 0
        %1258 = vmatpush1.bf16.xpose.msra.mxu0 0
        %1259 = vmatprep.subr.bf16.mxu0 0
        %1260 = vmatpush1.bf16.xpose.msra.mxu0 0
        %1261 = vmatprep.subr.bf16.mxu0 0
        %1262 = vmatpush1.bf16.xpose.msra.mxu0 0
        %1263 = vmatprep.subr.bf16.mxu0 0
        %1264 = vmatpush1.bf16.xpose.msra.mxu0 0
        %1265 = vmatprep.subr.bf16.mxu0 0
        %1266 = vmatpush1.bf16.xpose.msra.mxu0 0
        %1267 = vmatprep.subr.bf16.mxu0 0
        %1268 = vmatpush1.bf16.xpose.msra.mxu0 0
        %1269 = vmatprep.subr.bf16.mxu0 0
        %1270 = vmatpush1.bf16.xpose.msra.mxu0 0
        %1271 = vmatprep.subr.bf16.mxu0 0
        %1272 = vmatpush1.bf16.xpose.msra.mxu0 0
        %1273 = vmatprep.mubr.bf16.mxu0 0
        %1274 = vmatmul.mubr.bf16.gmra.mrb[0].mxu0 %v1236
        %v1275 = vpop.f32.mrb[0].mxu0
        %v1276 = vadd.f32 0.0, %v1275
        %v1277 = vpop.f32.mrb[0].mxu0
        %v1278 = vpop.f32.mrb[0].mxu0
        %v1279 = vpop.f32.mrb[0].mxu0
        %1280 = vdwg.mxu0
        %v1282 = vsel %vm1142, %v1137, 0
        %v1285 = vsel %vm1142, %v1141, 0
        %1287 = vmatprep.subr.bf16.mxu0 0
        %1288 = vmatpush1.bf16.xpose.msra.mxu0 %v1285
        %1289 = vmatprep.subr.bf16.mxu0 0
        %1290 = vmatpush1.bf16.xpose.msra.mxu0 0
        %1291 = vmatprep.subr.bf16.mxu0 0
        %1292 = vmatpush1.bf16.xpose.msra.mxu0 0
        %1293 = vmatprep.subr.bf16.mxu0 0
        %1294 = vmatpush1.bf16.xpose.msra.mxu0 0
        %1295 = vmatprep.subr.bf16.mxu0 0
        %1296 = vmatpush1.bf16.xpose.msra.mxu0 0
        %1297 = vmatprep.subr.bf16.mxu0 0
        %1298 = vmatpush1.bf16.xpose.msra.mxu0 0
        %1299 = vmatprep.subr.bf16.mxu0 0
        %1300 = vmatpush1.bf16.xpose.msra.mxu0 0
        %1301 = vmatprep.subr.bf16.mxu0 0
        %1302 = vmatpush1.bf16.xpose.msra.mxu0 0
        %1303 = vmatprep.subr.bf16.mxu0 0
        %1304 = vmatpush1.bf16.xpose.msra.mxu0 0
        %1305 = vmatprep.subr.bf16.mxu0 0
        %1306 = vmatpush1.bf16.xpose.msra.mxu0 0
        %1307 = vmatprep.subr.bf16.mxu0 0
        %1308 = vmatpush1.bf16.xpose.msra.mxu0 0
        %1309 = vmatprep.subr.bf16.mxu0 0
        %1310 = vmatpush1.bf16.xpose.msra.mxu0 0
        %1311 = vmatprep.subr.bf16.mxu0 0
        %1312 = vmatpush1.bf16.xpose.msra.mxu0 0
        %1313 = vmatprep.subr.bf16.mxu0 0
        %1314 = vmatpush1.bf16.xpose.msra.mxu0 0
        %1315 = vmatprep.subr.bf16.mxu0 0
        %1316 = vmatpush1.bf16.xpose.msra.mxu0 0
        %1317 = vmatprep.subr.bf16.mxu0 0
        %1318 = vmatpush1.bf16.xpose.msra.mxu0 0
        %1319 = vmatprep.mubr.bf16.mxu0 0
        %1320 = vmatmul.mubr.bf16.gmra.mrb[0].mxu0 %v1282
        %v1321 = vpop.f32.mrb[0].mxu0
        %v1322 = vadd.f32 0.0, %v1321
        %v1323 = vpop.f32.mrb[0].mxu0
        %v1324 = vpop.f32.mrb[0].mxu0
        %v1325 = vpop.f32.mrb[0].mxu0
        %1326 = vdwg.mxu0
        %v1327 = vsel %vm1142, %v1184, -inf
        %1328 = vmax.xlane.f32.xlu0 %v1327
        %v1329 = vpop.xlane.xlu0 %1328
        %v1330 = vsel %vm1142, %v1230, -inf
        %1331 = vmax.xlane.f32.xlu0 %v1330
        %v1332 = vpop.xlane.xlu0 %1331
        %v1333 = vsel %vm1142, %v1276, -inf
        %1334 = vmax.xlane.f32.xlu0 %v1333
        %v1335 = vpop.xlane.xlu0 %1334
        %v1336 = vsel %vm1142, %v1322, -inf
        %1337 = vmax.xlane.f32.xlu0 %v1336
        %v1338 = vpop.xlane.xlu0 %1337
        %v1339 = vsub.f32 %v1184, %v1329
        %v1340 = vsub.f32 %v1230, %v1332
        %v1341 = vsub.f32 %v1276, %v1335
        %v1342 = vsub.f32 %v1322, %v1338
        %v1343 = vmul.f32 %v1339, 1.442695
        %v1344 = vpow.pop %v1343
        %v1345 = vmul.f32 %v1340, 1.442695
        %v1346 = vpow.pop %v1345
        %v1347 = vmul.f32 %v1341, 1.442695
        %v1348 = vpow.pop %v1347
        %v1349 = vmul.f32 %v1342, 1.442695
        %v1350 = vpow.pop %v1349
        %v1351 = vsel %vm1142, %v1344, 0.0
        %1352 = vadd.xlane.f32.xlu0 %v1351
        %v1353 = vpop.xlane.xlu0 %1352
        %v1354 = vsel %vm1142, %v1346, 0.0
        %1355 = vadd.xlane.f32.xlu0 %v1354
        %v1356 = vpop.xlane.xlu0 %1355
        %v1357 = vsel %vm1142, %v1348, 0.0
        %1358 = vadd.xlane.f32.xlu0 %v1357
        %v1359 = vpop.xlane.xlu0 %1358
        %v1360 = vsel %vm1142, %v1350, 0.0
        %1361 = vadd.xlane.f32.xlu0 %v1360
        %v1362 = vpop.xlane.xlu0 %1361
        %v1363 = vrcp.pop %v1353
        %v1364 = vrcp.pop %v1356
        %v1365 = vrcp.pop %v1359
        %v1366 = vrcp.pop %v1362
        %v1367 = vmul.f32 %v1344, %v1363
        %v1368 = vmul.f32 %v1346, %v1364
        %v1369 = vmul.f32 %v1348, %v1365
        %v1370 = vmul.f32 %v1350, %v1366
        %v1371 = vpack.c.bf16 %v1367, %v1367
        %v1372 = vpack.c.bf16 %v1368, %v1368
        %v1373 = vpack.c.bf16 %v1369, %v1369
        %v1374 = vpack.c.bf16 %v1370, %v1370
        %vm1375 = vcmask 60416
        %1376 = vst.msk [vmem:[%s425] sm:$0xf] %vm1375, %v1371
        %1377 = vst.msk [vmem:[%s425 + $0x4] sm:$0xf] %vm1375, %v1372
        %1378 = vst.msk [vmem:[%s425 + $0x8] sm:$0xf] %vm1375, %v1373
        %1379 = vst.msk [vmem:[%s425 + $0xc] sm:$0xf] %vm1375, %v1374
        %v1380 = vrcp.pop %v1130
        %v1381 = vmul.f32 1.0, %v1380
        %v1382 = vrcp.pop %v1131
        %v1383 = vmul.f32 1.0, %v1382
        %v1384 = vrcp.pop %v1132
        %v1385 = vmul.f32 1.0, %v1384
        %v1386 = vrcp.pop %v1133
        %v1387 = vmul.f32 1.0, %v1386
        %v1388 = vmul.f32 %v1381, 0.3989423
        %v1389 = vmul.f32 %v1383, 0.3989423
        %v1390 = vmul.f32 %v1385, 0.3989423
        %v1391 = vmul.f32 %v1387, 0.3989423
        %v1392 = vld [vmem:[#allocation5] sm:$0xff]
        %v1393 = vmul.f32 %v1381, %v1381
        %v1394 = vmul.f32 %v1383, %v1383
        %v1395 = vmul.f32 %v1385, %v1385
        %v1396 = vmul.f32 %v1387, %v1387
        %1398 = vset.pattern.permute.xlu0 0
        %1399 = vperm.xlu0 %1398, %v1393
        %v1400 = vpop.permute.xlu0 %1399
        %1403 = vset.pattern.permute.xlu0 0
        %1404 = vperm.xlu0 %1403, %v1394
        %v1405 = vpop.permute.xlu0 %1404
        %1408 = vset.pattern.permute.xlu0 0
        %1409 = vperm.xlu0 %1408, %v1395
        %v1410 = vpop.permute.xlu0 %1409
        %1413 = vset.pattern.permute.xlu0 0
        %1414 = vperm.xlu0 %1413, %v1396
        %v1415 = vpop.permute.xlu0 %1414
        %v1417 = vmul.f32 %v1392, %v1400
        %v1418 = vmul.f32 %v1392, %v1405
        %v1419 = vmul.f32 %v1392, %v1410
        %v1420 = vmul.f32 %v1392, %v1415
        %v1421 = vmul.f32 %v1417, 1.442695
        %v1422 = vpow.pop %v1421
        %v1423 = vmul.f32 %v1418, 1.442695
        %v1424 = vpow.pop %v1423
        %v1425 = vmul.f32 %v1419, 1.442695
        %v1426 = vpow.pop %v1425
        %v1427 = vmul.f32 %v1420, 1.442695
        %v1428 = vpow.pop %v1427
        %1430 = vset.pattern.permute.xlu0 0
        %1431 = vperm.xlu0 %1430, %v1388
        %v1432 = vpop.permute.xlu0 %1431
        %1435 = vset.pattern.permute.xlu0 0
        %1436 = vperm.xlu0 %1435, %v1389
        %v1437 = vpop.permute.xlu0 %1436
        %1440 = vset.pattern.permute.xlu0 0
        %1441 = vperm.xlu0 %1440, %v1390
        %v1442 = vpop.permute.xlu0 %1441
        %1445 = vset.pattern.permute.xlu0 0
        %1446 = vperm.xlu0 %1445, %v1391
        %v1447 = vpop.permute.xlu0 %1446
        %v1449 = vmul.f32 %v1432, %v1422
        %v1450 = vmul.f32 %v1437, %v1424
        %v1451 = vmul.f32 %v1442, %v1426
        %v1452 = vmul.f32 %v1447, %v1428
        %v1453 = vpack.c.bf16 %v1449, %v1449
        %v1454 = vpack.c.bf16 %v1450, %v1450
        %v1455 = vpack.c.bf16 %v1451, %v1451
        %v1456 = vpack.c.bf16 %v1452, %v1452
        %1457 = vst.msk [vmem:[%s432] sm:$0xf] %vm1375, %v1453
        %1458 = vst.msk [vmem:[%s432 + $0x4] sm:$0xf] %vm1375, %v1454
        %1459 = vst.msk [vmem:[%s432 + $0x8] sm:$0xf] %vm1375, %v1455
        %1460 = vst.msk [vmem:[%s432 + $0xc] sm:$0xf] %vm1375, %v1456
        %v1461 = vpack.c.bf16 %v998, %v998
        %v1462 = vpack.c.bf16 %v999, %v999
        %v1463 = vpack.c.bf16 %v1000, %v1000
        %v1464 = vpack.c.bf16 %v1001, %v1001
        %v1466 = vsel %vm1142, %v1371, 0
        %vm1468 = vcmask 1043456
        %v1470 = vsel %vm1468, %v1461, 0
        %1472 = vmatprep.subr.bf16.mxu0 0
        %1473 = vmatpush1.bf16.msra.mxu0 %v1470
        %1474 = vmatprep.subr.bf16.mxu0 0
        %1475 = vmatpush1.bf16.msra.mxu0 0
        %1476 = vmatprep.subr.bf16.mxu0 0
        %1477 = vmatpush1.bf16.msra.mxu0 0
        %1478 = vmatprep.subr.bf16.mxu0 0
        %1479 = vmatpush1.bf16.msra.mxu0 0
        %1480 = vmatprep.subr.bf16.mxu0 0
        %1481 = vmatpush1.bf16.msra.mxu0 0
        %1482 = vmatprep.subr.bf16.mxu0 0
        %1483 = vmatpush1.bf16.msra.mxu0 0
        %1484 = vmatprep.subr.bf16.mxu0 0
        %1485 = vmatpush1.bf16.msra.mxu0 0
        %1486 = vmatprep.subr.bf16.mxu0 0
        %1487 = vmatpush1.bf16.msra.mxu0 0
        %1488 = vmatprep.subr.bf16.mxu0 0
        %1489 = vmatpush1.bf16.msra.mxu0 0
        %1490 = vmatprep.subr.bf16.mxu0 0
        %1491 = vmatpush1.bf16.msra.mxu0 0
        %1492 = vmatprep.subr.bf16.mxu0 0
        %1493 = vmatpush1.bf16.msra.mxu0 0
        %1494 = vmatprep.subr.bf16.mxu0 0
        %1495 = vmatpush1.bf16.msra.mxu0 0
        %1496 = vmatprep.subr.bf16.mxu0 0
        %1497 = vmatpush1.bf16.msra.mxu0 0
        %1498 = vmatprep.subr.bf16.mxu0 0
        %1499 = vmatpush1.bf16.msra.mxu0 0
        %1500 = vmatprep.subr.bf16.mxu0 0
        %1501 = vmatpush1.bf16.msra.mxu0 0
        %1502 = vmatprep.subr.bf16.mxu0 0
        %1503 = vmatpush1.bf16.msra.mxu0 0
        %1504 = vmatprep.mubr.bf16.mxu0 0
        %1505 = vmatmul.mubr.bf16.gmra.mrb[0].mxu0 %v1466
        %v1506 = vpop.f32.mrb[0].mxu0
        %v1507 = vadd.f32 0.0, %v1506
        %v1508 = vpop.f32.mrb[0].mxu0
        %v1509 = vpop.f32.mrb[0].mxu0
        %v1510 = vpop.f32.mrb[0].mxu0
        %1511 = vdwg.mxu0
        %v1513 = vsel %vm1142, %v1372, 0
        %v1516 = vsel %vm1468, %v1462, 0
        %1518 = vmatprep.subr.bf16.mxu0 0
        %1519 = vmatpush1.bf16.msra.mxu0 %v1516
        %1520 = vmatprep.subr.bf16.mxu0 0
        %1521 = vmatpush1.bf16.msra.mxu0 0
        %1522 = vmatprep.subr.bf16.mxu0 0
        %1523 = vmatpush1.bf16.msra.mxu0 0
        %1524 = vmatprep.subr.bf16.mxu0 0
        %1525 = vmatpush1.bf16.msra.mxu0 0
        %1526 = vmatprep.subr.bf16.mxu0 0
        %1527 = vmatpush1.bf16.msra.mxu0 0
        %1528 = vmatprep.subr.bf16.mxu0 0
        %1529 = vmatpush1.bf16.msra.mxu0 0
        %1530 = vmatprep.subr.bf16.mxu0 0
        %1531 = vmatpush1.bf16.msra.mxu0 0
        %1532 = vmatprep.subr.bf16.mxu0 0
        %1533 = vmatpush1.bf16.msra.mxu0 0
        %1534 = vmatprep.subr.bf16.mxu0 0
        %1535 = vmatpush1.bf16.msra.mxu0 0
        %1536 = vmatprep.subr.bf16.mxu0 0
        %1537 = vmatpush1.bf16.msra.mxu0 0
        %1538 = vmatprep.subr.bf16.mxu0 0
        %1539 = vmatpush1.bf16.msra.mxu0 0
        %1540 = vmatprep.subr.bf16.mxu0 0
        %1541 = vmatpush1.bf16.msra.mxu0 0
        %1542 = vmatprep.subr.bf16.mxu0 0
        %1543 = vmatpush1.bf16.msra.mxu0 0
        %1544 = vmatprep.subr.bf16.mxu0 0
        %1545 = vmatpush1.bf16.msra.mxu0 0
        %1546 = vmatprep.subr.bf16.mxu0 0
        %1547 = vmatpush1.bf16.msra.mxu0 0
        %1548 = vmatprep.subr.bf16.mxu0 0
        %1549 = vmatpush1.bf16.msra.mxu0 0
        %1550 = vmatprep.mubr.bf16.mxu0 0
        %1551 = vmatmul.mubr.bf16.gmra.mrb[0].mxu0 %v1513
        %v1552 = vpop.f32.mrb[0].mxu0
        %v1553 = vadd.f32 0.0, %v1552
        %v1554 = vpop.f32.mrb[0].mxu0
        %v1555 = vpop.f32.mrb[0].mxu0
        %v1556 = vpop.f32.mrb[0].mxu0
        %1557 = vdwg.mxu0
        %v1559 = vsel %vm1142, %v1373, 0
        %v1562 = vsel %vm1468, %v1463, 0
        %1564 = vmatprep.subr.bf16.mxu0 0
        %1565 = vmatpush1.bf16.msra.mxu0 %v1562
        %1566 = vmatprep.subr.bf16.mxu0 0
        %1567 = vmatpush1.bf16.msra.mxu0 0
        %1568 = vmatprep.subr.bf16.mxu0 0
        %1569 = vmatpush1.bf16.msra.mxu0 0
        %1570 = vmatprep.subr.bf16.mxu0 0
        %1571 = vmatpush1.bf16.msra.mxu0 0
        %1572 = vmatprep.subr.bf16.mxu0 0
        %1573 = vmatpush1.bf16.msra.mxu0 0
        %1574 = vmatprep.subr.bf16.mxu0 0
        %1575 = vmatpush1.bf16.msra.mxu0 0
        %1576 = vmatprep.subr.bf16.mxu0 0
        %1577 = vmatpush1.bf16.msra.mxu0 0
        %1578 = vmatprep.subr.bf16.mxu0 0
        %1579 = vmatpush1.bf16.msra.mxu0 0
        %1580 = vmatprep.subr.bf16.mxu0 0
        %1581 = vmatpush1.bf16.msra.mxu0 0
        %1582 = vmatprep.subr.bf16.mxu0 0
        %1583 = vmatpush1.bf16.msra.mxu0 0
        %1584 = vmatprep.subr.bf16.mxu0 0
        %1585 = vmatpush1.bf16.msra.mxu0 0
        %1586 = vmatprep.subr.bf16.mxu0 0
        %1587 = vmatpush1.bf16.msra.mxu0 0
        %1588 = vmatprep.subr.bf16.mxu0 0
        %1589 = vmatpush1.bf16.msra.mxu0 0
        %1590 = vmatprep.subr.bf16.mxu0 0
        %1591 = vmatpush1.bf16.msra.mxu0 0
        %1592 = vmatprep.subr.bf16.mxu0 0
        %1593 = vmatpush1.bf16.msra.mxu0 0
        %1594 = vmatprep.subr.bf16.mxu0 0
        %1595 = vmatpush1.bf16.msra.mxu0 0
        %1596 = vmatprep.mubr.bf16.mxu0 0
        %1597 = vmatmul.mubr.bf16.gmra.mrb[0].mxu0 %v1559
        %v1598 = vpop.f32.mrb[0].mxu0
        %v1599 = vadd.f32 0.0, %v1598
        %v1600 = vpop.f32.mrb[0].mxu0
        %v1601 = vpop.f32.mrb[0].mxu0
        %v1602 = vpop.f32.mrb[0].mxu0
        %1603 = vdwg.mxu0
        %v1605 = vsel %vm1142, %v1374, 0
        %v1608 = vsel %vm1468, %v1464, 0
        %1610 = vmatprep.subr.bf16.mxu0 0
        %1611 = vmatpush1.bf16.msra.mxu0 %v1608
        %1612 = vmatprep.subr.bf16.mxu0 0
        %1613 = vmatpush1.bf16.msra.mxu0 0
        %1614 = vmatprep.subr.bf16.mxu0 0
        %1615 = vmatpush1.bf16.msra.mxu0 0
        %1616 = vmatprep.subr.bf16.mxu0 0
        %1617 = vmatpush1.bf16.msra.mxu0 0
        %1618 = vmatprep.subr.bf16.mxu0 0
        %1619 = vmatpush1.bf16.msra.mxu0 0
        %1620 = vmatprep.subr.bf16.mxu0 0
        %1621 = vmatpush1.bf16.msra.mxu0 0
        %1622 = vmatprep.subr.bf16.mxu0 0
        %1623 = vmatpush1.bf16.msra.mxu0 0
        %1624 = vmatprep.subr.bf16.mxu0 0
        %1625 = vmatpush1.bf16.msra.mxu0 0
        %1626 = vmatprep.subr.bf16.mxu0 0
        %1627 = vmatpush1.bf16.msra.mxu0 0
        %1628 = vmatprep.subr.bf16.mxu0 0
        %1629 = vmatpush1.bf16.msra.mxu0 0
        %1630 = vmatprep.subr.bf16.mxu0 0
        %1631 = vmatpush1.bf16.msra.mxu0 0
        %1632 = vmatprep.subr.bf16.mxu0 0
        %1633 = vmatpush1.bf16.msra.mxu0 0
        %1634 = vmatprep.subr.bf16.mxu0 0
        %1635 = vmatpush1.bf16.msra.mxu0 0
        %1636 = vmatprep.subr.bf16.mxu0 0
        %1637 = vmatpush1.bf16.msra.mxu0 0
        %1638 = vmatprep.subr.bf16.mxu0 0
        %1639 = vmatpush1.bf16.msra.mxu0 0
        %1640 = vmatprep.subr.bf16.mxu0 0
        %1641 = vmatpush1.bf16.msra.mxu0 0
        %1642 = vmatprep.mubr.bf16.mxu0 0
        %1643 = vmatmul.mubr.bf16.gmra.mrb[0].mxu0 %v1605
        %v1644 = vpop.f32.mrb[0].mxu0
        %v1645 = vadd.f32 0.0, %v1644
        %v1646 = vpop.f32.mrb[0].mxu0
        %v1647 = vpop.f32.mrb[0].mxu0
        %v1648 = vpop.f32.mrb[0].mxu0
        %1649 = vdwg.mxu0
        %v1650 = vcombine.low %v1507, %v1599
        %v1651 = vcombine.high %v1507, %v1599
        %v1653 = vunpack.c.l.s4 1983009808
        %v1654 = vunpack.c.0.s8 %v1653
        %v1655 = vlaneseq
        %v1656 = vshrl.u32 %v1655, 7
        %v1657 = vsub.s32 %v1654, %v1656
        %v1658 = vrot.slane %v1650, %v1657
        %v1660 = vunpack.c.l.s4 1983009808
        %v1661 = vunpack.c.0.s8 %v1660
        %v1662 = vlaneseq
        %v1663 = vshrl.u32 %v1662, 7
        %v1664 = vsub.s32 %v1661, %v1663
        %v1665 = vrot.slane %v1651, %v1664
        %v1666 = vcombine.low %v1553, %v1645
        %v1667 = vcombine.high %v1553, %v1645
        %v1669 = vunpack.c.l.s4 1983009808
        %v1670 = vunpack.c.0.s8 %v1669
        %v1671 = vlaneseq
        %v1672 = vshrl.u32 %v1671, 7
        %v1673 = vsub.s32 %v1670, %v1672
        %v1674 = vrot.slane %v1666, %v1673
        %v1676 = vunpack.c.l.s4 1983009808
        %v1677 = vunpack.c.0.s8 %v1676
        %v1678 = vlaneseq
        %v1679 = vshrl.u32 %v1678, 7
        %v1680 = vsub.s32 %v1677, %v1679
        %v1681 = vrot.slane %v1667, %v1680
        %v1682 = vcombine.low %v1658, %v1674
        %v1683 = vcombine.high %v1658, %v1674
        %v1685 = vunpack.c.l.s4 1934713408
        %v1686 = vunpack.c.0.s8 %v1685
        %v1687 = vlaneseq
        %v1688 = vshrl.u32 %v1687, 7
        %v1689 = vsub.s32 %v1686, %v1688
        %v1690 = vrot.slane %v1682, %v1689
        %v1692 = vunpack.c.l.s4 1934713408
        %v1693 = vunpack.c.0.s8 %v1692
        %v1694 = vlaneseq
        %v1695 = vshrl.u32 %v1694, 7
        %v1696 = vsub.s32 %v1693, %v1695
        %v1697 = vrot.slane %v1683, %v1696
        %v1698 = vcombine.low %v1665, %v1681
        %v1699 = vcombine.high %v1665, %v1681
        %v1701 = vunpack.c.l.s4 1934713408
        %v1702 = vunpack.c.0.s8 %v1701
        %v1703 = vlaneseq
        %v1704 = vshrl.u32 %v1703, 7
        %v1705 = vsub.s32 %v1702, %v1704
        %v1706 = vrot.slane %v1698, %v1705
        %v1708 = vunpack.c.l.s4 1934713408
        %v1709 = vunpack.c.0.s8 %v1708
        %v1710 = vlaneseq
        %v1711 = vshrl.u32 %v1710, 7
        %v1712 = vsub.s32 %v1709, %v1711
        %v1713 = vrot.slane %v1699, %v1712
        %v1714 = vcombine.high %v1690, 0.0
        %v1715 = vcombine.high %v1697, 0.0
        %v1716 = vcombine.high %v1706, 0.0
        %v1717 = vcombine.high %v1713, 0.0
        %v1718 = vcombine.low %v1690, %v1697
        %v1720 = vunpack.c.l.s4 1983009808
        %v1721 = vunpack.c.0.s8 %v1720
        %v1722 = vlaneseq
        %v1723 = vshrl.u32 %v1722, 7
        %v1724 = vsub.s32 %v1721, %v1723
        %v1725 = vrot.slane %v1718, %v1724
        %v1726 = vcombine.low %v1714, %v1715
        %v1728 = vunpack.c.l.s4 1983009808
        %v1729 = vunpack.c.0.s8 %v1728
        %v1730 = vlaneseq
        %v1731 = vshrl.u32 %v1730, 7
        %v1732 = vsub.s32 %v1729, %v1731
        %v1733 = vrot.slane %v1726, %v1732
        %v1734 = vcombine.low %v1706, %v1713
        %v1736 = vunpack.c.l.s4 1983009808
        %v1737 = vunpack.c.0.s8 %v1736
        %v1738 = vlaneseq
        %v1739 = vshrl.u32 %v1738, 7
        %v1740 = vsub.s32 %v1737, %v1739
        %v1741 = vrot.slane %v1734, %v1740
        %v1742 = vcombine.low %v1716, %v1717
        %v1744 = vunpack.c.l.s4 1983009808
        %v1745 = vunpack.c.0.s8 %v1744
        %v1746 = vlaneseq
        %v1747 = vshrl.u32 %v1746, 7
        %v1748 = vsub.s32 %v1745, %v1747
        %v1749 = vrot.slane %v1742, %v1748
        %v1750 = vcombine.low %v1725, %v1733
        %v1751 = vcombine.high %v1725, %v1733
        %v1753 = vunpack.c.l.s4 1934713408
        %v1754 = vunpack.c.0.s8 %v1753
        %v1755 = vlaneseq
        %v1756 = vshrl.u32 %v1755, 7
        %v1757 = vsub.s32 %v1754, %v1756
        %v1758 = vrot.slane %v1750, %v1757
        %v1760 = vunpack.c.l.s4 1934713408
        %v1761 = vunpack.c.0.s8 %v1760
        %v1762 = vlaneseq
        %v1763 = vshrl.u32 %v1762, 7
        %v1764 = vsub.s32 %v1761, %v1763
        %v1765 = vrot.slane %v1751, %v1764
        %v1766 = vcombine.low %v1741, %v1749
        %v1767 = vcombine.high %v1741, %v1749
        %v1769 = vunpack.c.l.s4 1934713408
        %v1770 = vunpack.c.0.s8 %v1769
        %v1771 = vlaneseq
        %v1772 = vshrl.u32 %v1771, 7
        %v1773 = vsub.s32 %v1770, %v1772
        %v1774 = vrot.slane %v1766, %v1773
        %v1776 = vunpack.c.l.s4 1934713408
        %v1777 = vunpack.c.0.s8 %v1776
        %v1778 = vlaneseq
        %v1779 = vshrl.u32 %v1778, 7
        %v1780 = vsub.s32 %v1777, %v1779
        %v1781 = vrot.slane %v1767, %v1780
        %v1782 = vcombine.low %v1758, %v1774
        %v1783 = vcombine.high %v1758, %v1774
        %v1784 = vcombine.low %v1765, %v1781
        %v1785 = vcombine.high %v1765, %v1781
        %1787 = vrot.lane.b32.xlu0 %v1783, 8
        %v1788 = vpop.permute.xlu0 %1787
        %1791 = vrot.lane.b32.xlu0 %v1784, 16
        %v1792 = vpop.permute.xlu0 %1791
        %1795 = vrot.lane.b32.xlu0 %v1785, 24
        %v1796 = vpop.permute.xlu0 %1795
        %v1798 = vsel %vm1142, %v1782, %v1788
        %vm1799 = vcmask 130048
        %v1800 = vsel %vm1799, %v1798, %v1792
        %vm1801 = vcmask 195584
        %v1802 = vsel %vm1801, %v1800, %v1796
        %v1803 = vld [vmem:[%s5] sm:$0xff]
        %v1804 = vld [vmem:[%s5 + $0x8] sm:$0xff]
        %v1805 = vld [vmem:[%s5 + $0x10] sm:$0xff]
        %v1806 = vld [vmem:[%s5 + $0x18] sm:$0xff]
        %v1807 = vld [vmem:[%s6] sm:$0x1]
        %v1809 = vlaneseq
        %v1810 = vshrl.u32 %v1809, 7
        %v1811 = vsub.s32 0, %v1810
        %v1812 = vrot.slane %v1807, %v1811
        %v1815 = vsel %vm462, %v1802, 0
        %1817 = vmatprep.subr.mxu0 0.0
        %1818 = vmatpush1.msra.mxu0 %v1803
        %1819 = vmatprep.subr.mxu0 0.0
        %1820 = vmatpush1.msra.mxu0 %v1804
        %1821 = vmatprep.subr.mxu0 0.0
        %1822 = vmatpush1.msra.mxu0 %v1805
        %1823 = vmatprep.subr.mxu0 0.0
        %1824 = vmatpush1.msra.mxu0 %v1806
        %1825 = vmatprep.subr.mxu0 0.0
        %1826 = vmatpush1.msra.mxu0 0.0
        %1827 = vmatprep.subr.mxu0 0.0
        %1828 = vmatpush1.msra.mxu0 0.0
        %1829 = vmatprep.subr.mxu0 0.0
        %1830 = vmatpush1.msra.mxu0 0.0
        %1831 = vmatprep.subr.mxu0 0.0
        %1832 = vmatpush1.msra.mxu0 0.0
        %1833 = vmatprep.subr.mxu0 0.0
        %1834 = vmatpush1.msra.mxu0 0.0
        %1835 = vmatprep.subr.mxu0 0.0
        %1836 = vmatpush1.msra.mxu0 0.0
        %1837 = vmatprep.subr.mxu0 0.0
        %1838 = vmatpush1.msra.mxu0 0.0
        %1839 = vmatprep.subr.mxu0 0.0
        %1840 = vmatpush1.msra.mxu0 0.0
        %1841 = vmatprep.subr.mxu0 0.0
        %1842 = vmatpush1.msra.mxu0 0.0
        %1843 = vmatprep.subr.mxu0 0.0
        %1844 = vmatpush1.msra.mxu0 0.0
        %1845 = vmatprep.subr.mxu0 0.0
        %1846 = vmatpush1.msra.mxu0 0.0
        %1847 = vmatprep.subr.mxu0 0.0
        %1848 = vmatpush1.msra.mxu0 0.0
        %1849 = vmatprep.subr.mxu0 0.0
        %1850 = vmatpush1.msra.mxu0 0.0
        %1851 = vmatprep.subr.mxu0 0.0
        %1852 = vmatpush1.msra.mxu0 0.0
        %1853 = vmatprep.subr.mxu0 0.0
        %1854 = vmatpush1.msra.mxu0 0.0
        %1855 = vmatprep.subr.mxu0 0.0
        %1856 = vmatpush1.msra.mxu0 0.0
        %1857 = vmatprep.subr.mxu0 0.0
        %1858 = vmatpush1.msra.mxu0 0.0
        %1859 = vmatprep.subr.mxu0 0.0
        %1860 = vmatpush1.msra.mxu0 0.0
        %1861 = vmatprep.subr.mxu0 0.0
        %1862 = vmatpush1.msra.mxu0 0.0
        %1863 = vmatprep.subr.mxu0 0.0
        %1864 = vmatpush1.msra.mxu0 0.0
        %1865 = vmatprep.subr.mxu0 0.0
        %1866 = vmatpush1.msra.mxu0 0.0
        %1867 = vmatprep.subr.mxu0 0.0
        %1868 = vmatpush1.msra.mxu0 0.0
        %1869 = vmatprep.subr.mxu0 0.0
        %1870 = vmatpush1.msra.mxu0 0.0
        %1871 = vmatprep.subr.mxu0 0.0
        %1872 = vmatpush1.msra.mxu0 0.0
        %1873 = vmatprep.subr.mxu0 0.0
        %1874 = vmatpush1.msra.mxu0 0.0
        %1875 = vmatprep.subr.mxu0 0.0
        %1876 = vmatpush1.msra.mxu0 0.0
        %1877 = vmatprep.subr.mxu0 0.0
        %1878 = vmatpush1.msra.mxu0 0.0
        %1879 = vmatprep.subr.mxu0 0.0
        %1880 = vmatpush1.msra.mxu0 0.0
        %1881 = vmatprep.mubr.f32.mxu0 0.0
        %1882 = vmatmul.mubr.f32.gmra.mrb[0].mxu0 %v1815
        %v1883 = vpop.f32.mrb[0].mxu0
        %v1884 = vadd.f32 %v1812, %v1883
        %v1885 = vpop.f32.mrb[0].mxu0
        %1886 = vdwg.mxu0
        %1887 = vst.msk [vmem:[%s418] sm:$0xff] %vm462, %v1884
        %s1888 = sand.u32 %s197, 1
        %s1889 = scalar_lea.sflag [#allocation4], %s1888
        %s1890 = sand.u32 %s197, 1
        %s1891 = smul.addr %s1890, 8
        %s1892 = scalar_lea.vmem [#allocation8], %s1891
        %s1893 = sand.u32 %s32, 1
        %s1894 = scalar_lea.sflag [#allocation10], %s1893
        %s1895 = sand.u32 %s223, 1
        %s1896 = smul.addr %s1895, 16
        %s1897 = scalar_lea.vmem [#allocation9], %s1896
        %s1898 = sand.u32 %s32, 1
        %s1899 = scalar_lea.sflag [#allocation10], %s1898
        %s1900 = sand.u32 %s249, 1
        %s1901 = smul.addr %s1900, 16
        %s1902 = scalar_lea.vmem [#allocation11], %s1901
        %p1903 = scmp.lt.s32.totalorder %s32, 1
        %s1904 = scalar_select %p1903, %s32, 1
        %s1905 = smul.addr %s1904, 8
        %s1906 = scalar_lea.vmem %s10, %s1905
        // Predicated region
        $region61: #{tpu_custom_call.1} parent=47 // pred_check
          %p1907 = pneg %p207
        $region62: #{tpu_custom_call.1} parent=47 // pred_check_branch
          %1909 = sbr.rel (%p1907) target = $region64
        $region63: #{tpu_custom_call.1} parent=47 // pred_region
          %s1911 = ssub.s32 128, 128
          %1912 = vsyncadd %s1889, %s1911
          %s1913 = smul.addr %s32, 128
          %s1914 = scalar_lea.hbm %s7, %s1913
          %s1916 = sshll.u32 %s1892, 4
          %s1917 = int_to_ptr.vmem [resolvable:$true] %s1916
          %1919 = dma.vmem_to_hbm [thread:$0]  %s1917, 128, %s1914, %s1889
        $region64: #{tpu_custom_call.1} parent=47 // pred_fallthru
          _
        // Predicated region
        $region65: #{tpu_custom_call.1} parent=47 // pred_check
          %p1920 = pneg %p233
        $region66: #{tpu_custom_call.1} parent=47 // pred_check_branch
          %1922 = sbr.rel (%p1920) target = $region68
        $region67: #{tpu_custom_call.1} parent=47 // pred_region
          %s1923 = smul.u32 4, %s32
          %s1925 = ssub.s32 256, 256
          %1926 = vsyncadd %s1894, %s1925
          %s1927 = smul.addr %s1923, 64
          %s1928 = scalar_lea.hbm %s8, %s1927
          %s1929 = sshll.u32 %s1897, 4
          %s1930 = int_to_ptr.vmem [resolvable:$true] %s1929
          %1935 = dma.vmem_to_hbm [thread:$0]  %s1930, 256, %s1928, %s1894, 64, 64, 4
        $region68: #{tpu_custom_call.1} parent=47 // pred_fallthru
          _
        // Predicated region
        $region69: #{tpu_custom_call.1} parent=47 // pred_check
          %p1936 = pneg %p259
        $region70: #{tpu_custom_call.1} parent=47 // pred_check_branch
          %1938 = sbr.rel (%p1936) target = $region72
        $region71: #{tpu_custom_call.1} parent=47 // pred_region
          %s1939 = smul.u32 4, %s32
          %s1941 = ssub.s32 256, 256
          %1942 = vsyncadd %s1899, %s1941
          %s1943 = smul.addr %s1939, 64
          %s1944 = scalar_lea.hbm %s9, %s1943
          %s1945 = sshll.u32 %s1902, 4
          %s1946 = int_to_ptr.vmem [resolvable:$true] %s1945
          %1951 = dma.vmem_to_hbm [thread:$0]  %s1946, 256, %s1944, %s1899, 64, 64, 4
        $region72: #{tpu_custom_call.1} parent=47 // pred_fallthru
          _
        // Predicated region
        $region73: #{tpu_custom_call.1} parent=47 // pred_check
          %p1952 = pneg %p285
        $region74: #{tpu_custom_call.1} parent=47 // pred_check_branch
          %1954 = sbr.rel (%p1952) target = $region76
        $region75: #{tpu_custom_call.1} parent=47 // pred_region
          _
        $region76: #{tpu_custom_call.1} parent=47 // pred_fallthru
          _
      $region48: #{tpu_custom_call.1} parent=5 // pred_fallthru
        _
      %p1955 = scmp.le.s32.totalorder 2, %s27
      // Predicated region
      $region77: #{tpu_custom_call.1} parent=5 // pred_check
        %p1956 = pneg %p1955
      $region78: #{tpu_custom_call.1} parent=5 // pred_check_branch
        %1958 = sbr.rel (%p1956) target = $region80
      $region79: #{tpu_custom_call.1} parent=5 // pred_region
        %s1959 = ssub.s32 %s27, 2
        // Predicated region
        $region81: #{tpu_custom_call.1} parent=79 // pred_check
          %p1960 = pneg %p213
        $region82: #{tpu_custom_call.1} parent=79 // pred_check_branch
          %1962 = sbr.rel (%p1960) target = $region84
        $region83: #{tpu_custom_call.1} parent=79 // pred_region
          %s1963 = sand.u32 %s198, 1
          %s1964 = scalar_lea.sflag [#allocation4], %s1963
          %s1965 = sand.u32 %s198, 1
          %s1966 = smul.addr %s1965, 8
          %s1967 = scalar_lea.vmem [#allocation8], %s1966
          %1968 = dma.done %s1964, 128
        $region84: #{tpu_custom_call.1} parent=79 // pred_fallthru
          _
        // Predicated region
        $region85: #{tpu_custom_call.1} parent=79 // pred_check
          %p1969 = pneg %p239
        $region86: #{tpu_custom_call.1} parent=79 // pred_check_branch
          %1971 = sbr.rel (%p1969) target = $region88
        $region87: #{tpu_custom_call.1} parent=79 // pred_region
          %s1972 = sand.u32 %s33, 1
          %s1973 = scalar_lea.sflag [#allocation10], %s1972
          %s1974 = sand.u32 %s224, 1
          %s1975 = smul.addr %s1974, 16
          %s1976 = scalar_lea.vmem [#allocation9], %s1975
          %1977 = dma.done %s1973, 256
        $region88: #{tpu_custom_call.1} parent=79 // pred_fallthru
          _
        // Predicated region
        $region89: #{tpu_custom_call.1} parent=79 // pred_check
          %p1978 = pneg %p265
        $region90: #{tpu_custom_call.1} parent=79 // pred_check_branch
          %1980 = sbr.rel (%p1978) target = $region92
        $region91: #{tpu_custom_call.1} parent=79 // pred_region
          %s1981 = sand.u32 %s33, 1
          %s1982 = scalar_lea.sflag [#allocation10], %s1981
          %s1983 = sand.u32 %s250, 1
          %s1984 = smul.addr %s1983, 16
          %s1985 = scalar_lea.vmem [#allocation11], %s1984
          %1986 = dma.done %s1982, 256
        $region92: #{tpu_custom_call.1} parent=79 // pred_fallthru
          _
        // Predicated region
        $region93: #{tpu_custom_call.1} parent=79 // pred_check
          %p1987 = pneg %p291
        $region94: #{tpu_custom_call.1} parent=79 // pred_check_branch
          %1989 = sbr.rel (%p1987) target = $region96
        $region95: #{tpu_custom_call.1} parent=79 // pred_region
          %p1990 = scmp.lt.s32.totalorder %s33, 1
          %s1991 = scalar_select %p1990, %s33, 1
          %s1992 = smul.addr %s1991, 8
          %s1993 = scalar_lea.vmem %s10, %s1992
        $region96: #{tpu_custom_call.1} parent=79 // pred_fallthru
          _
      $region80: #{tpu_custom_call.1} parent=5 // pred_fallthru
        _
    $region6: #{tpu_custom_call.1} parent=1 // loop_footer
      %s31 = sadd.s32 1, %s27
    $region7: #{tpu_custom_call.1} parent=1 // loop_footer_branch
      %26 = sbr.rel target = $region3
    $region8: #{tpu_custom_call.1} parent=1 // loop_exit
      _
    %1994 = vsyncpa [#allocation3], 1
    %s1995 = scalar_lea.sflag [#allocation3], 1
    %1996 = vsyncpa %s1995, 1
    %1997 = vsyncpa [#allocation6], 1
    %1998 = vsyncpa [#allocation4], 1
    %s1999 = scalar_lea.sflag [#allocation4], 1
    %2000 = vsyncpa %s1999, 1
    %2001 = vsyncpa [#allocation10], 1
    %s2002 = scalar_lea.sflag [#allocation10], 1
    %2003 = vsyncpa %s2002, 1

// kernel: tpu_custom_call.1
$region0: #{tpu_custom_call.1}
  #allocation0 [shape = 'u32[]', space=smem, size = 0x4, offset = 0x4, fixed_abs, tag = 'smem constant byte address 0x4 - core index']
  #allocation1 [shape = 'u32[144,128]{1,0:T(1,128)}', space=vmem, size = 0x12000, scoped, tag = 'internal scratch']
  %s0 = inlined_call_operand.hbm [shape: f32[16,32], index: 0, kind: input, shape index: {}]
  %s1 = inlined_call_operand.vmem [shape: f32[16,1], index: 1, kind: input, shape index: {}]
  %s2 = inlined_call_operand.hbm [shape: f32[8,8], index: 2, kind: input, shape index: {}]
  %s3 = inlined_call_operand.hbm [shape: f32[32,100], index: 3, kind: input, shape index: {}]
  %s4 = inlined_call_operand.vmem [shape: f32[1,100], index: 4, kind: input, shape index: {}]
  %s5 = inlined_call_operand.vmem [shape: f32[32,32], index: 5, kind: input, shape index: {}]
  %s6 = inlined_call_operand.vmem [shape: f32[1,32], index: 6, kind: input, shape index: {}]
  %s7 = inlined_call_operand.hbm [shape: f32[16,32], index: 7, kind: output, shape index: {0}]
  %s8 = inlined_call_operand.hbm [shape: bf16[8,8,8], index: 8, kind: output, shape index: {1}]
  %s9 = inlined_call_operand.hbm [shape: bf16[8,8,8], index: 9, kind: output, shape index: {2}]
  %s10 = inlined_call_operand.vmem [shape: f32[16,4], index: 10, kind: output, shape index: {3}]
  %11 = xla_tuple %s7, %s8, %s9, %s10
  %s12 = sld [smem:[#allocation0]]
  $region97: #{tpu_custom_call.1} parent=0
    _
  %s14 = ssub.s32 1, %s12
  %s15 = scalar_select 0, %s14, %s12
  $region1: #{tpu_custom_call.1} parent=0
    #allocation2 [shape = 'u8[8192]{0}', space=vmem, size = 0x2000, scoped, tag = 'input window, operand 0']
    #allocation3 [shape = 's32[2]{0}', space=sflag, size = 0x8, scoped, tag = 'scoped memory for tpu_custom_call.1']
    #allocation4 [shape = 's32[2]{0}', space=sflag, size = 0x8, scoped, tag = 'scoped memory for tpu_custom_call.1']
    #allocation5 [shape = 'u8[4096]{0}', space=vmem, size = 0x1000, scoped, tag = 'input window, operand 2, single buffered']
    #allocation6 [shape = 's32[1]{0}', space=sflag, size = 0x4, scoped, tag = 'scoped memory for tpu_custom_call.1']
    #allocation7 [shape = 'u8[16384]{0}', space=vmem, size = 0x4000, scoped, tag = 'input window, operand 3, single buffered']
    #allocation8 [shape = 'u8[8192]{0}', space=vmem, size = 0x2000, scoped, tag = 'output window, operand 0']
    #allocation9 [shape = 'u8[16384]{0}', space=vmem, size = 0x4000, scoped, tag = 'output window, operand 1']
    #allocation10 [shape = 's32[2]{0}', space=sflag, size = 0x8, scoped, tag = 'scoped memory for tpu_custom_call.1']
    #allocation11 [shape = 'u8[16384]{0}', space=vmem, size = 0x4000, scoped, tag = 'output window, operand 2']
    %16 = vsyncpa [#allocation3], 0
    %s17 = scalar_lea.sflag [#allocation3], 1
    %18 = vsyncpa %s17, 0
    %19 = vsyncpa [#allocation6], 0
    %20 = vsyncpa [#allocation4], 0
    %s21 = scalar_lea.sflag [#allocation4], 1
    %22 = vsyncpa %s21, 0
    %23 = vsyncpa [#allocation10], 0
    %s24 = scalar_lea.sflag [#allocation10], 1
    %25 = vsyncpa %s24, 0
    loop: start=0, step=1, limit=4
    $region2: #{tpu_custom_call.1} parent=1 // loop_pre_header
      _
    $region3: #{tpu_custom_call.1} parent=1 // loop_header
      %s27 = sphi 0, %s31
      %p28 = scmp.ge.s32.totalorder %s27, 4
      %s37 = sphi 0, %s39
      %s40 = sphi 0, %s37
      %s41 = sphi 0, %s40
      %s57 = sphi 0, %s41
      %s63 = sphi 0, %s65
      %s66 = sphi 0, %s63
      %s67 = sphi 0, %s66
      %s83 = sphi 0, %s67
      %s87 = sphi 0, %s87
      %s89 = sphi 0, %s87
      %s90 = sphi 0, %s89
      %s104 = sphi 0, %s90
      %s108 = sphi 0, %s108
      %s110 = sphi 0, %s108
      %s111 = sphi 0, %s110
      %s125 = sphi 0, %s111
      %s129 = sphi 0, %s129
      %s131 = sphi 0, %s129
      %s132 = sphi 0, %s131
      %s146 = sphi 0, %s132
      %s150 = sphi 0, %s150
      %s152 = sphi 0, %s150
      %s153 = sphi 0, %s152
      %s167 = sphi 0, %s153
      %s171 = sphi 0, %s171
      %s173 = sphi 0, %s171
      %s174 = sphi 0, %s173
      %s188 = sphi 0, %s174
      %s194 = sphi 0, %s196
      %s197 = sphi 0, %s194
      %s198 = sphi 0, %s197
      %s214 = sphi 0, %s198
      %s220 = sphi 0, %s222
      %s223 = sphi 0, %s220
      %s224 = sphi 0, %s223
      %s240 = sphi 0, %s224
      %s246 = sphi 0, %s248
      %s249 = sphi 0, %s246
      %s250 = sphi 0, %s249
      %s266 = sphi 0, %s250
      %s272 = sphi 0, %s274
      %s275 = sphi 0, %s272
      %s276 = sphi 0, %s275
      %s292 = sphi 0, %s276
    $region4: #{tpu_custom_call.1} parent=1 // loop_header_branch
      %30 = sbr.rel (%p28) target = $region8
    $region5: #{tpu_custom_call.1} parent=1 // loop_body
      %s32 = ssub.s32 %s27, 1
      %s33 = ssub.s32 %s27, 2
      %s34 = sadd.s32 %s27, 1
      %s35 = ssub.s32 %s27, %s34
      %p36 = scmp.eq.s32.totalorder %s35, 0
      %s38 = sadd.s32 %s37, 1
      %s39 = scalar_select %p36, %s37, %s38
      %p42 = pneg %p36
      %p43 = scmp.eq.s32.totalorder %s27, 1
      %p44 = por %p42, %p43
      %p45 = scmp.ne.s32.totalorder %s37, %s40
      %p46 = scmp.eq.s32.totalorder %s27, 0
      %p47 = por %p45, %p46
      %p48 = scmp.ne.s32.totalorder %s37, %s40
      %p49 = scmp.eq.s32.totalorder %s32, 1
      %p50 = por %p48, %p49
      %p51 = scmp.ne.s32.totalorder %s40, %s41
      %p52 = scmp.eq.s32.totalorder %s32, 0
      %p53 = por %p51, %p52
      %p54 = scmp.ne.s32.totalorder %s40, %s41
      %p55 = scmp.eq.s32.totalorder %s33, 1
      %p56 = por %p54, %p55
      %p58 = scmp.ne.s32.totalorder %s41, %s57
      %p59 = scmp.eq.s32.totalorder %s33, 0
      %p60 = por %p58, %p59
      %s61 = ssub.s32 %s27, %s34
      %p62 = scmp.eq.s32.totalorder %s61, 0
      %s64 = sadd.s32 %s63, 1
      %s65 = scalar_select %p62, %s63, %s64
      %p68 = pneg %p62
      %p69 = scmp.eq.s32.totalorder %s27, 1
      %p70 = por %p68, %p69
      %p71 = scmp.ne.s32.totalorder %s63, %s66
      %p72 = scmp.eq.s32.totalorder %s27, 0
      %p73 = por %p71, %p72
      %p74 = scmp.ne.s32.totalorder %s63, %s66
      %p75 = scmp.eq.s32.totalorder %s32, 1
      %p76 = por %p74, %p75
      %p77 = scmp.ne.s32.totalorder %s66, %s67
      %p78 = scmp.eq.s32.totalorder %s32, 0
      %p79 = por %p77, %p78
      %p80 = scmp.ne.s32.totalorder %s66, %s67
      %p81 = scmp.eq.s32.totalorder %s33, 1
      %p82 = por %p80, %p81
      %p84 = scmp.ne.s32.totalorder %s67, %s83
      %p85 = scmp.eq.s32.totalorder %s33, 0
      %p86 = por %p84, %p85
      %s88 = sadd.s32 %s87, 1
      %p91 = scmp.eq.s32.totalorder %s27, 1
      %p92 = scmp.ne.s32.totalorder %s87, %s89
      %p93 = scmp.eq.s32.totalorder %s27, 0
      %p94 = por %p92, %p93
      %p95 = scmp.ne.s32.totalorder %s87, %s89
      %p96 = scmp.eq.s32.totalorder %s32, 1
      %p97 = por %p95, %p96
      %p98 = scmp.ne.s32.totalorder %s89, %s90
      %p99 = scmp.eq.s32.totalorder %s32, 0
      %p100 = por %p98, %p99
      %p101 = scmp.ne.s32.totalorder %s89, %s90
      %p102 = scmp.eq.s32.totalorder %s33, 1
      %p103 = por %p101, %p102
      %p105 = scmp.ne.s32.totalorder %s90, %s104
      %p106 = scmp.eq.s32.totalorder %s33, 0
      %p107 = por %p105, %p106
      %s109 = sadd.s32 %s108, 1
      %p112 = scmp.eq.s32.totalorder %s27, 1
      %p113 = scmp.ne.s32.totalorder %s108, %s110
      %p114 = scmp.eq.s32.totalorder %s27, 0
      %p115 = por %p113, %p114
      %p116 = scmp.ne.s32.totalorder %s108, %s110
      %p117 = scmp.eq.s32.totalorder %s32, 1
      %p118 = por %p116, %p117
      %p119 = scmp.ne.s32.totalorder %s110, %s111
      %p120 = scmp.eq.s32.totalorder %s32, 0
      %p121 = por %p119, %p120
      %p122 = scmp.ne.s32.totalorder %s110, %s111
      %p123 = scmp.eq.s32.totalorder %s33, 1
      %p124 = por %p122, %p123
      %p126 = scmp.ne.s32.totalorder %s111, %s125
      %p127 = scmp.eq.s32.totalorder %s33, 0
      %p128 = por %p126, %p127
      %s130 = sadd.s32 %s129, 1
      %p133 = scmp.eq.s32.totalorder %s27, 1
      %p134 = scmp.ne.s32.totalorder %s129, %s131
      %p135 = scmp.eq.s32.totalorder %s27, 0
      %p136 = por %p134, %p135
      %p137 = scmp.ne.s32.totalorder %s129, %s131
      %p138 = scmp.eq.s32.totalorder %s32, 1
      %p139 = por %p137, %p138
      %p140 = scmp.ne.s32.totalorder %s131, %s132
      %p141 = scmp.eq.s32.totalorder %s32, 0
      %p142 = por %p140, %p141
      %p143 = scmp.ne.s32.totalorder %s131, %s132
      %p144 = scmp.eq.s32.totalorder %s33, 1
      %p145 = por %p143, %p144
      %p147 = scmp.ne.s32.totalorder %s132, %s146
      %p148 = scmp.eq.s32.totalorder %s33, 0
      %p149 = por %p147, %p148
      %s151 = sadd.s32 %s150, 1
      %p154 = scmp.eq.s32.totalorder %s27, 1
      %p155 = scmp.ne.s32.totalorder %s150, %s152
      %p156 = scmp.eq.s32.totalorder %s27, 0
      %p157 = por %p155, %p156
      %p158 = scmp.ne.s32.totalorder %s150, %s152
      %p159 = scmp.eq.s32.totalorder %s32, 1
      %p160 = por %p158, %p159
      %p161 = scmp.ne.s32.totalorder %s152, %s153
      %p162 = scmp.eq.s32.totalorder %s32, 0
      %p163 = por %p161, %p162
      %p164 = scmp.ne.s32.totalorder %s152, %s153
      %p165 = scmp.eq.s32.totalorder %s33, 1
      %p166 = por %p164, %p165
      %p168 = scmp.ne.s32.totalorder %s153, %s167
      %p169 = scmp.eq.s32.totalorder %s33, 0
      %p170 = por %p168, %p169
      %s172 = sadd.s32 %s171, 1
      %p175 = scmp.eq.s32.totalorder %s27, 1
      %p176 = scmp.ne.s32.totalorder %s171, %s173
      %p177 = scmp.eq.s32.totalorder %s27, 0
      %p178 = por %p176, %p177
      %p179 = scmp.ne.s32.totalorder %s171, %s173
      %p180 = scmp.eq.s32.totalorder %s32, 1
      %p181 = por %p179, %p180
      %p182 = scmp.ne.s32.totalorder %s173, %s174
      %p183 = scmp.eq.s32.totalorder %s32, 0
      %p184 = por %p182, %p183
      %p185 = scmp.ne.s32.totalorder %s173, %s174
      %p186 = scmp.eq.s32.totalorder %s33, 1
      %p187 = por %p185, %p186
      %p189 = scmp.ne.s32.totalorder %s174, %s188
      %p190 = scmp.eq.s32.totalorder %s33, 0
      %p191 = por %p189, %p190
      %s192 = ssub.s32 %s27, %s34
      %p193 = scmp.eq.s32.totalorder %s192, 0
      %s195 = sadd.s32 %s194, 1
      %s196 = scalar_select %p193, %s194, %s195
      %p199 = pneg %p193
      %p200 = scmp.eq.s32.totalorder %s27, 1
      %p201 = por %p199, %p200
      %p202 = scmp.ne.s32.totalorder %s194, %s197
      %p203 = scmp.eq.s32.totalorder %s27, 0
      %p204 = por %p202, %p203
      %p205 = scmp.ne.s32.totalorder %s194, %s197
      %p206 = scmp.eq.s32.totalorder %s32, 1
      %p207 = por %p205, %p206
      %p208 = scmp.ne.s32.totalorder %s197, %s198
      %p209 = scmp.eq.s32.totalorder %s32, 0
      %p210 = por %p208, %p209
      %p211 = scmp.ne.s32.totalorder %s197, %s198
      %p212 = scmp.eq.s32.totalorder %s33, 1
      %p213 = por %p211, %p212
      %p215 = scmp.ne.s32.totalorder %s198, %s214
      %p216 = scmp.eq.s32.totalorder %s33, 0
      %p217 = por %p215, %p216
      %s218 = ssub.s32 %s27, %s34
      %p219 = scmp.eq.s32.totalorder %s218, 0
      %s221 = sadd.s32 %s220, 1
      %s222 = scalar_select %p219, %s220, %s221
      %p225 = pneg %p219
      %p226 = scmp.eq.s32.totalorder %s27, 1
      %p227 = por %p225, %p226
      %p228 = scmp.ne.s32.totalorder %s220, %s223
      %p229 = scmp.eq.s32.totalorder %s27, 0
      %p230 = por %p228, %p229
      %p231 = scmp.ne.s32.totalorder %s220, %s223
      %p232 = scmp.eq.s32.totalorder %s32, 1
      %p233 = por %p231, %p232
      %p234 = scmp.ne.s32.totalorder %s223, %s224
      %p235 = scmp.eq.s32.totalorder %s32, 0
      %p236 = por %p234, %p235
      %p237 = scmp.ne.s32.totalorder %s223, %s224
      %p238 = scmp.eq.s32.totalorder %s33, 1
      %p239 = por %p237, %p238
      %p241 = scmp.ne.s32.totalorder %s224, %s240
      %p242 = scmp.eq.s32.totalorder %s33, 0
      %p243 = por %p241, %p242
      %s244 = ssub.s32 %s27, %s34
      %p245 = scmp.eq.s32.totalorder %s244, 0
      %s247 = sadd.s32 %s246, 1
      %s248 = scalar_select %p245, %s246, %s247
      %p251 = pneg %p245
      %p252 = scmp.eq.s32.totalorder %s27, 1
      %p253 = por %p251, %p252
      %p254 = scmp.ne.s32.totalorder %s246, %s249
      %p255 = scmp.eq.s32.totalorder %s27, 0
      %p256 = por %p254, %p255
      %p257 = scmp.ne.s32.totalorder %s246, %s249
      %p258 = scmp.eq.s32.totalorder %s32, 1
      %p259 = por %p257, %p258
      %p260 = scmp.ne.s32.totalorder %s249, %s250
      %p261 = scmp.eq.s32.totalorder %s32, 0
      %p262 = por %p260, %p261
      %p263 = scmp.ne.s32.totalorder %s249, %s250
      %p264 = scmp.eq.s32.totalorder %s33, 1
      %p265 = por %p263, %p264
      %p267 = scmp.ne.s32.totalorder %s250, %s266
      %p268 = scmp.eq.s32.totalorder %s33, 0
      %p269 = por %p267, %p268
      %s270 = ssub.s32 %s27, %s34
      %p271 = scmp.eq.s32.totalorder %s270, 0
      %s273 = sadd.s32 %s272, 1
      %s274 = scalar_select %p271, %s272, %s273
      %p277 = pneg %p271
      %p278 = scmp.eq.s32.totalorder %s27, 1
      %p279 = por %p277, %p278
      %p280 = scmp.ne.s32.totalorder %s272, %s275
      %p281 = scmp.eq.s32.totalorder %s27, 0
      %p282 = por %p280, %p281
      %p283 = scmp.ne.s32.totalorder %s272, %s275
      %p284 = scmp.eq.s32.totalorder %s32, 1
      %p285 = por %p283, %p284
      %p286 = scmp.ne.s32.totalorder %s275, %s276
      %p287 = scmp.eq.s32.totalorder %s32, 0
      %p288 = por %p286, %p287
      %p289 = scmp.ne.s32.totalorder %s275, %s276
      %p290 = scmp.eq.s32.totalorder %s33, 1
      %p291 = por %p289, %p290
      %p293 = scmp.ne.s32.totalorder %s276, %s292
      %p294 = scmp.eq.s32.totalorder %s33, 0
      %p295 = por %p293, %p294
      %p296 = scmp.le.s32.totalorder 1, %s27
      %p297 = scmp.lt.s32.totalorder %s27, 3
      %p298 = pnand %p296, %p297
      %p299 = pneg %p298
      // Predicated region
      $region9: #{tpu_custom_call.1} parent=5 // pred_check
        _
      $region10: #{tpu_custom_call.1} parent=5 // pred_check_branch
        %301 = sbr.rel (%p298) target = $region12
      $region11: #{tpu_custom_call.1} parent=5 // pred_region
        %s302 = ssub.s32 %s27, 1
        // Predicated region
        $region13: #{tpu_custom_call.1} parent=11 // pred_check
          %p303 = pneg %p100
        $region14: #{tpu_custom_call.1} parent=11 // pred_check_branch
          %305 = sbr.rel (%p303) target = $region16
        $region15: #{tpu_custom_call.1} parent=11 // pred_region
          %s307 = ssub.s32 128, 128
          %308 = vsyncadd [#allocation6], %s307
          %s310 = sshll.u32 [#allocation5], 4
          %s311 = int_to_ptr.vmem [resolvable:$true] %s310
          %313 = dma.hbm_to_vmem [thread:$0]  %s2, 128, %s311, [#allocation6]
        $region16: #{tpu_custom_call.1} parent=11 // pred_fallthru
          _
        // Predicated region
        $region17: #{tpu_custom_call.1} parent=11 // pred_check
          %p314 = pneg %p121
        $region18: #{tpu_custom_call.1} parent=11 // pred_check_branch
          %316 = sbr.rel (%p314) target = $region20
        $region19: #{tpu_custom_call.1} parent=11 // pred_region
          %s318 = ssub.s32 512, 512
          %319 = vsyncadd [#allocation6], %s318
          %s320 = sshll.u32 [#allocation7], 4
          %s321 = int_to_ptr.vmem [resolvable:$true] %s320
          %326 = dma.hbm_to_vmem [thread:$0]  %s3, 512, %s321, [#allocation6], 128, 128, 8
        $region20: #{tpu_custom_call.1} parent=11 // pred_fallthru
          _
        // Predicated region
        $region21: #{tpu_custom_call.1} parent=11 // pred_check
          %p327 = pneg %p142
        $region22: #{tpu_custom_call.1} parent=11 // pred_check_branch
          %329 = sbr.rel (%p327) target = $region24
        $region23: #{tpu_custom_call.1} parent=11 // pred_region
          _
        $region24: #{tpu_custom_call.1} parent=11 // pred_fallthru
          _
        // Predicated region
        $region25: #{tpu_custom_call.1} parent=11 // pred_check
          %p330 = pneg %p163
        $region26: #{tpu_custom_call.1} parent=11 // pred_check_branch
          %332 = sbr.rel (%p330) target = $region28
        $region27: #{tpu_custom_call.1} parent=11 // pred_region
          _
        $region28: #{tpu_custom_call.1} parent=11 // pred_fallthru
          _
        // Predicated region
        $region29: #{tpu_custom_call.1} parent=11 // pred_check
          %p333 = pneg %p184
        $region30: #{tpu_custom_call.1} parent=11 // pred_check_branch
          %335 = sbr.rel (%p333) target = $region32
        $region31: #{tpu_custom_call.1} parent=11 // pred_region
          _
        $region32: #{tpu_custom_call.1} parent=11 // pred_fallthru
          _
      $region12: #{tpu_custom_call.1} parent=5 // pred_fallthru
        _
      %p336 = scmp.lt.s32.totalorder %s27, 2
      // Predicated region
      $region33: #{tpu_custom_call.1} parent=5 // pred_check
        %p337 = pneg %p336
      $region34: #{tpu_custom_call.1} parent=5 // pred_check_branch
        %339 = sbr.rel (%p337) target = $region36
      $region35: #{tpu_custom_call.1} parent=5 // pred_region
        // Predicated region
        $region37: #{tpu_custom_call.1} parent=35 // pred_check
          %p340 = pneg %p47
        $region38: #{tpu_custom_call.1} parent=35 // pred_check_branch
          %342 = sbr.rel (%p340) target = $region40
        $region39: #{tpu_custom_call.1} parent=35 // pred_region
          %s343 = sand.u32 %s37, 1
          %s344 = scalar_lea.sflag [#allocation3], %s343
          %s345 = sand.u32 %s37, 1
          %s346 = smul.addr %s345, 8
          %s347 = scalar_lea.vmem [#allocation2], %s346
          %s349 = ssub.s32 128, 128
          %350 = vsyncadd %s344, %s349
          %s351 = smul.addr %s27, 128
          %s352 = scalar_lea.hbm %s0, %s351
          %s354 = sshll.u32 %s347, 4
          %s355 = int_to_ptr.vmem [resolvable:$true] %s354
          %357 = dma.hbm_to_vmem [thread:$0]  %s352, 128, %s355, %s344
        $region40: #{tpu_custom_call.1} parent=35 // pred_fallthru
          _
        // Predicated region
        $region41: #{tpu_custom_call.1} parent=35 // pred_check
          %p358 = pneg %p73
        $region42: #{tpu_custom_call.1} parent=35 // pred_check_branch
          %360 = sbr.rel (%p358) target = $region44
        $region43: #{tpu_custom_call.1} parent=35 // pred_region
          %p361 = scmp.lt.s32.totalorder %s27, 1
          %s362 = scalar_select %p361, %s27, 1
          %s363 = smul.addr %s362, 8
          %s364 = scalar_lea.vmem %s1, %s363
        $region44: #{tpu_custom_call.1} parent=35 // pred_fallthru
          _
      $region36: #{tpu_custom_call.1} parent=5 // pred_fallthru
        _
      %p365 = scmp.le.s32.totalorder 1, %s27
      %p366 = scmp.lt.s32.totalorder %s27, 3
      %p367 = pnand %p365, %p366
      %p368 = pneg %p367
      // Predicated region
      $region45: #{tpu_custom_call.1} parent=5 // pred_check
        _
      $region46: #{tpu_custom_call.1} parent=5 // pred_check_branch
        %370 = sbr.rel (%p367) target = $region48
      $region47: #{tpu_custom_call.1} parent=5 // pred_region
        %s371 = ssub.s32 %s27, 1
        %s372 = sand.u32 %s40, 1
        %s373 = scalar_lea.sflag [#allocation3], %s372
        %s374 = sand.u32 %s40, 1
        %s375 = smul.addr %s374, 8
        %s376 = scalar_lea.vmem [#allocation2], %s375
        // Predicated region
        $region49: #{tpu_custom_call.1} parent=47 // pred_check
          %p377 = pneg %p53
        $region50: #{tpu_custom_call.1} parent=47 // pred_check_branch
          %379 = sbr.rel (%p377) target = $region52
        $region51: #{tpu_custom_call.1} parent=47 // pred_region
          %380 = dma.done %s373, 128
        $region52: #{tpu_custom_call.1} parent=47 // pred_fallthru
          _
        // Predicated region
        $region53: #{tpu_custom_call.1} parent=47 // pred_check
          %p381 = pneg %p100
        $region54: #{tpu_custom_call.1} parent=47 // pred_check_branch
          %383 = sbr.rel (%p381) target = $region56
        $region55: #{tpu_custom_call.1} parent=47 // pred_region
          %384 = dma.done [#allocation6], 128
        $region56: #{tpu_custom_call.1} parent=47 // pred_fallthru
          _
        // Predicated region
        $region57: #{tpu_custom_call.1} parent=47 // pred_check
          %p385 = pneg %p121
        $region58: #{tpu_custom_call.1} parent=47 // pred_check_branch
          %387 = sbr.rel (%p385) target = $region60
        $region59: #{tpu_custom_call.1} parent=47 // pred_region
          %388 = dma.done [#allocation6], 512
        $region60: #{tpu_custom_call.1} parent=47 // pred_fallthru
          _
        %s389 = sand.u32 %s40, 1
        %s390 = scalar_lea.sflag [#allocation3], %s389
        %s391 = sand.u32 %s40, 1
        %s392 = smul.addr %s391, 8
        %s393 = scalar_lea.vmem [#allocation2], %s392
        %p394 = pneg %p53
        %p395 = pneg %p50
        %p396 = scmp.lt.s32.totalorder %s32, 1
        %s397 = scalar_select %p396, %s32, 1
        %s398 = smul.addr %s397, 8
        %s399 = scalar_lea.vmem %s1, %s398
        %p400 = pneg %p79
        %p401 = pneg %p76
        %p402 = pneg %p100
        %p403 = pneg %p97
        %p404 = pneg %p121
        %p405 = pneg %p118
        %p406 = pneg %p142
        %p407 = pneg %p139
        %p408 = pneg %p163
        %p409 = pneg %p160
        %p410 = pneg %p184
        %p411 = pneg %p181
        %p412 = pneg %p210
        %p413 = pneg %p207
        %s414 = sand.u32 %s197, 1
        %s415 = scalar_lea.sflag [#allocation4], %s414
        %s416 = sand.u32 %s197, 1
        %s417 = smul.addr %s416, 8
        %s418 = scalar_lea.vmem [#allocation8], %s417
        %p419 = pneg %p236
        %p420 = pneg %p233
        %s421 = sand.u32 %s32, 1
        %s422 = scalar_lea.sflag [#allocation10], %s421
        %s423 = sand.u32 %s223, 1
        %s424 = smul.addr %s423, 16
        %s425 = scalar_lea.vmem [#allocation9], %s424
        %p426 = pneg %p262
        %p427 = pneg %p259
        %s428 = sand.u32 %s32, 1
        %s429 = scalar_lea.sflag [#allocation10], %s428
        %s430 = sand.u32 %s249, 1
        %s431 = smul.addr %s430, 16
        %s432 = scalar_lea.vmem [#allocation11], %s431
        %p433 = pneg %p288
        %p434 = pneg %p285
        %p435 = scmp.lt.s32.totalorder %s32, 1
        %s436 = scalar_select %p435, %s32, 1
        %s437 = smul.addr %s436, 8
        %s438 = scalar_lea.vmem %s10, %s437
        %p439 = scmp.lt.s32.totalorder %s32, 1
        %s440 = scalar_select %p439, %s32, 1
        %s441 = smul.addr %s440, 8
        %s442 = scalar_lea.vmem %s1, %s441
        %s443 = smul.u32 4, %s32
        %s444 = smul.u32 4, %s32
        %p445 = scmp.lt.s32.totalorder %s32, 1
        %s446 = scalar_select %p445, %s32, 1
        %s447 = smul.addr %s446, 8
        %s448 = scalar_lea.vmem %s10, %s447
        %v450 = vld [vmem:[#allocation7] sm:$0xff]
        %v451 = vld [vmem:[#allocation7 + $0x8] sm:$0xff]
        %v452 = vld [vmem:[#allocation7 + $0x10] sm:$0xff]
        %v453 = vld [vmem:[#allocation7 + $0x18] sm:$0xff]
        %v454 = vld [vmem:[%s4] sm:$0x1]
        %v455 = vld [vmem:[%s376] sm:$0xff]
        %v457 = vlaneseq
        %v458 = vshrl.u32 %v457, 7
        %v459 = vsub.s32 0, %v458
        %v460 = vrot.slane %v454, %v459
        %vm462 = vcmask 261120
        %v464 = vsel %vm462, %v455, 0
        %466 = vmatprep.subr.mxu0 0.0
        %467 = vmatpush1.msra.mxu0 %v450
        %468 = vmatprep.subr.mxu0 0.0
        %469 = vmatpush1.msra.mxu0 %v451
        %470 = vmatprep.subr.mxu0 0.0
        %471 = vmatpush1.msra.mxu0 %v452
        %472 = vmatprep.subr.mxu0 0.0
        %473 = vmatpush1.msra.mxu0 %v453
        %474 = vmatprep.subr.mxu0 0.0
        %475 = vmatpush1.msra.mxu0 0.0
        %476 = vmatprep.subr.mxu0 0.0
        %477 = vmatpush1.msra.mxu0 0.0
        %478 = vmatprep.subr.mxu0 0.0
        %479 = vmatpush1.msra.mxu0 0.0
        %480 = vmatprep.subr.mxu0 0.0
        %481 = vmatpush1.msra.mxu0 0.0
        %482 = vmatprep.subr.mxu0 0.0
        %483 = vmatpush1.msra.mxu0 0.0
        %484 = vmatprep.subr.mxu0 0.0
        %485 = vmatpush1.msra.mxu0 0.0
        %486 = vmatprep.subr.mxu0 0.0
        %487 = vmatpush1.msra.mxu0 0.0
        %488 = vmatprep.subr.mxu0 0.0
        %489 = vmatpush1.msra.mxu0 0.0
        %490 = vmatprep.subr.mxu0 0.0
        %491 = vmatpush1.msra.mxu0 0.0
        %492 = vmatprep.subr.mxu0 0.0
        %493 = vmatpush1.msra.mxu0 0.0
        %494 = vmatprep.subr.mxu0 0.0
        %495 = vmatpush1.msra.mxu0 0.0
        %496 = vmatprep.subr.mxu0 0.0
        %497 = vmatpush1.msra.mxu0 0.0
        %498 = vmatprep.subr.mxu0 0.0
        %499 = vmatpush1.msra.mxu0 0.0
        %500 = vmatprep.subr.mxu0 0.0
        %501 = vmatpush1.msra.mxu0 0.0
        %502 = vmatprep.subr.mxu0 0.0
        %503 = vmatpush1.msra.mxu0 0.0
        %504 = vmatprep.subr.mxu0 0.0
        %505 = vmatpush1.msra.mxu0 0.0
        %506 = vmatprep.subr.mxu0 0.0
        %507 = vmatpush1.msra.mxu0 0.0
        %508 = vmatprep.subr.mxu0 0.0
        %509 = vmatpush1.msra.mxu0 0.0
        %510 = vmatprep.subr.mxu0 0.0
        %511 = vmatpush1.msra.mxu0 0.0
        %512 = vmatprep.subr.mxu0 0.0
        %513 = vmatpush1.msra.mxu0 0.0
        %514 = vmatprep.subr.mxu0 0.0
        %515 = vmatpush1.msra.mxu0 0.0
        %516 = vmatprep.subr.mxu0 0.0
        %517 = vmatpush1.msra.mxu0 0.0
        %518 = vmatprep.subr.mxu0 0.0
        %519 = vmatpush1.msra.mxu0 0.0
        %520 = vmatprep.subr.mxu0 0.0
        %521 = vmatpush1.msra.mxu0 0.0
        %522 = vmatprep.subr.mxu0 0.0
        %523 = vmatpush1.msra.mxu0 0.0
        %524 = vmatprep.subr.mxu0 0.0
        %525 = vmatpush1.msra.mxu0 0.0
        %526 = vmatprep.subr.mxu0 0.0
        %527 = vmatpush1.msra.mxu0 0.0
        %528 = vmatprep.subr.mxu0 0.0
        %529 = vmatpush1.msra.mxu0 0.0
        %530 = vmatprep.mubr.f32.mxu0 0.0
        %531 = vmatmul.mubr.f32.gmra.mrb[0].mxu0 %v464
        %v532 = vpop.f32.mrb[0].mxu0
        %v533 = vadd.f32 %v460, %v532
        %v534 = vpop.f32.mrb[0].mxu0
        %535 = vdwg.mxu0
        %v536 = vmul.f32 %v533, -5.0
        %v537 = vmul.f32 %v536, 1.442695
        %v538 = vpow.pop %v537
        %v539 = vadd.f32 %v538, 1.0
        %v540 = vrcp.pop %v539
        %v541 = vmul.f32 1.0, %v540
        %v542 = vadd.f32 %v541, 1e-05
        %v543 = vmul.f32 %v542, 1.0986123
        %v544 = vmul.f32 %v543, 1.442695
        %v545 = vpow.pop %v544
        %v546 = vsub.f32 %v545, 1.0
        %v547 = vld [vmem:[%s442] sm:$0xff]
        %549 = vset.pattern.permute.xlu0 0
        %550 = vperm.xlu0 %549, %v547
        %v551 = vpop.permute.xlu0 %550
        %v553 = vmul.f32 %v546, %v551
        %555 = vrot.lane.b32.xlu0 %v553, 32
        %v556 = vpop.permute.xlu0 %555
        %vm558 = vcmask 31744
        %559 = vst.msk [vmem:[%s448] sm:$0xff] %vm558, %v556
        %561 = vrot.lane.b32.xlu0 %v533, 120
        %v562 = vpop.permute.xlu0 %561
        %564 = vrot.lane.b32.xlu0 %v533, 112
        %v565 = vpop.permute.xlu0 %564
        %567 = vrot.lane.b32.xlu0 %v533, 104
        %v568 = vpop.permute.xlu0 %567
        %v570 = vcombine.low %v533, %v565
        %v571 = vcombine.high %v533, %v565
        %v573 = vunpack.c.l.s4 1983009808
        %v574 = vunpack.c.0.s8 %v573
        %v575 = vlaneseq
        %v576 = vshrl.u32 %v575, 7
        %v577 = vsub.s32 %v574, %v576
        %v578 = vrot.slane %v570, %v577
        %v580 = vunpack.c.l.s4 1983009808
        %v581 = vunpack.c.0.s8 %v580
        %v582 = vlaneseq
        %v583 = vshrl.u32 %v582, 7
        %v584 = vsub.s32 %v581, %v583
        %v585 = vrot.slane %v571, %v584
        %v586 = vcombine.low %v562, %v568
        %v587 = vcombine.high %v562, %v568
        %v589 = vunpack.c.l.s4 1983009808
        %v590 = vunpack.c.0.s8 %v589
        %v591 = vlaneseq
        %v592 = vshrl.u32 %v591, 7
        %v593 = vsub.s32 %v590, %v592
        %v594 = vrot.slane %v586, %v593
        %v596 = vunpack.c.l.s4 1983009808
        %v597 = vunpack.c.0.s8 %v596
        %v598 = vlaneseq
        %v599 = vshrl.u32 %v598, 7
        %v600 = vsub.s32 %v597, %v599
        %v601 = vrot.slane %v587, %v600
        %v602 = vcombine.low %v578, %v594
        %v603 = vcombine.high %v578, %v594
        %v605 = vunpack.c.l.s4 1934713408
        %v606 = vunpack.c.0.s8 %v605
        %v607 = vlaneseq
        %v608 = vshrl.u32 %v607, 7
        %v609 = vsub.s32 %v606, %v608
        %v610 = vrot.slane %v602, %v609
        %v612 = vunpack.c.l.s4 1934713408
        %v613 = vunpack.c.0.s8 %v612
        %v614 = vlaneseq
        %v615 = vshrl.u32 %v614, 7
        %v616 = vsub.s32 %v613, %v615
        %v617 = vrot.slane %v603, %v616
        %v618 = vcombine.low %v585, %v601
        %v619 = vcombine.high %v585, %v601
        %v621 = vunpack.c.l.s4 1934713408
        %v622 = vunpack.c.0.s8 %v621
        %v623 = vlaneseq
        %v624 = vshrl.u32 %v623, 7
        %v625 = vsub.s32 %v622, %v624
        %v626 = vrot.slane %v618, %v625
        %v628 = vunpack.c.l.s4 1934713408
        %v629 = vunpack.c.0.s8 %v628
        %v630 = vlaneseq
        %v631 = vshrl.u32 %v630, 7
        %v632 = vsub.s32 %v629, %v631
        %v633 = vrot.slane %v619, %v632
        %v634 = vcombine.high %v610, 0.0
        %v635 = vcombine.high %v617, 0.0
        %v636 = vcombine.high %v626, 0.0
        %v637 = vcombine.high %v633, 0.0
        %v638 = vcombine.low %v610, %v617
        %v640 = vunpack.c.l.s4 1983009808
        %v641 = vunpack.c.0.s8 %v640
        %v642 = vlaneseq
        %v643 = vshrl.u32 %v642, 7
        %v644 = vsub.s32 %v641, %v643
        %v645 = vrot.slane %v638, %v644
        %v646 = vcombine.low %v634, %v635
        %v648 = vunpack.c.l.s4 1983009808
        %v649 = vunpack.c.0.s8 %v648
        %v650 = vlaneseq
        %v651 = vshrl.u32 %v650, 7
        %v652 = vsub.s32 %v649, %v651
        %v653 = vrot.slane %v646, %v652
        %v654 = vcombine.low %v626, %v633
        %v656 = vunpack.c.l.s4 1983009808
        %v657 = vunpack.c.0.s8 %v656
        %v658 = vlaneseq
        %v659 = vshrl.u32 %v658, 7
        %v660 = vsub.s32 %v657, %v659
        %v661 = vrot.slane %v654, %v660
        %v662 = vcombine.low %v636, %v637
        %v664 = vunpack.c.l.s4 1983009808
        %v665 = vunpack.c.0.s8 %v664
        %v666 = vlaneseq
        %v667 = vshrl.u32 %v666, 7
        %v668 = vsub.s32 %v665, %v667
        %v669 = vrot.slane %v662, %v668
        %v670 = vcombine.low %v645, %v653
        %v671 = vcombine.high %v645, %v653
        %v673 = vunpack.c.l.s4 1934713408
        %v674 = vunpack.c.0.s8 %v673
        %v675 = vlaneseq
        %v676 = vshrl.u32 %v675, 7
        %v677 = vsub.s32 %v674, %v676
        %v678 = vrot.slane %v670, %v677
        %v680 = vunpack.c.l.s4 1934713408
        %v681 = vunpack.c.0.s8 %v680
        %v682 = vlaneseq
        %v683 = vshrl.u32 %v682, 7
        %v684 = vsub.s32 %v681, %v683
        %v685 = vrot.slane %v671, %v684
        %v686 = vcombine.low %v661, %v669
        %v687 = vcombine.high %v661, %v669
        %v689 = vunpack.c.l.s4 1934713408
        %v690 = vunpack.c.0.s8 %v689
        %v691 = vlaneseq
        %v692 = vshrl.u32 %v691, 7
        %v693 = vsub.s32 %v690, %v692
        %v694 = vrot.slane %v686, %v693
        %v696 = vunpack.c.l.s4 1934713408
        %v697 = vunpack.c.0.s8 %v696
        %v698 = vlaneseq
        %v699 = vshrl.u32 %v698, 7
        %v700 = vsub.s32 %v697, %v699
        %v701 = vrot.slane %v687, %v700
        %v702 = vcombine.low %v678, %v694
        %v703 = vcombine.high %v678, %v694
        %v704 = vcombine.low %v685, %v701
        %v705 = vcombine.high %v685, %v701
        %706 = vrot.lane.b32.xlu0 %v533, 96
        %v707 = vpop.permute.xlu0 %706
        %708 = vrot.lane.b32.xlu0 %v562, 96
        %v709 = vpop.permute.xlu0 %708
        %710 = vrot.lane.b32.xlu0 %v565, 96
        %v711 = vpop.permute.xlu0 %710
        %712 = vrot.lane.b32.xlu0 %v568, 96
        %v713 = vpop.permute.xlu0 %712
        %v718 = vcombine.low %v707, %v711
        %v719 = vcombine.high %v707, %v711
        %v721 = vunpack.c.l.s4 1983009808
        %v722 = vunpack.c.0.s8 %v721
        %v723 = vlaneseq
        %v724 = vshrl.u32 %v723, 7
        %v725 = vsub.s32 %v722, %v724
        %v726 = vrot.slane %v718, %v725
        %v728 = vunpack.c.l.s4 1983009808
        %v729 = vunpack.c.0.s8 %v728
        %v730 = vlaneseq
        %v731 = vshrl.u32 %v730, 7
        %v732 = vsub.s32 %v729, %v731
        %v733 = vrot.slane %v719, %v732
        %v734 = vcombine.low %v709, %v713
        %v735 = vcombine.high %v709, %v713
        %v737 = vunpack.c.l.s4 1983009808
        %v738 = vunpack.c.0.s8 %v737
        %v739 = vlaneseq
        %v740 = vshrl.u32 %v739, 7
        %v741 = vsub.s32 %v738, %v740
        %v742 = vrot.slane %v734, %v741
        %v744 = vunpack.c.l.s4 1983009808
        %v745 = vunpack.c.0.s8 %v744
        %v746 = vlaneseq
        %v747 = vshrl.u32 %v746, 7
        %v748 = vsub.s32 %v745, %v747
        %v749 = vrot.slane %v735, %v748
        %v750 = vcombine.low %v726, %v742
        %v751 = vcombine.high %v726, %v742
        %v753 = vunpack.c.l.s4 1934713408
        %v754 = vunpack.c.0.s8 %v753
        %v755 = vlaneseq
        %v756 = vshrl.u32 %v755, 7
        %v757 = vsub.s32 %v754, %v756
        %v758 = vrot.slane %v750, %v757
        %v760 = vunpack.c.l.s4 1934713408
        %v761 = vunpack.c.0.s8 %v760
        %v762 = vlaneseq
        %v763 = vshrl.u32 %v762, 7
        %v764 = vsub.s32 %v761, %v763
        %v765 = vrot.slane %v751, %v764
        %v766 = vcombine.low %v733, %v749
        %v767 = vcombine.high %v733, %v749
        %v769 = vunpack.c.l.s4 1934713408
        %v770 = vunpack.c.0.s8 %v769
        %v771 = vlaneseq
        %v772 = vshrl.u32 %v771, 7
        %v773 = vsub.s32 %v770, %v772
        %v774 = vrot.slane %v766, %v773
        %v776 = vunpack.c.l.s4 1934713408
        %v777 = vunpack.c.0.s8 %v776
        %v778 = vlaneseq
        %v779 = vshrl.u32 %v778, 7
        %v780 = vsub.s32 %v777, %v779
        %v781 = vrot.slane %v767, %v780
        %v782 = vcombine.high %v758, 0.0
        %v783 = vcombine.high %v765, 0.0
        %v784 = vcombine.high %v774, 0.0
        %v785 = vcombine.high %v781, 0.0
        %v786 = vcombine.low %v758, %v765
        %v788 = vunpack.c.l.s4 1983009808
        %v789 = vunpack.c.0.s8 %v788
        %v790 = vlaneseq
        %v791 = vshrl.u32 %v790, 7
        %v792 = vsub.s32 %v789, %v791
        %v793 = vrot.slane %v786, %v792
        %v794 = vcombine.low %v782, %v783
        %v796 = vunpack.c.l.s4 1983009808
        %v797 = vunpack.c.0.s8 %v796
        %v798 = vlaneseq
        %v799 = vshrl.u32 %v798, 7
        %v800 = vsub.s32 %v797, %v799
        %v801 = vrot.slane %v794, %v800
        %v802 = vcombine.low %v774, %v781
        %v804 = vunpack.c.l.s4 1983009808
        %v805 = vunpack.c.0.s8 %v804
        %v806 = vlaneseq
        %v807 = vshrl.u32 %v806, 7
        %v808 = vsub.s32 %v805, %v807
        %v809 = vrot.slane %v802, %v808
        %v810 = vcombine.low %v784, %v785
        %v812 = vunpack.c.l.s4 1983009808
        %v813 = vunpack.c.0.s8 %v812
        %v814 = vlaneseq
        %v815 = vshrl.u32 %v814, 7
        %v816 = vsub.s32 %v813, %v815
        %v817 = vrot.slane %v810, %v816
        %v818 = vcombine.low %v793, %v801
        %v819 = vcombine.high %v793, %v801
        %v821 = vunpack.c.l.s4 1934713408
        %v822 = vunpack.c.0.s8 %v821
        %v823 = vlaneseq
        %v824 = vshrl.u32 %v823, 7
        %v825 = vsub.s32 %v822, %v824
        %v826 = vrot.slane %v818, %v825
        %v828 = vunpack.c.l.s4 1934713408
        %v829 = vunpack.c.0.s8 %v828
        %v830 = vlaneseq
        %v831 = vshrl.u32 %v830, 7
        %v832 = vsub.s32 %v829, %v831
        %v833 = vrot.slane %v819, %v832
        %v834 = vcombine.low %v809, %v817
        %v835 = vcombine.high %v809, %v817
        %v837 = vunpack.c.l.s4 1934713408
        %v838 = vunpack.c.0.s8 %v837
        %v839 = vlaneseq
        %v840 = vshrl.u32 %v839, 7
        %v841 = vsub.s32 %v838, %v840
        %v842 = vrot.slane %v834, %v841
        %v844 = vunpack.c.l.s4 1934713408
        %v845 = vunpack.c.0.s8 %v844
        %v846 = vlaneseq
        %v847 = vshrl.u32 %v846, 7
        %v848 = vsub.s32 %v845, %v847
        %v849 = vrot.slane %v835, %v848
        %v850 = vcombine.low %v826, %v842
        %v851 = vcombine.high %v826, %v842
        %v852 = vcombine.low %v833, %v849
        %v853 = vcombine.high %v833, %v849
        %854 = vrot.lane.b32.xlu0 %v533, 64
        %v855 = vpop.permute.xlu0 %854
        %856 = vrot.lane.b32.xlu0 %v562, 64
        %v857 = vpop.permute.xlu0 %856
        %858 = vrot.lane.b32.xlu0 %v565, 64
        %v859 = vpop.permute.xlu0 %858
        %860 = vrot.lane.b32.xlu0 %v568, 64
        %v861 = vpop.permute.xlu0 %860
        %v866 = vcombine.low %v855, %v859
        %v867 = vcombine.high %v855, %v859
        %v869 = vunpack.c.l.s4 1983009808
        %v870 = vunpack.c.0.s8 %v869
        %v871 = vlaneseq
        %v872 = vshrl.u32 %v871, 7
        %v873 = vsub.s32 %v870, %v872
        %v874 = vrot.slane %v866, %v873
        %v876 = vunpack.c.l.s4 1983009808
        %v877 = vunpack.c.0.s8 %v876
        %v878 = vlaneseq
        %v879 = vshrl.u32 %v878, 7
        %v880 = vsub.s32 %v877, %v879
        %v881 = vrot.slane %v867, %v880
        %v882 = vcombine.low %v857, %v861
        %v883 = vcombine.high %v857, %v861
        %v885 = vunpack.c.l.s4 1983009808
        %v886 = vunpack.c.0.s8 %v885
        %v887 = vlaneseq
        %v888 = vshrl.u32 %v887, 7
        %v889 = vsub.s32 %v886, %v888
        %v890 = vrot.slane %v882, %v889
        %v892 = vunpack.c.l.s4 1983009808
        %v893 = vunpack.c.0.s8 %v892
        %v894 = vlaneseq
        %v895 = vshrl.u32 %v894, 7
        %v896 = vsub.s32 %v893, %v895
        %v897 = vrot.slane %v883, %v896
        %v898 = vcombine.low %v874, %v890
        %v899 = vcombine.high %v874, %v890
        %v901 = vunpack.c.l.s4 1934713408
        %v902 = vunpack.c.0.s8 %v901
        %v903 = vlaneseq
        %v904 = vshrl.u32 %v903, 7
        %v905 = vsub.s32 %v902, %v904
        %v906 = vrot.slane %v898, %v905
        %v908 = vunpack.c.l.s4 1934713408
        %v909 = vunpack.c.0.s8 %v908
        %v910 = vlaneseq
        %v911 = vshrl.u32 %v910, 7
        %v912 = vsub.s32 %v909, %v911
        %v913 = vrot.slane %v899, %v912
        %v914 = vcombine.low %v881, %v897
        %v915 = vcombine.high %v881, %v897
        %v917 = vunpack.c.l.s4 1934713408
        %v918 = vunpack.c.0.s8 %v917
        %v919 = vlaneseq
        %v920 = vshrl.u32 %v919, 7
        %v921 = vsub.s32 %v918, %v920
        %v922 = vrot.slane %v914, %v921
        %v924 = vunpack.c.l.s4 1934713408
        %v925 = vunpack.c.0.s8 %v924
        %v926 = vlaneseq
        %v927 = vshrl.u32 %v926, 7
        %v928 = vsub.s32 %v925, %v927
        %v929 = vrot.slane %v915, %v928
        %v930 = vcombine.high %v906, 0.0
        %v931 = vcombine.high %v913, 0.0
        %v932 = vcombine.high %v922, 0.0
        %v933 = vcombine.high %v929, 0.0
        %v934 = vcombine.low %v906, %v913
        %v936 = vunpack.c.l.s4 1983009808
        %v937 = vunpack.c.0.s8 %v936
        %v938 = vlaneseq
        %v939 = vshrl.u32 %v938, 7
        %v940 = vsub.s32 %v937, %v939
        %v941 = vrot.slane %v934, %v940
        %v942 = vcombine.low %v930, %v931
        %v944 = vunpack.c.l.s4 1983009808
        %v945 = vunpack.c.0.s8 %v944
        %v946 = vlaneseq
        %v947 = vshrl.u32 %v946, 7
        %v948 = vsub.s32 %v945, %v947
        %v949 = vrot.slane %v942, %v948
        %v950 = vcombine.low %v922, %v929
        %v952 = vunpack.c.l.s4 1983009808
        %v953 = vunpack.c.0.s8 %v952
        %v954 = vlaneseq
        %v955 = vshrl.u32 %v954, 7
        %v956 = vsub.s32 %v953, %v955
        %v957 = vrot.slane %v950, %v956
        %v958 = vcombine.low %v932, %v933
        %v960 = vunpack.c.l.s4 1983009808
        %v961 = vunpack.c.0.s8 %v960
        %v962 = vlaneseq
        %v963 = vshrl.u32 %v962, 7
        %v964 = vsub.s32 %v961, %v963
        %v965 = vrot.slane %v958, %v964
        %v966 = vcombine.low %v941, %v949
        %v967 = vcombine.high %v941, %v949
        %v969 = vunpack.c.l.s4 1934713408
        %v970 = vunpack.c.0.s8 %v969
        %v971 = vlaneseq
        %v972 = vshrl.u32 %v971, 7
        %v973 = vsub.s32 %v970, %v972
        %v974 = vrot.slane %v966, %v973
        %v976 = vunpack.c.l.s4 1934713408
        %v977 = vunpack.c.0.s8 %v976
        %v978 = vlaneseq
        %v979 = vshrl.u32 %v978, 7
        %v980 = vsub.s32 %v977, %v979
        %v981 = vrot.slane %v967, %v980
        %v982 = vcombine.low %v957, %v965
        %v983 = vcombine.high %v957, %v965
        %v985 = vunpack.c.l.s4 1934713408
        %v986 = vunpack.c.0.s8 %v985
        %v987 = vlaneseq
        %v988 = vshrl.u32 %v987, 7
        %v989 = vsub.s32 %v986, %v988
        %v990 = vrot.slane %v982, %v989
        %v992 = vunpack.c.l.s4 1934713408
        %v993 = vunpack.c.0.s8 %v992
        %v994 = vlaneseq
        %v995 = vshrl.u32 %v994, 7
        %v996 = vsub.s32 %v993, %v995
        %v997 = vrot.slane %v983, %v996
        %v998 = vcombine.low %v974, %v990
        %v999 = vcombine.high %v974, %v990
        %v1000 = vcombine.low %v981, %v997
        %v1001 = vcombine.high %v981, %v997
        %v1002 = vlaneseq
        %v1003 = vshrl.u32 %v1002, 7
        %v1004 = vsub.s32 0, %v1003
        %v1005 = vrot.slane %v553, %v1004
        %s1007 = sor.u32 256, 96
        %1008 = vbcast.lane.b32.xlu0 %v1005, %s1007
        %v1009 = vpop.permute.xlu0 %1008
        %v1010 = vlaneseq
        %v1011 = vshrl.u32 %v1010, 7
        %v1012 = vsub.s32 1, %v1011
        %v1013 = vrot.slane %v553, %v1012
        %s1015 = sor.u32 256, 96
        %1016 = vbcast.lane.b32.xlu0 %v1013, %s1015
        %v1017 = vpop.permute.xlu0 %1016
        %v1018 = vlaneseq
        %v1019 = vshrl.u32 %v1018, 7
        %v1020 = vsub.s32 2, %v1019
        %v1021 = vrot.slane %v553, %v1020
        %s1023 = sor.u32 256, 96
        %1024 = vbcast.lane.b32.xlu0 %v1021, %s1023
        %v1025 = vpop.permute.xlu0 %1024
        %v1026 = vlaneseq
        %v1027 = vshrl.u32 %v1026, 7
        %v1028 = vsub.s32 3, %v1027
        %v1029 = vrot.slane %v553, %v1028
        %s1031 = sor.u32 256, 96
        %1032 = vbcast.lane.b32.xlu0 %v1029, %s1031
        %v1033 = vpop.permute.xlu0 %1032
        %v1034 = vlaneseq
        %v1035 = vshrl.u32 %v1034, 7
        %v1036 = vsub.s32 4, %v1035
        %v1037 = vrot.slane %v553, %v1036
        %s1039 = sor.u32 256, 96
        %1040 = vbcast.lane.b32.xlu0 %v1037, %s1039
        %v1041 = vpop.permute.xlu0 %1040
        %v1042 = vlaneseq
        %v1043 = vshrl.u32 %v1042, 7
        %v1044 = vsub.s32 5, %v1043
        %v1045 = vrot.slane %v553, %v1044
        %s1047 = sor.u32 256, 96
        %1048 = vbcast.lane.b32.xlu0 %v1045, %s1047
        %v1049 = vpop.permute.xlu0 %1048
        %v1050 = vlaneseq
        %v1051 = vshrl.u32 %v1050, 7
        %v1052 = vsub.s32 6, %v1051
        %v1053 = vrot.slane %v553, %v1052
        %s1055 = sor.u32 256, 96
        %1056 = vbcast.lane.b32.xlu0 %v1053, %s1055
        %v1057 = vpop.permute.xlu0 %1056
        %v1058 = vlaneseq
        %v1059 = vshrl.u32 %v1058, 7
        %v1060 = vsub.s32 7, %v1059
        %v1061 = vrot.slane %v553, %v1060
        %s1063 = sor.u32 256, 96
        %1064 = vbcast.lane.b32.xlu0 %v1061, %s1063
        %v1065 = vpop.permute.xlu0 %1064
        %v1066 = vcombine.low %v1009, %v1025
        %v1068 = vunpack.c.l.s4 1983009808
        %v1069 = vunpack.c.0.s8 %v1068
        %v1070 = vlaneseq
        %v1071 = vshrl.u32 %v1070, 7
        %v1072 = vsub.s32 %v1069, %v1071
        %v1073 = vrot.slane %v1066, %v1072
        %v1074 = vcombine.low %v1017, %v1033
        %v1076 = vunpack.c.l.s4 1983009808
        %v1077 = vunpack.c.0.s8 %v1076
        %v1078 = vlaneseq
        %v1079 = vshrl.u32 %v1078, 7
        %v1080 = vsub.s32 %v1077, %v1079
        %v1081 = vrot.slane %v1074, %v1080
        %v1082 = vcombine.low %v1041, %v1057
        %v1084 = vunpack.c.l.s4 1983009808
        %v1085 = vunpack.c.0.s8 %v1084
        %v1086 = vlaneseq
        %v1087 = vshrl.u32 %v1086, 7
        %v1088 = vsub.s32 %v1085, %v1087
        %v1089 = vrot.slane %v1082, %v1088
        %v1090 = vcombine.low %v1049, %v1065
        %v1092 = vunpack.c.l.s4 1983009808
        %v1093 = vunpack.c.0.s8 %v1092
        %v1094 = vlaneseq
        %v1095 = vshrl.u32 %v1094, 7
        %v1096 = vsub.s32 %v1093, %v1095
        %v1097 = vrot.slane %v1090, %v1096
        %v1098 = vcombine.low %v1073, %v1081
        %v1099 = vcombine.high %v1073, %v1081
        %v1101 = vunpack.c.l.s4 1934713408
        %v1102 = vunpack.c.0.s8 %v1101
        %v1103 = vlaneseq
        %v1104 = vshrl.u32 %v1103, 7
        %v1105 = vsub.s32 %v1102, %v1104
        %v1106 = vrot.slane %v1098, %v1105
        %v1108 = vunpack.c.l.s4 1934713408
        %v1109 = vunpack.c.0.s8 %v1108
        %v1110 = vlaneseq
        %v1111 = vshrl.u32 %v1110, 7
        %v1112 = vsub.s32 %v1109, %v1111
        %v1113 = vrot.slane %v1099, %v1112
        %v1114 = vcombine.low %v1089, %v1097
        %v1115 = vcombine.high %v1089, %v1097
        %v1117 = vunpack.c.l.s4 1934713408
        %v1118 = vunpack.c.0.s8 %v1117
        %v1119 = vlaneseq
        %v1120 = vshrl.u32 %v1119, 7
        %v1121 = vsub.s32 %v1118, %v1120
        %v1122 = vrot.slane %v1114, %v1121
        %v1124 = vunpack.c.l.s4 1934713408
        %v1125 = vunpack.c.0.s8 %v1124
        %v1126 = vlaneseq
        %v1127 = vshrl.u32 %v1126, 7
        %v1128 = vsub.s32 %v1125, %v1127
        %v1129 = vrot.slane %v1115, %v1128
        %v1130 = vcombine.low %v1106, %v1122
        %v1131 = vcombine.high %v1106, %v1122
        %v1132 = vcombine.low %v1113, %v1129
        %v1133 = vcombine.high %v1113, %v1129
        %v1134 = vpack.c.bf16 %v702, %v702
        %v1135 = vpack.c.bf16 %v703, %v703
        %v1136 = vpack.c.bf16 %v704, %v704
        %v1137 = vpack.c.bf16 %v705, %v705
        %v1138 = vpack.c.bf16 %v850, %v850
        %v1139 = vpack.c.bf16 %v851, %v851
        %v1140 = vpack.c.bf16 %v852, %v852
        %v1141 = vpack.c.bf16 %v853, %v853
        %vm1142 = vcmask 64512
        %v1144 = vsel %vm1142, %v1134, 0
        %v1147 = vsel %vm1142, %v1138, 0
        %1149 = vmatprep.subr.bf16.mxu0 0
        %1150 = vmatpush1.bf16.xpose.msra.mxu0 %v1147
        %1151 = vmatprep.subr.bf16.mxu0 0
        %1152 = vmatpush1.bf16.xpose.msra.mxu0 0
        %1153 = vmatprep.subr.bf16.mxu0 0
        %1154 = vmatpush1.bf16.xpose.msra.mxu0 0
        %1155 = vmatprep.subr.bf16.mxu0 0
        %1156 = vmatpush1.bf16.xpose.msra.mxu0 0
        %1157 = vmatprep.subr.bf16.mxu0 0
        %1158 = vmatpush1.bf16.xpose.msra.mxu0 0
        %1159 = vmatprep.subr.bf16.mxu0 0
        %1160 = vmatpush1.bf16.xpose.msra.mxu0 0
        %1161 = vmatprep.subr.bf16.mxu0 0
        %1162 = vmatpush1.bf16.xpose.msra.mxu0 0
        %1163 = vmatprep.subr.bf16.mxu0 0
        %1164 = vmatpush1.bf16.xpose.msra.mxu0 0
        %1165 = vmatprep.subr.bf16.mxu0 0
        %1166 = vmatpush1.bf16.xpose.msra.mxu0 0
        %1167 = vmatprep.subr.bf16.mxu0 0
        %1168 = vmatpush1.bf16.xpose.msra.mxu0 0
        %1169 = vmatprep.subr.bf16.mxu0 0
        %1170 = vmatpush1.bf16.xpose.msra.mxu0 0
        %1171 = vmatprep.subr.bf16.mxu0 0
        %1172 = vmatpush1.bf16.xpose.msra.mxu0 0
        %1173 = vmatprep.subr.bf16.mxu0 0
        %1174 = vmatpush1.bf16.xpose.msra.mxu0 0
        %1175 = vmatprep.subr.bf16.mxu0 0
        %1176 = vmatpush1.bf16.xpose.msra.mxu0 0
        %1177 = vmatprep.subr.bf16.mxu0 0
        %1178 = vmatpush1.bf16.xpose.msra.mxu0 0
        %1179 = vmatprep.subr.bf16.mxu0 0
        %1180 = vmatpush1.bf16.xpose.msra.mxu0 0
        %1181 = vmatprep.mubr.bf16.mxu0 0
        %1182 = vmatmul.mubr.bf16.gmra.mrb[0].mxu0 %v1144
        %v1183 = vpop.f32.mrb[0].mxu0
        %v1184 = vadd.f32 0.0, %v1183
        %v1185 = vpop.f32.mrb[0].mxu0
        %v1186 = vpop.f32.mrb[0].mxu0
        %v1187 = vpop.f32.mrb[0].mxu0
        %1188 = vdwg.mxu0
        %v1190 = vsel %vm1142, %v1135, 0
        %v1193 = vsel %vm1142, %v1139, 0
        %1195 = vmatprep.subr.bf16.mxu0 0
        %1196 = vmatpush1.bf16.xpose.msra.mxu0 %v1193
        %1197 = vmatprep.subr.bf16.mxu0 0
        %1198 = vmatpush1.bf16.xpose.msra.mxu0 0
        %1199 = vmatprep.subr.bf16.mxu0 0
        %1200 = vmatpush1.bf16.xpose.msra.mxu0 0
        %1201 = vmatprep.subr.bf16.mxu0 0
        %1202 = vmatpush1.bf16.xpose.msra.mxu0 0
        %1203 = vmatprep.subr.bf16.mxu0 0
        %1204 = vmatpush1.bf16.xpose.msra.mxu0 0
        %1205 = vmatprep.subr.bf16.mxu0 0
        %1206 = vmatpush1.bf16.xpose.msra.mxu0 0
        %1207 = vmatprep.subr.bf16.mxu0 0
        %1208 = vmatpush1.bf16.xpose.msra.mxu0 0
        %1209 = vmatprep.subr.bf16.mxu0 0
        %1210 = vmatpush1.bf16.xpose.msra.mxu0 0
        %1211 = vmatprep.subr.bf16.mxu0 0
        %1212 = vmatpush1.bf16.xpose.msra.mxu0 0
        %1213 = vmatprep.subr.bf16.mxu0 0
        %1214 = vmatpush1.bf16.xpose.msra.mxu0 0
        %1215 = vmatprep.subr.bf16.mxu0 0
        %1216 = vmatpush1.bf16.xpose.msra.mxu0 0
        %1217 = vmatprep.subr.bf16.mxu0 0
        %1218 = vmatpush1.bf16.xpose.msra.mxu0 0
        %1219 = vmatprep.subr.bf16.mxu0 0
        %1220 = vmatpush1.bf16.xpose.msra.mxu0 0
        %1221 = vmatprep.subr.bf16.mxu0 0
        %1222 = vmatpush1.bf16.xpose.msra.mxu0 0
        %1223 = vmatprep.subr.bf16.mxu0 0
        %1224 = vmatpush1.bf16.xpose.msra.mxu0 0
        %1225 = vmatprep.subr.bf16.mxu0 0
        %1226 = vmatpush1.bf16.xpose.msra.mxu0 0
        %1227 = vmatprep.mubr.bf16.mxu0 0
        %1228 = vmatmul.mubr.bf16.gmra.mrb[0].mxu0 %v1190
        %v1229 = vpop.f32.mrb[0].mxu0
        %v1230 = vadd.f32 0.0, %v1229
        %v1231 = vpop.f32.mrb[0].mxu0
        %v1232 = vpop.f32.mrb[0].mxu0
        %v1233 = vpop.f32.mrb[0].mxu0
        %1234 = vdwg.mxu0
        %v1236 = vsel %vm1142, %v1136, 0
        %v1239 = vsel %vm1142, %v1140, 0
        %1241 = vmatprep.subr.bf16.mxu0 0
        %1242 = vmatpush1.bf16.xpose.msra.mxu0 %v1239
        %1243 = vmatprep.subr.bf16.mxu0 0
        %1244 = vmatpush1.bf16.xpose.msra.mxu0 0
        %1245 = vmatprep.subr.bf16.mxu0 0
        %1246 = vmatpush1.bf16.xpose.msra.mxu0 0
        %1247 = vmatprep.subr.bf16.mxu0 0
        %1248 = vmatpush1.bf16.xpose.msra.mxu0 0
        %1249 = vmatprep.subr.bf16.mxu0 0
        %1250 = vmatpush1.bf16.xpose.msra.mxu0 0
        %1251 = vmatprep.subr.bf16.mxu0 0
        %1252 = vmatpush1.bf16.xpose.msra.mxu0 0
        %1253 = vmatprep.subr.bf16.mxu0 0
        %1254 = vmatpush1.bf16.xpose.msra.mxu0 0
        %1255 = vmatprep.subr.bf16.mxu0 0
        %1256 = vmatpush1.bf16.xpose.msra.mxu0 0
        %1257 = vmatprep.subr.bf16.mxu0 0
        %1258 = vmatpush1.bf16.xpose.msra.mxu0 0
        %1259 = vmatprep.subr.bf16.mxu0 0
        %1260 = vmatpush1.bf16.xpose.msra.mxu0 0
        %1261 = vmatprep.subr.bf16.mxu0 0
        %1262 = vmatpush1.bf16.xpose.msra.mxu0 0
        %1263 = vmatprep.subr.bf16.mxu0 0
        %1264 = vmatpush1.bf16.xpose.msra.mxu0 0
        %1265 = vmatprep.subr.bf16.mxu0 0
        %1266 = vmatpush1.bf16.xpose.msra.mxu0 0
        %1267 = vmatprep.subr.bf16.mxu0 0
        %1268 = vmatpush1.bf16.xpose.msra.mxu0 0
        %1269 = vmatprep.subr.bf16.mxu0 0
        %1270 = vmatpush1.bf16.xpose.msra.mxu0 0
        %1271 = vmatprep.subr.bf16.mxu0 0
        %1272 = vmatpush1.bf16.xpose.msra.mxu0 0
        %1273 = vmatprep.mubr.bf16.mxu0 0
        %1274 = vmatmul.mubr.bf16.gmra.mrb[0].mxu0 %v1236
        %v1275 = vpop.f32.mrb[0].mxu0
        %v1276 = vadd.f32 0.0, %v1275
        %v1277 = vpop.f32.mrb[0].mxu0
        %v1278 = vpop.f32.mrb[0].mxu0
        %v1279 = vpop.f32.mrb[0].mxu0
        %1280 = vdwg.mxu0
        %v1282 = vsel %vm1142, %v1137, 0
        %v1285 = vsel %vm1142, %v1141, 0
        %1287 = vmatprep.subr.bf16.mxu0 0
        %1288 = vmatpush1.bf16.xpose.msra.mxu0 %v1285
        %1289 = vmatprep.subr.bf16.mxu0 0
        %1290 = vmatpush1.bf16.xpose.msra.mxu0 0
        %1291 = vmatprep.subr.bf16.mxu0 0
        %1292 = vmatpush1.bf16.xpose.msra.mxu0 0
        %1293 = vmatprep.subr.bf16.mxu0 0
        %1294 = vmatpush1.bf16.xpose.msra.mxu0 0
        %1295 = vmatprep.subr.bf16.mxu0 0
        %1296 = vmatpush1.bf16.xpose.msra.mxu0 0
        %1297 = vmatprep.subr.bf16.mxu0 0
        %1298 = vmatpush1.bf16.xpose.msra.mxu0 0
        %1299 = vmatprep.subr.bf16.mxu0 0
        %1300 = vmatpush1.bf16.xpose.msra.mxu0 0
        %1301 = vmatprep.subr.bf16.mxu0 0
        %1302 = vmatpush1.bf16.xpose.msra.mxu0 0
        %1303 = vmatprep.subr.bf16.mxu0 0
        %1304 = vmatpush1.bf16.xpose.msra.mxu0 0
        %1305 = vmatprep.subr.bf16.mxu0 0
        %1306 = vmatpush1.bf16.xpose.msra.mxu0 0
        %1307 = vmatprep.subr.bf16.mxu0 0
        %1308 = vmatpush1.bf16.xpose.msra.mxu0 0
        %1309 = vmatprep.subr.bf16.mxu0 0
        %1310 = vmatpush1.bf16.xpose.msra.mxu0 0
        %1311 = vmatprep.subr.bf16.mxu0 0
        %1312 = vmatpush1.bf16.xpose.msra.mxu0 0
        %1313 = vmatprep.subr.bf16.mxu0 0
        %1314 = vmatpush1.bf16.xpose.msra.mxu0 0
        %1315 = vmatprep.subr.bf16.mxu0 0
        %1316 = vmatpush1.bf16.xpose.msra.mxu0 0
        %1317 = vmatprep.subr.bf16.mxu0 0
        %1318 = vmatpush1.bf16.xpose.msra.mxu0 0
        %1319 = vmatprep.mubr.bf16.mxu0 0
        %1320 = vmatmul.mubr.bf16.gmra.mrb[0].mxu0 %v1282
        %v1321 = vpop.f32.mrb[0].mxu0
        %v1322 = vadd.f32 0.0, %v1321
        %v1323 = vpop.f32.mrb[0].mxu0
        %v1324 = vpop.f32.mrb[0].mxu0
        %v1325 = vpop.f32.mrb[0].mxu0
        %1326 = vdwg.mxu0
        %v1327 = vsel %vm1142, %v1184, -inf
        %1328 = vmax.xlane.f32.xlu0 %v1327
        %v1329 = vpop.xlane.xlu0 %1328
        %v1330 = vsel %vm1142, %v1230, -inf
        %1331 = vmax.xlane.f32.xlu0 %v1330
        %v1332 = vpop.xlane.xlu0 %1331
        %v1333 = vsel %vm1142, %v1276, -inf
        %1334 = vmax.xlane.f32.xlu0 %v1333
        %v1335 = vpop.xlane.xlu0 %1334
        %v1336 = vsel %vm1142, %v1322, -inf
        %1337 = vmax.xlane.f32.xlu0 %v1336
        %v1338 = vpop.xlane.xlu0 %1337
        %v1339 = vsub.f32 %v1184, %v1329
        %v1340 = vsub.f32 %v1230, %v1332
        %v1341 = vsub.f32 %v1276, %v1335
        %v1342 = vsub.f32 %v1322, %v1338
        %v1343 = vmul.f32 %v1339, 1.442695
        %v1344 = vpow.pop %v1343
        %v1345 = vmul.f32 %v1340, 1.442695
        %v1346 = vpow.pop %v1345
        %v1347 = vmul.f32 %v1341, 1.442695
        %v1348 = vpow.pop %v1347
        %v1349 = vmul.f32 %v1342, 1.442695
        %v1350 = vpow.pop %v1349
        %v1351 = vsel %vm1142, %v1344, 0.0
        %1352 = vadd.xlane.f32.xlu0 %v1351
        %v1353 = vpop.xlane.xlu0 %1352
        %v1354 = vsel %vm1142, %v1346, 0.0
        %1355 = vadd.xlane.f32.xlu0 %v1354
        %v1356 = vpop.xlane.xlu0 %1355
        %v1357 = vsel %vm1142, %v1348, 0.0
        %1358 = vadd.xlane.f32.xlu0 %v1357
        %v1359 = vpop.xlane.xlu0 %1358
        %v1360 = vsel %vm1142, %v1350, 0.0
        %1361 = vadd.xlane.f32.xlu0 %v1360
        %v1362 = vpop.xlane.xlu0 %1361
        %v1363 = vrcp.pop %v1353
        %v1364 = vrcp.pop %v1356
        %v1365 = vrcp.pop %v1359
        %v1366 = vrcp.pop %v1362
        %v1367 = vmul.f32 %v1344, %v1363
        %v1368 = vmul.f32 %v1346, %v1364
        %v1369 = vmul.f32 %v1348, %v1365
        %v1370 = vmul.f32 %v1350, %v1366
        %v1371 = vpack.c.bf16 %v1367, %v1367
        %v1372 = vpack.c.bf16 %v1368, %v1368
        %v1373 = vpack.c.bf16 %v1369, %v1369
        %v1374 = vpack.c.bf16 %v1370, %v1370
        %vm1375 = vcmask 60416
        %1376 = vst.msk [vmem:[%s425] sm:$0xf] %vm1375, %v1371
        %1377 = vst.msk [vmem:[%s425 + $0x4] sm:$0xf] %vm1375, %v1372
        %1378 = vst.msk [vmem:[%s425 + $0x8] sm:$0xf] %vm1375, %v1373
        %1379 = vst.msk [vmem:[%s425 + $0xc] sm:$0xf] %vm1375, %v1374
        %v1380 = vrcp.pop %v1130
        %v1381 = vmul.f32 1.0, %v1380
        %v1382 = vrcp.pop %v1131
        %v1383 = vmul.f32 1.0, %v1382
        %v1384 = vrcp.pop %v1132
        %v1385 = vmul.f32 1.0, %v1384
        %v1386 = vrcp.pop %v1133
        %v1387 = vmul.f32 1.0, %v1386
        %v1388 = vmul.f32 %v1381, 0.3989423
        %v1389 = vmul.f32 %v1383, 0.3989423
        %v1390 = vmul.f32 %v1385, 0.3989423
        %v1391 = vmul.f32 %v1387, 0.3989423
        %v1392 = vld [vmem:[#allocation5] sm:$0xff]
        %v1393 = vmul.f32 %v1381, %v1381
        %v1394 = vmul.f32 %v1383, %v1383
        %v1395 = vmul.f32 %v1385, %v1385
        %v1396 = vmul.f32 %v1387, %v1387
        %1398 = vset.pattern.permute.xlu0 0
        %1399 = vperm.xlu0 %1398, %v1393
        %v1400 = vpop.permute.xlu0 %1399
        %1403 = vset.pattern.permute.xlu0 0
        %1404 = vperm.xlu0 %1403, %v1394
        %v1405 = vpop.permute.xlu0 %1404
        %1408 = vset.pattern.permute.xlu0 0
        %1409 = vperm.xlu0 %1408, %v1395
        %v1410 = vpop.permute.xlu0 %1409
        %1413 = vset.pattern.permute.xlu0 0
        %1414 = vperm.xlu0 %1413, %v1396
        %v1415 = vpop.permute.xlu0 %1414
        %v1417 = vmul.f32 %v1392, %v1400
        %v1418 = vmul.f32 %v1392, %v1405
        %v1419 = vmul.f32 %v1392, %v1410
        %v1420 = vmul.f32 %v1392, %v1415
        %v1421 = vmul.f32 %v1417, 1.442695
        %v1422 = vpow.pop %v1421
        %v1423 = vmul.f32 %v1418, 1.442695
        %v1424 = vpow.pop %v1423
        %v1425 = vmul.f32 %v1419, 1.442695
        %v1426 = vpow.pop %v1425
        %v1427 = vmul.f32 %v1420, 1.442695
        %v1428 = vpow.pop %v1427
        %1430 = vset.pattern.permute.xlu0 0
        %1431 = vperm.xlu0 %1430, %v1388
        %v1432 = vpop.permute.xlu0 %1431
        %1435 = vset.pattern.permute.xlu0 0
        %1436 = vperm.xlu0 %1435, %v1389
        %v1437 = vpop.permute.xlu0 %1436
        %1440 = vset.pattern.permute.xlu0 0
        %1441 = vperm.xlu0 %1440, %v1390
        %v1442 = vpop.permute.xlu0 %1441
        %1445 = vset.pattern.permute.xlu0 0
        %1446 = vperm.xlu0 %1445, %v1391
        %v1447 = vpop.permute.xlu0 %1446
        %v1449 = vmul.f32 %v1432, %v1422
        %v1450 = vmul.f32 %v1437, %v1424
        %v1451 = vmul.f32 %v1442, %v1426
        %v1452 = vmul.f32 %v1447, %v1428
        %v1453 = vpack.c.bf16 %v1449, %v1449
        %v1454 = vpack.c.bf16 %v1450, %v1450
        %v1455 = vpack.c.bf16 %v1451, %v1451
        %v1456 = vpack.c.bf16 %v1452, %v1452
        %1457 = vst.msk [vmem:[%s432] sm:$0xf] %vm1375, %v1453
        %1458 = vst.msk [vmem:[%s432 + $0x4] sm:$0xf] %vm1375, %v1454
        %1459 = vst.msk [vmem:[%s432 + $0x8] sm:$0xf] %vm1375, %v1455
        %1460 = vst.msk [vmem:[%s432 + $0xc] sm:$0xf] %vm1375, %v1456
        %v1461 = vpack.c.bf16 %v998, %v998
        %v1462 = vpack.c.bf16 %v999, %v999
        %v1463 = vpack.c.bf16 %v1000, %v1000
        %v1464 = vpack.c.bf16 %v1001, %v1001
        %v1466 = vsel %vm1142, %v1371, 0
        %vm1468 = vcmask 1043456
        %v1470 = vsel %vm1468, %v1461, 0
        %1472 = vmatprep.subr.bf16.mxu0 0
        %1473 = vmatpush1.bf16.msra.mxu0 %v1470
        %1474 = vmatprep.subr.bf16.mxu0 0
        %1475 = vmatpush1.bf16.msra.mxu0 0
        %1476 = vmatprep.subr.bf16.mxu0 0
        %1477 = vmatpush1.bf16.msra.mxu0 0
        %1478 = vmatprep.subr.bf16.mxu0 0
        %1479 = vmatpush1.bf16.msra.mxu0 0
        %1480 = vmatprep.subr.bf16.mxu0 0
        %1481 = vmatpush1.bf16.msra.mxu0 0
        %1482 = vmatprep.subr.bf16.mxu0 0
        %1483 = vmatpush1.bf16.msra.mxu0 0
        %1484 = vmatprep.subr.bf16.mxu0 0
        %1485 = vmatpush1.bf16.msra.mxu0 0
        %1486 = vmatprep.subr.bf16.mxu0 0
        %1487 = vmatpush1.bf16.msra.mxu0 0
        %1488 = vmatprep.subr.bf16.mxu0 0
        %1489 = vmatpush1.bf16.msra.mxu0 0
        %1490 = vmatprep.subr.bf16.mxu0 0
        %1491 = vmatpush1.bf16.msra.mxu0 0
        %1492 = vmatprep.subr.bf16.mxu0 0
        %1493 = vmatpush1.bf16.msra.mxu0 0
        %1494 = vmatprep.subr.bf16.mxu0 0
        %1495 = vmatpush1.bf16.msra.mxu0 0
        %1496 = vmatprep.subr.bf16.mxu0 0
        %1497 = vmatpush1.bf16.msra.mxu0 0
        %1498 = vmatprep.subr.bf16.mxu0 0
        %1499 = vmatpush1.bf16.msra.mxu0 0
        %1500 = vmatprep.subr.bf16.mxu0 0
        %1501 = vmatpush1.bf16.msra.mxu0 0
        %1502 = vmatprep.subr.bf16.mxu0 0
        %1503 = vmatpush1.bf16.msra.mxu0 0
        %1504 = vmatprep.mubr.bf16.mxu0 0
        %1505 = vmatmul.mubr.bf16.gmra.mrb[0].mxu0 %v1466
        %v1506 = vpop.f32.mrb[0].mxu0
        %v1507 = vadd.f32 0.0, %v1506
        %v1508 = vpop.f32.mrb[0].mxu0
        %v1509 = vpop.f32.mrb[0].mxu0
        %v1510 = vpop.f32.mrb[0].mxu0
        %1511 = vdwg.mxu0
        %v1513 = vsel %vm1142, %v1372, 0
        %v1516 = vsel %vm1468, %v1462, 0
        %1518 = vmatprep.subr.bf16.mxu0 0
        %1519 = vmatpush1.bf16.msra.mxu0 %v1516
        %1520 = vmatprep.subr.bf16.mxu0 0
        %1521 = vmatpush1.bf16.msra.mxu0 0
        %1522 = vmatprep.subr.bf16.mxu0 0
        %1523 = vmatpush1.bf16.msra.mxu0 0
        %1524 = vmatprep.subr.bf16.mxu0 0
        %1525 = vmatpush1.bf16.msra.mxu0 0
        %1526 = vmatprep.subr.bf16.mxu0 0
        %1527 = vmatpush1.bf16.msra.mxu0 0
        %1528 = vmatprep.subr.bf16.mxu0 0
        %1529 = vmatpush1.bf16.msra.mxu0 0
        %1530 = vmatprep.subr.bf16.mxu0 0
        %1531 = vmatpush1.bf16.msra.mxu0 0
        %1532 = vmatprep.subr.bf16.mxu0 0
        %1533 = vmatpush1.bf16.msra.mxu0 0
        %1534 = vmatprep.subr.bf16.mxu0 0
        %1535 = vmatpush1.bf16.msra.mxu0 0
        %1536 = vmatprep.subr.bf16.mxu0 0
        %1537 = vmatpush1.bf16.msra.mxu0 0
        %1538 = vmatprep.subr.bf16.mxu0 0
        %1539 = vmatpush1.bf16.msra.mxu0 0
        %1540 = vmatprep.subr.bf16.mxu0 0
        %1541 = vmatpush1.bf16.msra.mxu0 0
        %1542 = vmatprep.subr.bf16.mxu0 0
        %1543 = vmatpush1.bf16.msra.mxu0 0
        %1544 = vmatprep.subr.bf16.mxu0 0
        %1545 = vmatpush1.bf16.msra.mxu0 0
        %1546 = vmatprep.subr.bf16.mxu0 0
        %1547 = vmatpush1.bf16.msra.mxu0 0
        %1548 = vmatprep.subr.bf16.mxu0 0
        %1549 = vmatpush1.bf16.msra.mxu0 0
        %1550 = vmatprep.mubr.bf16.mxu0 0
        %1551 = vmatmul.mubr.bf16.gmra.mrb[0].mxu0 %v1513
        %v1552 = vpop.f32.mrb[0].mxu0
        %v1553 = vadd.f32 0.0, %v1552
        %v1554 = vpop.f32.mrb[0].mxu0
        %v1555 = vpop.f32.mrb[0].mxu0
        %v1556 = vpop.f32.mrb[0].mxu0
        %1557 = vdwg.mxu0
        %v1559 = vsel %vm1142, %v1373, 0
        %v1562 = vsel %vm1468, %v1463, 0
        %1564 = vmatprep.subr.bf16.mxu0 0
        %1565 = vmatpush1.bf16.msra.mxu0 %v1562
        %1566 = vmatprep.subr.bf16.mxu0 0
        %1567 = vmatpush1.bf16.msra.mxu0 0
        %1568 = vmatprep.subr.bf16.mxu0 0
        %1569 = vmatpush1.bf16.msra.mxu0 0
        %1570 = vmatprep.subr.bf16.mxu0 0
        %1571 = vmatpush1.bf16.msra.mxu0 0
        %1572 = vmatprep.subr.bf16.mxu0 0
        %1573 = vmatpush1.bf16.msra.mxu0 0
        %1574 = vmatprep.subr.bf16.mxu0 0
        %1575 = vmatpush1.bf16.msra.mxu0 0
        %1576 = vmatprep.subr.bf16.mxu0 0
        %1577 = vmatpush1.bf16.msra.mxu0 0
        %1578 = vmatprep.subr.bf16.mxu0 0
        %1579 = vmatpush1.bf16.msra.mxu0 0
        %1580 = vmatprep.subr.bf16.mxu0 0
        %1581 = vmatpush1.bf16.msra.mxu0 0
        %1582 = vmatprep.subr.bf16.mxu0 0
        %1583 = vmatpush1.bf16.msra.mxu0 0
        %1584 = vmatprep.subr.bf16.mxu0 0
        %1585 = vmatpush1.bf16.msra.mxu0 0
        %1586 = vmatprep.subr.bf16.mxu0 0
        %1587 = vmatpush1.bf16.msra.mxu0 0
        %1588 = vmatprep.subr.bf16.mxu0 0
        %1589 = vmatpush1.bf16.msra.mxu0 0
        %1590 = vmatprep.subr.bf16.mxu0 0
        %1591 = vmatpush1.bf16.msra.mxu0 0
        %1592 = vmatprep.subr.bf16.mxu0 0
        %1593 = vmatpush1.bf16.msra.mxu0 0
        %1594 = vmatprep.subr.bf16.mxu0 0
        %1595 = vmatpush1.bf16.msra.mxu0 0
        %1596 = vmatprep.mubr.bf16.mxu0 0
        %1597 = vmatmul.mubr.bf16.gmra.mrb[0].mxu0 %v1559
        %v1598 = vpop.f32.mrb[0].mxu0
        %v1599 = vadd.f32 0.0, %v1598
        %v1600 = vpop.f32.mrb[0].mxu0
        %v1601 = vpop.f32.mrb[0].mxu0
        %v1602 = vpop.f32.mrb[0].mxu0
        %1603 = vdwg.mxu0
        %v1605 = vsel %vm1142, %v1374, 0
        %v1608 = vsel %vm1468, %v1464, 0
        %1610 = vmatprep.subr.bf16.mxu0 0
        %1611 = vmatpush1.bf16.msra.mxu0 %v1608
        %1612 = vmatprep.subr.bf16.mxu0 0
        %1613 = vmatpush1.bf16.msra.mxu0 0
        %1614 = vmatprep.subr.bf16.mxu0 0
        %1615 = vmatpush1.bf16.msra.mxu0 0
        %1616 = vmatprep.subr.bf16.mxu0 0
        %1617 = vmatpush1.bf16.msra.mxu0 0
        %1618 = vmatprep.subr.bf16.mxu0 0
        %1619 = vmatpush1.bf16.msra.mxu0 0
        %1620 = vmatprep.subr.bf16.mxu0 0
        %1621 = vmatpush1.bf16.msra.mxu0 0
        %1622 = vmatprep.subr.bf16.mxu0 0
        %1623 = vmatpush1.bf16.msra.mxu0 0
        %1624 = vmatprep.subr.bf16.mxu0 0
        %1625 = vmatpush1.bf16.msra.mxu0 0
        %1626 = vmatprep.subr.bf16.mxu0 0
        %1627 = vmatpush1.bf16.msra.mxu0 0
        %1628 = vmatprep.subr.bf16.mxu0 0
        %1629 = vmatpush1.bf16.msra.mxu0 0
        %1630 = vmatprep.subr.bf16.mxu0 0
        %1631 = vmatpush1.bf16.msra.mxu0 0
        %1632 = vmatprep.subr.bf16.mxu0 0
        %1633 = vmatpush1.bf16.msra.mxu0 0
        %1634 = vmatprep.subr.bf16.mxu0 0
        %1635 = vmatpush1.bf16.msra.mxu0 0
        %1636 = vmatprep.subr.bf16.mxu0 0
        %1637 = vmatpush1.bf16.msra.mxu0 0
        %1638 = vmatprep.subr.bf16.mxu0 0
        %1639 = vmatpush1.bf16.msra.mxu0 0
        %1640 = vmatprep.subr.bf16.mxu0 0
        %1641 = vmatpush1.bf16.msra.mxu0 0
        %1642 = vmatprep.mubr.bf16.mxu0 0
        %1643 = vmatmul.mubr.bf16.gmra.mrb[0].mxu0 %v1605
        %v1644 = vpop.f32.mrb[0].mxu0
        %v1645 = vadd.f32 0.0, %v1644
        %v1646 = vpop.f32.mrb[0].mxu0
        %v1647 = vpop.f32.mrb[0].mxu0
        %v1648 = vpop.f32.mrb[0].mxu0
        %1649 = vdwg.mxu0
        %v1650 = vcombine.low %v1507, %v1599
        %v1651 = vcombine.high %v1507, %v1599
        %v1653 = vunpack.c.l.s4 1983009808
        %v1654 = vunpack.c.0.s8 %v1653
        %v1655 = vlaneseq
        %v1656 = vshrl.u32 %v1655, 7
        %v1657 = vsub.s32 %v1654, %v1656
        %v1658 = vrot.slane %v1650, %v1657
        %v1660 = vunpack.c.l.s4 1983009808
        %v1661 = vunpack.c.0.s8 %v1660
        %v1662 = vlaneseq
        %v1663 = vshrl.u32 %v1662, 7
        %v1664 = vsub.s32 %v1661, %v1663
        %v1665 = vrot.slane %v1651, %v1664
        %v1666 = vcombine.low %v1553, %v1645
        %v1667 = vcombine.high %v1553, %v1645
        %v1669 = vunpack.c.l.s4 1983009808
        %v1670 = vunpack.c.0.s8 %v1669
        %v1671 = vlaneseq
        %v1672 = vshrl.u32 %v1671, 7
        %v1673 = vsub.s32 %v1670, %v1672
        %v1674 = vrot.slane %v1666, %v1673
        %v1676 = vunpack.c.l.s4 1983009808
        %v1677 = vunpack.c.0.s8 %v1676
        %v1678 = vlaneseq
        %v1679 = vshrl.u32 %v1678, 7
        %v1680 = vsub.s32 %v1677, %v1679
        %v1681 = vrot.slane %v1667, %v1680
        %v1682 = vcombine.low %v1658, %v1674
        %v1683 = vcombine.high %v1658, %v1674
        %v1685 = vunpack.c.l.s4 1934713408
        %v1686 = vunpack.c.0.s8 %v1685
        %v1687 = vlaneseq
        %v1688 = vshrl.u32 %v1687, 7
        %v1689 = vsub.s32 %v1686, %v1688
        %v1690 = vrot.slane %v1682, %v1689
        %v1692 = vunpack.c.l.s4 1934713408
        %v1693 = vunpack.c.0.s8 %v1692
        %v1694 = vlaneseq
        %v1695 = vshrl.u32 %v1694, 7
        %v1696 = vsub.s32 %v1693, %v1695
        %v1697 = vrot.slane %v1683, %v1696
        %v1698 = vcombine.low %v1665, %v1681
        %v1699 = vcombine.high %v1665, %v1681
        %v1701 = vunpack.c.l.s4 1934713408
        %v1702 = vunpack.c.0.s8 %v1701
        %v1703 = vlaneseq
        %v1704 = vshrl.u32 %v1703, 7
        %v1705 = vsub.s32 %v1702, %v1704
        %v1706 = vrot.slane %v1698, %v1705
        %v1708 = vunpack.c.l.s4 1934713408
        %v1709 = vunpack.c.0.s8 %v1708
        %v1710 = vlaneseq
        %v1711 = vshrl.u32 %v1710, 7
        %v1712 = vsub.s32 %v1709, %v1711
        %v1713 = vrot.slane %v1699, %v1712
        %v1714 = vcombine.high %v1690, 0.0
        %v1715 = vcombine.high %v1697, 0.0
        %v1716 = vcombine.high %v1706, 0.0
        %v1717 = vcombine.high %v1713, 0.0
        %v1718 = vcombine.low %v1690, %v1697
        %v1720 = vunpack.c.l.s4 1983009808
        %v1721 = vunpack.c.0.s8 %v1720
        %v1722 = vlaneseq
        %v1723 = vshrl.u32 %v1722, 7
        %v1724 = vsub.s32 %v1721, %v1723
        %v1725 = vrot.slane %v1718, %v1724
        %v1726 = vcombine.low %v1714, %v1715
        %v1728 = vunpack.c.l.s4 1983009808
        %v1729 = vunpack.c.0.s8 %v1728
        %v1730 = vlaneseq
        %v1731 = vshrl.u32 %v1730, 7
        %v1732 = vsub.s32 %v1729, %v1731
        %v1733 = vrot.slane %v1726, %v1732
        %v1734 = vcombine.low %v1706, %v1713
        %v1736 = vunpack.c.l.s4 1983009808
        %v1737 = vunpack.c.0.s8 %v1736
        %v1738 = vlaneseq
        %v1739 = vshrl.u32 %v1738, 7
        %v1740 = vsub.s32 %v1737, %v1739
        %v1741 = vrot.slane %v1734, %v1740
        %v1742 = vcombine.low %v1716, %v1717
        %v1744 = vunpack.c.l.s4 1983009808
        %v1745 = vunpack.c.0.s8 %v1744
        %v1746 = vlaneseq
        %v1747 = vshrl.u32 %v1746, 7
        %v1748 = vsub.s32 %v1745, %v1747
        %v1749 = vrot.slane %v1742, %v1748
        %v1750 = vcombine.low %v1725, %v1733
        %v1751 = vcombine.high %v1725, %v1733
        %v1753 = vunpack.c.l.s4 1934713408
        %v1754 = vunpack.c.0.s8 %v1753
        %v1755 = vlaneseq
        %v1756 = vshrl.u32 %v1755, 7
        %v1757 = vsub.s32 %v1754, %v1756
        %v1758 = vrot.slane %v1750, %v1757
        %v1760 = vunpack.c.l.s4 1934713408
        %v1761 = vunpack.c.0.s8 %v1760
        %v1762 = vlaneseq
        %v1763 = vshrl.u32 %v1762, 7
        %v1764 = vsub.s32 %v1761, %v1763
        %v1765 = vrot.slane %v1751, %v1764
        %v1766 = vcombine.low %v1741, %v1749
        %v1767 = vcombine.high %v1741, %v1749
        %v1769 = vunpack.c.l.s4 1934713408
        %v1770 = vunpack.c.0.s8 %v1769
        %v1771 = vlaneseq
        %v1772 = vshrl.u32 %v1771, 7
        %v1773 = vsub.s32 %v1770, %v1772
        %v1774 = vrot.slane %v1766, %v1773
        %v1776 = vunpack.c.l.s4 1934713408
        %v1777 = vunpack.c.0.s8 %v1776
        %v1778 = vlaneseq
        %v1779 = vshrl.u32 %v1778, 7
        %v1780 = vsub.s32 %v1777, %v1779
        %v1781 = vrot.slane %v1767, %v1780
        %v1782 = vcombine.low %v1758, %v1774
        %v1783 = vcombine.high %v1758, %v1774
        %v1784 = vcombine.low %v1765, %v1781
        %v1785 = vcombine.high %v1765, %v1781
        %1787 = vrot.lane.b32.xlu0 %v1783, 8
        %v1788 = vpop.permute.xlu0 %1787
        %1791 = vrot.lane.b32.xlu0 %v1784, 16
        %v1792 = vpop.permute.xlu0 %1791
        %1795 = vrot.lane.b32.xlu0 %v1785, 24
        %v1796 = vpop.permute.xlu0 %1795
        %v1798 = vsel %vm1142, %v1782, %v1788
        %vm1799 = vcmask 130048
        %v1800 = vsel %vm1799, %v1798, %v1792
        %vm1801 = vcmask 195584
        %v1802 = vsel %vm1801, %v1800, %v1796
        %v1803 = vld [vmem:[%s5] sm:$0xff]
        %v1804 = vld [vmem:[%s5 + $0x8] sm:$0xff]
        %v1805 = vld [vmem:[%s5 + $0x10] sm:$0xff]
        %v1806 = vld [vmem:[%s5 + $0x18] sm:$0xff]
        %v1807 = vld [vmem:[%s6] sm:$0x1]
        %v1809 = vlaneseq
        %v1810 = vshrl.u32 %v1809, 7
        %v1811 = vsub.s32 0, %v1810
        %v1812 = vrot.slane %v1807, %v1811
        %v1815 = vsel %vm462, %v1802, 0
        %1817 = vmatprep.subr.mxu0 0.0
        %1818 = vmatpush1.msra.mxu0 %v1803
        %1819 = vmatprep.subr.mxu0 0.0
        %1820 = vmatpush1.msra.mxu0 %v1804
        %1821 = vmatprep.subr.mxu0 0.0
        %1822 = vmatpush1.msra.mxu0 %v1805
        %1823 = vmatprep.subr.mxu0 0.0
        %1824 = vmatpush1.msra.mxu0 %v1806
        %1825 = vmatprep.subr.mxu0 0.0
        %1826 = vmatpush1.msra.mxu0 0.0
        %1827 = vmatprep.subr.mxu0 0.0
        %1828 = vmatpush1.msra.mxu0 0.0
        %1829 = vmatprep.subr.mxu0 0.0
        %1830 = vmatpush1.msra.mxu0 0.0
        %1831 = vmatprep.subr.mxu0 0.0
        %1832 = vmatpush1.msra.mxu0 0.0
        %1833 = vmatprep.subr.mxu0 0.0
        %1834 = vmatpush1.msra.mxu0 0.0
        %1835 = vmatprep.subr.mxu0 0.0
        %1836 = vmatpush1.msra.mxu0 0.0
        %1837 = vmatprep.subr.mxu0 0.0
        %1838 = vmatpush1.msra.mxu0 0.0
        %1839 = vmatprep.subr.mxu0 0.0
        %1840 = vmatpush1.msra.mxu0 0.0
        %1841 = vmatprep.subr.mxu0 0.0
        %1842 = vmatpush1.msra.mxu0 0.0
        %1843 = vmatprep.subr.mxu0 0.0
        %1844 = vmatpush1.msra.mxu0 0.0
        %1845 = vmatprep.subr.mxu0 0.0
        %1846 = vmatpush1.msra.mxu0 0.0
        %1847 = vmatprep.subr.mxu0 0.0
        %1848 = vmatpush1.msra.mxu0 0.0
        %1849 = vmatprep.subr.mxu0 0.0
        %1850 = vmatpush1.msra.mxu0 0.0
        %1851 = vmatprep.subr.mxu0 0.0
        %1852 = vmatpush1.msra.mxu0 0.0
        %1853 = vmatprep.subr.mxu0 0.0
        %1854 = vmatpush1.msra.mxu0 0.0
        %1855 = vmatprep.subr.mxu0 0.0
        %1856 = vmatpush1.msra.mxu0 0.0
        %1857 = vmatprep.subr.mxu0 0.0
        %1858 = vmatpush1.msra.mxu0 0.0
        %1859 = vmatprep.subr.mxu0 0.0
        %1860 = vmatpush1.msra.mxu0 0.0
        %1861 = vmatprep.subr.mxu0 0.0
        %1862 = vmatpush1.msra.mxu0 0.0
        %1863 = vmatprep.subr.mxu0 0.0
        %1864 = vmatpush1.msra.mxu0 0.0
        %1865 = vmatprep.subr.mxu0 0.0
        %1866 = vmatpush1.msra.mxu0 0.0
        %1867 = vmatprep.subr.mxu0 0.0
        %1868 = vmatpush1.msra.mxu0 0.0
        %1869 = vmatprep.subr.mxu0 0.0
        %1870 = vmatpush1.msra.mxu0 0.0
        %1871 = vmatprep.subr.mxu0 0.0
        %1872 = vmatpush1.msra.mxu0 0.0
        %1873 = vmatprep.subr.mxu0 0.0
        %1874 = vmatpush1.msra.mxu0 0.0
        %1875 = vmatprep.subr.mxu0 0.0
        %1876 = vmatpush1.msra.mxu0 0.0
        %1877 = vmatprep.subr.mxu0 0.0
        %1878 = vmatpush1.msra.mxu0 0.0
        %1879 = vmatprep.subr.mxu0 0.0
        %1880 = vmatpush1.msra.mxu0 0.0
        %1881 = vmatprep.mubr.f32.mxu0 0.0
        %1882 = vmatmul.mubr.f32.gmra.mrb[0].mxu0 %v1815
        %v1883 = vpop.f32.mrb[0].mxu0
        %v1884 = vadd.f32 %v1812, %v1883
        %v1885 = vpop.f32.mrb[0].mxu0
        %1886 = vdwg.mxu0
        %1887 = vst.msk [vmem:[%s418] sm:$0xff] %vm462, %v1884
        %s1888 = sand.u32 %s197, 1
        %s1889 = scalar_lea.sflag [#allocation4], %s1888
        %s1890 = sand.u32 %s197, 1
        %s1891 = smul.addr %s1890, 8
        %s1892 = scalar_lea.vmem [#allocation8], %s1891
        %s1893 = sand.u32 %s32, 1
        %s1894 = scalar_lea.sflag [#allocation10], %s1893
        %s1895 = sand.u32 %s223, 1
        %s1896 = smul.addr %s1895, 16
        %s1897 = scalar_lea.vmem [#allocation9], %s1896
        %s1898 = sand.u32 %s32, 1
        %s1899 = scalar_lea.sflag [#allocation10], %s1898
        %s1900 = sand.u32 %s249, 1
        %s1901 = smul.addr %s1900, 16
        %s1902 = scalar_lea.vmem [#allocation11], %s1901
        %p1903 = scmp.lt.s32.totalorder %s32, 1
        %s1904 = scalar_select %p1903, %s32, 1
        %s1905 = smul.addr %s1904, 8
        %s1906 = scalar_lea.vmem %s10, %s1905
        // Predicated region
        $region61: #{tpu_custom_call.1} parent=47 // pred_check
          %p1907 = pneg %p207
        $region62: #{tpu_custom_call.1} parent=47 // pred_check_branch
          %1909 = sbr.rel (%p1907) target = $region64
        $region63: #{tpu_custom_call.1} parent=47 // pred_region
          %s1911 = ssub.s32 128, 128
          %1912 = vsyncadd %s1889, %s1911
          %s1913 = smul.addr %s32, 128
          %s1914 = scalar_lea.hbm %s7, %s1913
          %s1916 = sshll.u32 %s1892, 4
          %s1917 = int_to_ptr.vmem [resolvable:$true] %s1916
          %1919 = dma.vmem_to_hbm [thread:$0]  %s1917, 128, %s1914, %s1889
        $region64: #{tpu_custom_call.1} parent=47 // pred_fallthru
          _
        // Predicated region
        $region65: #{tpu_custom_call.1} parent=47 // pred_check
          %p1920 = pneg %p233
        $region66: #{tpu_custom_call.1} parent=47 // pred_check_branch
          %1922 = sbr.rel (%p1920) target = $region68
        $region67: #{tpu_custom_call.1} parent=47 // pred_region
          %s1923 = smul.u32 4, %s32
          %s1925 = ssub.s32 256, 256
          %1926 = vsyncadd %s1894, %s1925
          %s1927 = smul.addr %s1923, 64
          %s1928 = scalar_lea.hbm %s8, %s1927
          %s1929 = sshll.u32 %s1897, 4
          %s1930 = int_to_ptr.vmem [resolvable:$true] %s1929
          %1935 = dma.vmem_to_hbm [thread:$0]  %s1930, 256, %s1928, %s1894, 64, 64, 4
        $region68: #{tpu_custom_call.1} parent=47 // pred_fallthru
          _
        // Predicated region
        $region69: #{tpu_custom_call.1} parent=47 // pred_check
          %p1936 = pneg %p259
        $region70: #{tpu_custom_call.1} parent=47 // pred_check_branch
          %1938 = sbr.rel (%p1936) target = $region72
        $region71: #{tpu_custom_call.1} parent=47 // pred_region
          %s1939 = smul.u32 4, %s32
          %s1941 = ssub.s32 256, 256
          %1942 = vsyncadd %s1899, %s1941
          %s1943 = smul.addr %s1939, 64
          %s1944 = scalar_lea.hbm %s9, %s1943
          %s1945 = sshll.u32 %s1902, 4
          %s1946 = int_to_ptr.vmem [resolvable:$true] %s1945
          %1951 = dma.vmem_to_hbm [thread:$0]  %s1946, 256, %s1944, %s1899, 64, 64, 4
        $region72: #{tpu_custom_call.1} parent=47 // pred_fallthru
          _
        // Predicated region
        $region73: #{tpu_custom_call.1} parent=47 // pred_check
          %p1952 = pneg %p285
        $region74: #{tpu_custom_call.1} parent=47 // pred_check_branch
          %1954 = sbr.rel (%p1952) target = $region76
        $region75: #{tpu_custom_call.1} parent=47 // pred_region
          _
        $region76: #{tpu_custom_call.1} parent=47 // pred_fallthru
          _
      $region48: #{tpu_custom_call.1} parent=5 // pred_fallthru
        _
      %p1955 = scmp.le.s32.totalorder 2, %s27
      // Predicated region
      $region77: #{tpu_custom_call.1} parent=5 // pred_check
        %p1956 = pneg %p1955
      $region78: #{tpu_custom_call.1} parent=5 // pred_check_branch
        %1958 = sbr.rel (%p1956) target = $region80
      $region79: #{tpu_custom_call.1} parent=5 // pred_region
        %s1959 = ssub.s32 %s27, 2
        // Predicated region
        $region81: #{tpu_custom_call.1} parent=79 // pred_check
          %p1960 = pneg %p213
        $region82: #{tpu_custom_call.1} parent=79 // pred_check_branch
          %1962 = sbr.rel (%p1960) target = $region84
        $region83: #{tpu_custom_call.1} parent=79 // pred_region
          %s1963 = sand.u32 %s198, 1
          %s1964 = scalar_lea.sflag [#allocation4], %s1963
          %s1965 = sand.u32 %s198, 1
          %s1966 = smul.addr %s1965, 8
          %s1967 = scalar_lea.vmem [#allocation8], %s1966
          %1968 = dma.done %s1964, 128
        $region84: #{tpu_custom_call.1} parent=79 // pred_fallthru
          _
        // Predicated region
        $region85: #{tpu_custom_call.1} parent=79 // pred_check
          %p1969 = pneg %p239
        $region86: #{tpu_custom_call.1} parent=79 // pred_check_branch
          %1971 = sbr.rel (%p1969) target = $region88
        $region87: #{tpu_custom_call.1} parent=79 // pred_region
          %s1972 = sand.u32 %s33, 1
          %s1973 = scalar_lea.sflag [#allocation10], %s1972
          %s1974 = sand.u32 %s224, 1
          %s1975 = smul.addr %s1974, 16
          %s1976 = scalar_lea.vmem [#allocation9], %s1975
          %1977 = dma.done %s1973, 256
        $region88: #{tpu_custom_call.1} parent=79 // pred_fallthru
          _
        // Predicated region
        $region89: #{tpu_custom_call.1} parent=79 // pred_check
          %p1978 = pneg %p265
        $region90: #{tpu_custom_call.1} parent=79 // pred_check_branch
          %1980 = sbr.rel (%p1978) target = $region92
        $region91: #{tpu_custom_call.1} parent=79 // pred_region
          %s1981 = sand.u32 %s33, 1
          %s1982 = scalar_lea.sflag [#allocation10], %s1981
          %s1983 = sand.u32 %s250, 1
          %s1984 = smul.addr %s1983, 16
          %s1985 = scalar_lea.vmem [#allocation11], %s1984
          %1986 = dma.done %s1982, 256
        $region92: #{tpu_custom_call.1} parent=79 // pred_fallthru
          _
        // Predicated region
        $region93: #{tpu_custom_call.1} parent=79 // pred_check
          %p1987 = pneg %p291
        $region94: #{tpu_custom_call.1} parent=79 // pred_check_branch
          %1989 = sbr.rel (%p1987) target = $region96
        $region95: #{tpu_custom_call.1} parent=79 // pred_region
          %p1990 = scmp.lt.s32.totalorder %s33, 1
          %s1991 = scalar_select %p1990, %s33, 1
          %s1992 = smul.addr %s1991, 8
          %s1993 = scalar_lea.vmem %s10, %s1992
        $region96: #{tpu_custom_call.1} parent=79 // pred_fallthru
          _
      $region80: #{tpu_custom_call.1} parent=5 // pred_fallthru
        _
    $region6: #{tpu_custom_call.1} parent=1 // loop_footer
      %s31 = sadd.s32 1, %s27
    $region7: #{tpu_custom_call.1} parent=1 // loop_footer_branch
      %26 = sbr.rel target = $region3
    $region8: #{tpu_custom_call.1} parent=1 // loop_exit
      _
    %1994 = vsyncpa [#allocation3], 1
    %s1995 = scalar_lea.sflag [#allocation3], 1
    %1996 = vsyncpa %s1995, 1
    %1997 = vsyncpa [#allocation6], 1
    %1998 = vsyncpa [#allocation4], 1
    %s1999 = scalar_lea.sflag [#allocation4], 1
    %2000 = vsyncpa %s1999, 1
    %2001 = vsyncpa [#allocation10], 1
    %s2002 = scalar_lea.sflag [#allocation10], 1
    %2003 = vsyncpa %s2002, 1

// kernel: tpu_custom_call.1
$region0: #{tpu_custom_call.1}
  #allocation0 [shape = 'u32[]', space=smem, size = 0x4, offset = 0x4, fixed_abs, tag = 'smem constant byte address 0x4 - core index']
  #allocation1 [shape = 'u32[144,128]{1,0:T(1,128)}', space=vmem, size = 0x12000, scoped, tag = 'internal scratch']
  %s0 = inlined_call_operand.hbm [shape: f32[16,32], index: 0, kind: input, shape index: {}]
  %s1 = inlined_call_operand.vmem [shape: f32[16,1], index: 1, kind: input, shape index: {}]
  %s2 = inlined_call_operand.hbm [shape: f32[8,8], index: 2, kind: input, shape index: {}]
  %s3 = inlined_call_operand.hbm [shape: f32[32,100], index: 3, kind: input, shape index: {}]
  %s4 = inlined_call_operand.vmem [shape: f32[1,100], index: 4, kind: input, shape index: {}]
  %s5 = inlined_call_operand.vmem [shape: f32[32,32], index: 5, kind: input, shape index: {}]
  %s6 = inlined_call_operand.vmem [shape: f32[1,32], index: 6, kind: input, shape index: {}]
  %s7 = inlined_call_operand.hbm [shape: f32[16,32], index: 7, kind: output, shape index: {0}]
  %s8 = inlined_call_operand.hbm [shape: bf16[8,8,8], index: 8, kind: output, shape index: {1}]
  %s9 = inlined_call_operand.hbm [shape: bf16[8,8,8], index: 9, kind: output, shape index: {2}]
  %s10 = inlined_call_operand.vmem [shape: f32[16,4], index: 10, kind: output, shape index: {3}]
  %11 = xla_tuple %s7, %s8, %s9, %s10
  %s12 = sld [smem:[#allocation0]]
  $region97: #{tpu_custom_call.1} parent=0
    _
  %s14 = ssub.s32 1, %s12
  %s15 = scalar_select 0, %s14, %s12
  $region1: #{tpu_custom_call.1} parent=0
    #allocation2 [shape = 'u8[8192]{0}', space=vmem, size = 0x2000, scoped, tag = 'input window, operand 0']
    #allocation3 [shape = 's32[2]{0}', space=sflag, size = 0x8, scoped, tag = 'scoped memory for tpu_custom_call.1']
    #allocation4 [shape = 's32[2]{0}', space=sflag, size = 0x8, scoped, tag = 'scoped memory for tpu_custom_call.1']
    #allocation5 [shape = 'u8[4096]{0}', space=vmem, size = 0x1000, scoped, tag = 'input window, operand 2, single buffered']
    #allocation6 [shape = 's32[1]{0}', space=sflag, size = 0x4, scoped, tag = 'scoped memory for tpu_custom_call.1']
    #allocation7 [shape = 'u8[16384]{0}', space=vmem, size = 0x4000, scoped, tag = 'input window, operand 3, single buffered']
    #allocation8 [shape = 'u8[8192]{0}', space=vmem, size = 0x2000, scoped, tag = 'output window, operand 0']
    #allocation9 [shape = 'u8[16384]{0}', space=vmem, size = 0x4000, scoped, tag = 'output window, operand 1']
    #allocation10 [shape = 's32[2]{0}', space=sflag, size = 0x8, scoped, tag = 'scoped memory for tpu_custom_call.1']
    #allocation11 [shape = 'u8[16384]{0}', space=vmem, size = 0x4000, scoped, tag = 'output window, operand 2']
    %16 = vsyncpa [#allocation3], 0
    %s17 = scalar_lea.sflag [#allocation3], 1
    %18 = vsyncpa %s17, 0
    %19 = vsyncpa [#allocation6], 0
    %20 = vsyncpa [#allocation4], 0
    %s21 = scalar_lea.sflag [#allocation4], 1
    %22 = vsyncpa %s21, 0
    %23 = vsyncpa [#allocation10], 0
    %s24 = scalar_lea.sflag [#allocation10], 1
    %25 = vsyncpa %s24, 0
    loop: start=0, step=1, limit=4
    $region2: #{tpu_custom_call.1} parent=1 // loop_pre_header
      _
    $region3: #{tpu_custom_call.1} parent=1 // loop_header
      %s27 = sphi 0, %s31
      %p28 = scmp.ge.s32.totalorder %s27, 4
      %s37 = sphi 0, %s39
      %s40 = sphi 0, %s37
      %s41 = sphi 0, %s40
      %s57 = sphi 0, %s41
      %s63 = sphi 0, %s65
      %s66 = sphi 0, %s63
      %s67 = sphi 0, %s66
      %s83 = sphi 0, %s67
      %s87 = sphi 0, %s87
      %s89 = sphi 0, %s87
      %s90 = sphi 0, %s89
      %s104 = sphi 0, %s90
      %s108 = sphi 0, %s108
      %s110 = sphi 0, %s108
      %s111 = sphi 0, %s110
      %s125 = sphi 0, %s111
      %s129 = sphi 0, %s129
      %s131 = sphi 0, %s129
      %s132 = sphi 0, %s131
      %s146 = sphi 0, %s132
      %s150 = sphi 0, %s150
      %s152 = sphi 0, %s150
      %s153 = sphi 0, %s152
      %s167 = sphi 0, %s153
      %s171 = sphi 0, %s171
      %s173 = sphi 0, %s171
      %s174 = sphi 0, %s173
      %s188 = sphi 0, %s174
      %s194 = sphi 0, %s196
      %s197 = sphi 0, %s194
      %s198 = sphi 0, %s197
      %s214 = sphi 0, %s198
      %s220 = sphi 0, %s222
      %s223 = sphi 0, %s220
      %s224 = sphi 0, %s223
      %s240 = sphi 0, %s224
      %s246 = sphi 0, %s248
      %s249 = sphi 0, %s246
      %s250 = sphi 0, %s249
      %s266 = sphi 0, %s250
      %s272 = sphi 0, %s274
      %s275 = sphi 0, %s272
      %s276 = sphi 0, %s275
      %s292 = sphi 0, %s276
    $region4: #{tpu_custom_call.1} parent=1 // loop_header_branch
      %30 = sbr.rel (%p28) target = $region8
    $region5: #{tpu_custom_call.1} parent=1 // loop_body
      %s32 = ssub.s32 %s27, 1
      %s33 = ssub.s32 %s27, 2
      %s34 = sadd.s32 %s27, 1
      %s35 = ssub.s32 %s27, %s34
      %p36 = scmp.eq.s32.totalorder %s35, 0
      %s38 = sadd.s32 %s37, 1
      %s39 = scalar_select %p36, %s37, %s38
      %p42 = pneg %p36
      %p43 = scmp.eq.s32.totalorder %s27, 1
      %p44 = por %p42, %p43
      %p45 = scmp.ne.s32.totalorder %s37, %s40
      %p46 = scmp.eq.s32.totalorder %s27, 0
      %p47 = por %p45, %p46
      %p48 = scmp.ne.s32.totalorder %s37, %s40
      %p49 = scmp.eq.s32.totalorder %s32, 1
      %p50 = por %p48, %p49
      %p51 = scmp.ne.s32.totalorder %s40, %s41
      %p52 = scmp.eq.s32.totalorder %s32, 0
      %p53 = por %p51, %p52
      %p54 = scmp.ne.s32.totalorder %s40, %s41
      %p55 = scmp.eq.s32.totalorder %s33, 1
      %p56 = por %p54, %p55
      %p58 = scmp.ne.s32.totalorder %s41, %s57
      %p59 = scmp.eq.s32.totalorder %s33, 0
      %p60 = por %p58, %p59
      %s61 = ssub.s32 %s27, %s34
      %p62 = scmp.eq.s32.totalorder %s61, 0
      %s64 = sadd.s32 %s63, 1
      %s65 = scalar_select %p62, %s63, %s64
      %p68 = pneg %p62
      %p69 = scmp.eq.s32.totalorder %s27, 1
      %p70 = por %p68, %p69
      %p71 = scmp.ne.s32.totalorder %s63, %s66
      %p72 = scmp.eq.s32.totalorder %s27, 0
      %p73 = por %p71, %p72
      %p74 = scmp.ne.s32.totalorder %s63, %s66
      %p75 = scmp.eq.s32.totalorder %s32, 1
      %p76 = por %p74, %p75
      %p77 = scmp.ne.s32.totalorder %s66, %s67
      %p78 = scmp.eq.s32.totalorder %s32, 0
      %p79 = por %p77, %p78
      %p80 = scmp.ne.s32.totalorder %s66, %s67
      %p81 = scmp.eq.s32.totalorder %s33, 1
      %p82 = por %p80, %p81
      %p84 = scmp.ne.s32.totalorder %s67, %s83
      %p85 = scmp.eq.s32.totalorder %s33, 0
      %p86 = por %p84, %p85
      %s88 = sadd.s32 %s87, 1
      %p91 = scmp.eq.s32.totalorder %s27, 1
      %p92 = scmp.ne.s32.totalorder %s87, %s89
      %p93 = scmp.eq.s32.totalorder %s27, 0
      %p94 = por %p92, %p93
      %p95 = scmp.ne.s32.totalorder %s87, %s89
      %p96 = scmp.eq.s32.totalorder %s32, 1
      %p97 = por %p95, %p96
      %p98 = scmp.ne.s32.totalorder %s89, %s90
      %p99 = scmp.eq.s32.totalorder %s32, 0
      %p100 = por %p98, %p99
      %p101 = scmp.ne.s32.totalorder %s89, %s90
      %p102 = scmp.eq.s32.totalorder %s33, 1
      %p103 = por %p101, %p102
      %p105 = scmp.ne.s32.totalorder %s90, %s104
      %p106 = scmp.eq.s32.totalorder %s33, 0
      %p107 = por %p105, %p106
      %s109 = sadd.s32 %s108, 1
      %p112 = scmp.eq.s32.totalorder %s27, 1
      %p113 = scmp.ne.s32.totalorder %s108, %s110
      %p114 = scmp.eq.s32.totalorder %s27, 0
      %p115 = por %p113, %p114
      %p116 = scmp.ne.s32.totalorder %s108, %s110
      %p117 = scmp.eq.s32.totalorder %s32, 1
      %p118 = por %p116, %p117
      %p119 = scmp.ne.s32.totalorder %s110, %s111
      %p120 = scmp.eq.s32.totalorder %s32, 0
      %p121 = por %p119, %p120
      %p122 = scmp.ne.s32.totalorder %s110, %s111
      %p123 = scmp.eq.s32.totalorder %s33, 1
      %p124 = por %p122, %p123
      %p126 = scmp.ne.s32.totalorder %s111, %s125
      %p127 = scmp.eq.s32.totalorder %s33, 0
      %p128 = por %p126, %p127
      %s130 = sadd.s32 %s129, 1
      %p133 = scmp.eq.s32.totalorder %s27, 1
      %p134 = scmp.ne.s32.totalorder %s129, %s131
      %p135 = scmp.eq.s32.totalorder %s27, 0
      %p136 = por %p134, %p135
      %p137 = scmp.ne.s32.totalorder %s129, %s131
      %p138 = scmp.eq.s32.totalorder %s32, 1
      %p139 = por %p137, %p138
      %p140 = scmp.ne.s32.totalorder %s131, %s132
      %p141 = scmp.eq.s32.totalorder %s32, 0
      %p142 = por %p140, %p141
      %p143 = scmp.ne.s32.totalorder %s131, %s132
      %p144 = scmp.eq.s32.totalorder %s33, 1
      %p145 = por %p143, %p144
      %p147 = scmp.ne.s32.totalorder %s132, %s146
      %p148 = scmp.eq.s32.totalorder %s33, 0
      %p149 = por %p147, %p148
      %s151 = sadd.s32 %s150, 1
      %p154 = scmp.eq.s32.totalorder %s27, 1
      %p155 = scmp.ne.s32.totalorder %s150, %s152
      %p156 = scmp.eq.s32.totalorder %s27, 0
      %p157 = por %p155, %p156
      %p158 = scmp.ne.s32.totalorder %s150, %s152
      %p159 = scmp.eq.s32.totalorder %s32, 1
      %p160 = por %p158, %p159
      %p161 = scmp.ne.s32.totalorder %s152, %s153
      %p162 = scmp.eq.s32.totalorder %s32, 0
      %p163 = por %p161, %p162
      %p164 = scmp.ne.s32.totalorder %s152, %s153
      %p165 = scmp.eq.s32.totalorder %s33, 1
      %p166 = por %p164, %p165
      %p168 = scmp.ne.s32.totalorder %s153, %s167
      %p169 = scmp.eq.s32.totalorder %s33, 0
      %p170 = por %p168, %p169
      %s172 = sadd.s32 %s171, 1
      %p175 = scmp.eq.s32.totalorder %s27, 1
      %p176 = scmp.ne.s32.totalorder %s171, %s173
      %p177 = scmp.eq.s32.totalorder %s27, 0
      %p178 = por %p176, %p177
      %p179 = scmp.ne.s32.totalorder %s171, %s173
      %p180 = scmp.eq.s32.totalorder %s32, 1
      %p181 = por %p179, %p180
      %p182 = scmp.ne.s32.totalorder %s173, %s174
      %p183 = scmp.eq.s32.totalorder %s32, 0
      %p184 = por %p182, %p183
      %p185 = scmp.ne.s32.totalorder %s173, %s174
      %p186 = scmp.eq.s32.totalorder %s33, 1
      %p187 = por %p185, %p186
      %p189 = scmp.ne.s32.totalorder %s174, %s188
      %p190 = scmp.eq.s32.totalorder %s33, 0
      %p191 = por %p189, %p190
      %s192 = ssub.s32 %s27, %s34
      %p193 = scmp.eq.s32.totalorder %s192, 0
      %s195 = sadd.s32 %s194, 1
      %s196 = scalar_select %p193, %s194, %s195
      %p199 = pneg %p193
      %p200 = scmp.eq.s32.totalorder %s27, 1
      %p201 = por %p199, %p200
      %p202 = scmp.ne.s32.totalorder %s194, %s197
      %p203 = scmp.eq.s32.totalorder %s27, 0
      %p204 = por %p202, %p203
      %p205 = scmp.ne.s32.totalorder %s194, %s197
      %p206 = scmp.eq.s32.totalorder %s32, 1
      %p207 = por %p205, %p206
      %p208 = scmp.ne.s32.totalorder %s197, %s198
      %p209 = scmp.eq.s32.totalorder %s32, 0
      %p210 = por %p208, %p209
      %p211 = scmp.ne.s32.totalorder %s197, %s198
      %p212 = scmp.eq.s32.totalorder %s33, 1
      %p213 = por %p211, %p212
      %p215 = scmp.ne.s32.totalorder %s198, %s214
      %p216 = scmp.eq.s32.totalorder %s33, 0
      %p217 = por %p215, %p216
      %s218 = ssub.s32 %s27, %s34
      %p219 = scmp.eq.s32.totalorder %s218, 0
      %s221 = sadd.s32 %s220, 1
      %s222 = scalar_select %p219, %s220, %s221
      %p225 = pneg %p219
      %p226 = scmp.eq.s32.totalorder %s27, 1
      %p227 = por %p225, %p226
      %p228 = scmp.ne.s32.totalorder %s220, %s223
      %p229 = scmp.eq.s32.totalorder %s27, 0
      %p230 = por %p228, %p229
      %p231 = scmp.ne.s32.totalorder %s220, %s223
      %p232 = scmp.eq.s32.totalorder %s32, 1
      %p233 = por %p231, %p232
      %p234 = scmp.ne.s32.totalorder %s223, %s224
      %p235 = scmp.eq.s32.totalorder %s32, 0
      %p236 = por %p234, %p235
      %p237 = scmp.ne.s32.totalorder %s223, %s224
      %p238 = scmp.eq.s32.totalorder %s33, 1
      %p239 = por %p237, %p238
      %p241 = scmp.ne.s32.totalorder %s224, %s240
      %p242 = scmp.eq.s32.totalorder %s33, 0
      %p243 = por %p241, %p242
      %s244 = ssub.s32 %s27, %s34
      %p245 = scmp.eq.s32.totalorder %s244, 0
      %s247 = sadd.s32 %s246, 1
      %s248 = scalar_select %p245, %s246, %s247
      %p251 = pneg %p245
      %p252 = scmp.eq.s32.totalorder %s27, 1
      %p253 = por %p251, %p252
      %p254 = scmp.ne.s32.totalorder %s246, %s249
      %p255 = scmp.eq.s32.totalorder %s27, 0
      %p256 = por %p254, %p255
      %p257 = scmp.ne.s32.totalorder %s246, %s249
      %p258 = scmp.eq.s32.totalorder %s32, 1
      %p259 = por %p257, %p258
      %p260 = scmp.ne.s32.totalorder %s249, %s250
      %p261 = scmp.eq.s32.totalorder %s32, 0
      %p262 = por %p260, %p261
      %p263 = scmp.ne.s32.totalorder %s249, %s250
      %p264 = scmp.eq.s32.totalorder %s33, 1
      %p265 = por %p263, %p264
      %p267 = scmp.ne.s32.totalorder %s250, %s266
      %p268 = scmp.eq.s32.totalorder %s33, 0
      %p269 = por %p267, %p268
      %s270 = ssub.s32 %s27, %s34
      %p271 = scmp.eq.s32.totalorder %s270, 0
      %s273 = sadd.s32 %s272, 1
      %s274 = scalar_select %p271, %s272, %s273
      %p277 = pneg %p271
      %p278 = scmp.eq.s32.totalorder %s27, 1
      %p279 = por %p277, %p278
      %p280 = scmp.ne.s32.totalorder %s272, %s275
      %p281 = scmp.eq.s32.totalorder %s27, 0
      %p282 = por %p280, %p281
      %p283 = scmp.ne.s32.totalorder %s272, %s275
      %p284 = scmp.eq.s32.totalorder %s32, 1
      %p285 = por %p283, %p284
      %p286 = scmp.ne.s32.totalorder %s275, %s276
      %p287 = scmp.eq.s32.totalorder %s32, 0
      %p288 = por %p286, %p287
      %p289 = scmp.ne.s32.totalorder %s275, %s276
      %p290 = scmp.eq.s32.totalorder %s33, 1
      %p291 = por %p289, %p290
      %p293 = scmp.ne.s32.totalorder %s276, %s292
      %p294 = scmp.eq.s32.totalorder %s33, 0
      %p295 = por %p293, %p294
      %p296 = scmp.le.s32.totalorder 1, %s27
      %p297 = scmp.lt.s32.totalorder %s27, 3
      %p298 = pnand %p296, %p297
      %p299 = pneg %p298
      // Predicated region
      $region9: #{tpu_custom_call.1} parent=5 // pred_check
        _
      $region10: #{tpu_custom_call.1} parent=5 // pred_check_branch
        %301 = sbr.rel (%p298) target = $region12
      $region11: #{tpu_custom_call.1} parent=5 // pred_region
        %s302 = ssub.s32 %s27, 1
        // Predicated region
        $region13: #{tpu_custom_call.1} parent=11 // pred_check
          %p303 = pneg %p100
        $region14: #{tpu_custom_call.1} parent=11 // pred_check_branch
          %305 = sbr.rel (%p303) target = $region16
        $region15: #{tpu_custom_call.1} parent=11 // pred_region
          %s307 = ssub.s32 128, 128
          %308 = vsyncadd [#allocation6], %s307
          %s310 = sshll.u32 [#allocation5], 4
          %s311 = int_to_ptr.vmem [resolvable:$true] %s310
          %313 = dma.hbm_to_vmem [thread:$0]  %s2, 128, %s311, [#allocation6]
        $region16: #{tpu_custom_call.1} parent=11 // pred_fallthru
          _
        // Predicated region
        $region17: #{tpu_custom_call.1} parent=11 // pred_check
          %p314 = pneg %p121
        $region18: #{tpu_custom_call.1} parent=11 // pred_check_branch
          %316 = sbr.rel (%p314) target = $region20
        $region19: #{tpu_custom_call.1} parent=11 // pred_region
          %s318 = ssub.s32 512, 512
          %319 = vsyncadd [#allocation6], %s318
          %s320 = sshll.u32 [#allocation7], 4
          %s321 = int_to_ptr.vmem [resolvable:$true] %s320
          %326 = dma.hbm_to_vmem [thread:$0]  %s3, 512, %s321, [#allocation6], 128, 128, 8
        $region20: #{tpu_custom_call.1} parent=11 // pred_fallthru
          _
        // Predicated region
        $region21: #{tpu_custom_call.1} parent=11 // pred_check
          %p327 = pneg %p142
        $region22: #{tpu_custom_call.1} parent=11 // pred_check_branch
          %329 = sbr.rel (%p327) target = $region24
        $region23: #{tpu_custom_call.1} parent=11 // pred_region
          _
        $region24: #{tpu_custom_call.1} parent=11 // pred_fallthru
          _
        // Predicated region
        $region25: #{tpu_custom_call.1} parent=11 // pred_check
          %p330 = pneg %p163
        $region26: #{tpu_custom_call.1} parent=11 // pred_check_branch
          %332 = sbr.rel (%p330) target = $region28
        $region27: #{tpu_custom_call.1} parent=11 // pred_region
          _
        $region28: #{tpu_custom_call.1} parent=11 // pred_fallthru
          _
        // Predicated region
        $region29: #{tpu_custom_call.1} parent=11 // pred_check
          %p333 = pneg %p184
        $region30: #{tpu_custom_call.1} parent=11 // pred_check_branch
          %335 = sbr.rel (%p333) target = $region32
        $region31: #{tpu_custom_call.1} parent=11 // pred_region
          _
        $region32: #{tpu_custom_call.1} parent=11 // pred_fallthru
          _
      $region12: #{tpu_custom_call.1} parent=5 // pred_fallthru
        _
      %p336 = scmp.lt.s32.totalorder %s27, 2
      // Predicated region
      $region33: #{tpu_custom_call.1} parent=5 // pred_check
        %p337 = pneg %p336
      $region34: #{tpu_custom_call.1} parent=5 // pred_check_branch
        %339 = sbr.rel (%p337) target = $region36
      $region35: #{tpu_custom_call.1} parent=5 // pred_region
        // Predicated region
        $region37: #{tpu_custom_call.1} parent=35 // pred_check
          %p340 = pneg %p47
        $region38: #{tpu_custom_call.1} parent=35 // pred_check_branch
          %342 = sbr.rel (%p340) target = $region40
        $region39: #{tpu_custom_call.1} parent=35 // pred_region
          %s343 = sand.u32 %s37, 1
          %s344 = scalar_lea.sflag [#allocation3], %s343
          %s345 = sand.u32 %s37, 1
          %s346 = smul.addr %s345, 8
          %s347 = scalar_lea.vmem [#allocation2], %s346
          %s349 = ssub.s32 128, 128
          %350 = vsyncadd %s344, %s349
          %s351 = smul.addr %s27, 128
          %s352 = scalar_lea.hbm %s0, %s351
          %s354 = sshll.u32 %s347, 4
          %s355 = int_to_ptr.vmem [resolvable:$true] %s354
          %357 = dma.hbm_to_vmem [thread:$0]  %s352, 128, %s355, %s344
        $region40: #{tpu_custom_call.1} parent=35 // pred_fallthru
          _
        // Predicated region
        $region41: #{tpu_custom_call.1} parent=35 // pred_check
          %p358 = pneg %p73
        $region42: #{tpu_custom_call.1} parent=35 // pred_check_branch
          %360 = sbr.rel (%p358) target = $region44
        $region43: #{tpu_custom_call.1} parent=35 // pred_region
          %p361 = scmp.lt.s32.totalorder %s27, 1
          %s362 = scalar_select %p361, %s27, 1
          %s363 = smul.addr %s362, 8
          %s364 = scalar_lea.vmem %s1, %s363
        $region44: #{tpu_custom_call.1} parent=35 // pred_fallthru
          _
      $region36: #{tpu_custom_call.1} parent=5 // pred_fallthru
        _
      %p365 = scmp.le.s32.totalorder 1, %s27
      %p366 = scmp.lt.s32.totalorder %s27, 3
      %p367 = pnand %p365, %p366
      %p368 = pneg %p367
      // Predicated region
      $region45: #{tpu_custom_call.1} parent=5 // pred_check
        _
      $region46: #{tpu_custom_call.1} parent=5 // pred_check_branch
        %370 = sbr.rel (%p367) target = $region48
      $region47: #{tpu_custom_call.1} parent=5 // pred_region
        %s371 = ssub.s32 %s27, 1
        %s372 = sand.u32 %s40, 1
        %s373 = scalar_lea.sflag [#allocation3], %s372
        %s374 = sand.u32 %s40, 1
        %s375 = smul.addr %s374, 8
        %s376 = scalar_lea.vmem [#allocation2], %s375
        // Predicated region
        $region49: #{tpu_custom_call.1} parent=47 // pred_check
          %p377 = pneg %p53
        $region50: #{tpu_custom_call.1} parent=47 // pred_check_branch
          %379 = sbr.rel (%p377) target = $region52
        $region51: #{tpu_custom_call.1} parent=47 // pred_region
          %380 = dma.done %s373, 128
        $region52: #{tpu_custom_call.1} parent=47 // pred_fallthru
          _
        // Predicated region
        $region53: #{tpu_custom_call.1} parent=47 // pred_check
          %p381 = pneg %p100
        $region54: #{tpu_custom_call.1} parent=47 // pred_check_branch
          %383 = sbr.rel (%p381) target = $region56
        $region55: #{tpu_custom_call.1} parent=47 // pred_region
          %384 = dma.done [#allocation6], 128
        $region56: #{tpu_custom_call.1} parent=47 // pred_fallthru
          _
        // Predicated region
        $region57: #{tpu_custom_call.1} parent=47 // pred_check
          %p385 = pneg %p121
        $region58: #{tpu_custom_call.1} parent=47 // pred_check_branch
          %387 = sbr.rel (%p385) target = $region60
        $region59: #{tpu_custom_call.1} parent=47 // pred_region
          %388 = dma.done [#allocation6], 512
        $region60: #{tpu_custom_call.1} parent=47 // pred_fallthru
          _
        %s389 = sand.u32 %s40, 1
        %s390 = scalar_lea.sflag [#allocation3], %s389
        %s391 = sand.u32 %s40, 1
        %s392 = smul.addr %s391, 8
        %s393 = scalar_lea.vmem [#allocation2], %s392
        %p394 = pneg %p53
        %p395 = pneg %p50
        %p396 = scmp.lt.s32.totalorder %s32, 1
        %s397 = scalar_select %p396, %s32, 1
        %s398 = smul.addr %s397, 8
        %s399 = scalar_lea.vmem %s1, %s398
        %p400 = pneg %p79
        %p401 = pneg %p76
        %p402 = pneg %p100
        %p403 = pneg %p97
        %p404 = pneg %p121
        %p405 = pneg %p118
        %p406 = pneg %p142
        %p407 = pneg %p139
        %p408 = pneg %p163
        %p409 = pneg %p160
        %p410 = pneg %p184
        %p411 = pneg %p181
        %p412 = pneg %p210
        %p413 = pneg %p207
        %s414 = sand.u32 %s197, 1
        %s415 = scalar_lea.sflag [#allocation4], %s414
        %s416 = sand.u32 %s197, 1
        %s417 = smul.addr %s416, 8
        %s418 = scalar_lea.vmem [#allocation8], %s417
        %p419 = pneg %p236
        %p420 = pneg %p233
        %s421 = sand.u32 %s32, 1
        %s422 = scalar_lea.sflag [#allocation10], %s421
        %s423 = sand.u32 %s223, 1
        %s424 = smul.addr %s423, 16
        %s425 = scalar_lea.vmem [#allocation9], %s424
        %p426 = pneg %p262
        %p427 = pneg %p259
        %s428 = sand.u32 %s32, 1
        %s429 = scalar_lea.sflag [#allocation10], %s428
        %s430 = sand.u32 %s249, 1
        %s431 = smul.addr %s430, 16
        %s432 = scalar_lea.vmem [#allocation11], %s431
        %p433 = pneg %p288
        %p434 = pneg %p285
        %p435 = scmp.lt.s32.totalorder %s32, 1
        %s436 = scalar_select %p435, %s32, 1
        %s437 = smul.addr %s436, 8
        %s438 = scalar_lea.vmem %s10, %s437
        %p439 = scmp.lt.s32.totalorder %s32, 1
        %s440 = scalar_select %p439, %s32, 1
        %s441 = smul.addr %s440, 8
        %s442 = scalar_lea.vmem %s1, %s441
        %s443 = smul.u32 4, %s32
        %s444 = smul.u32 4, %s32
        %p445 = scmp.lt.s32.totalorder %s32, 1
        %s446 = scalar_select %p445, %s32, 1
        %s447 = smul.addr %s446, 8
        %s448 = scalar_lea.vmem %s10, %s447
        %v450 = vld [vmem:[#allocation7] sm:$0xff]
        %v451 = vld [vmem:[#allocation7 + $0x8] sm:$0xff]
        %v452 = vld [vmem:[#allocation7 + $0x10] sm:$0xff]
        %v453 = vld [vmem:[#allocation7 + $0x18] sm:$0xff]
        %v454 = vld [vmem:[%s4] sm:$0x1]
        %v455 = vld [vmem:[%s376] sm:$0xff]
        %v457 = vlaneseq
        %v458 = vshrl.u32 %v457, 7
        %v459 = vsub.s32 0, %v458
        %v460 = vrot.slane %v454, %v459
        %vm462 = vcmask 261120
        %v464 = vsel %vm462, %v455, 0
        %466 = vmatprep.subr.mxu0 0.0
        %467 = vmatpush1.msra.mxu0 %v450
        %468 = vmatprep.subr.mxu0 0.0
        %469 = vmatpush1.msra.mxu0 %v451
        %470 = vmatprep.subr.mxu0 0.0
        %471 = vmatpush1.msra.mxu0 %v452
        %472 = vmatprep.subr.mxu0 0.0
        %473 = vmatpush1.msra.mxu0 %v453
        %474 = vmatprep.subr.mxu0 0.0
        %475 = vmatpush1.msra.mxu0 0.0
        %476 = vmatprep.subr.mxu0 0.0
        %477 = vmatpush1.msra.mxu0 0.0
        %478 = vmatprep.subr.mxu0 0.0
        %479 = vmatpush1.msra.mxu0 0.0
        %480 = vmatprep.subr.mxu0 0.0
        %481 = vmatpush1.msra.mxu0 0.0
        %482 = vmatprep.subr.mxu0 0.0
        %483 = vmatpush1.msra.mxu0 0.0
        %484 = vmatprep.subr.mxu0 0.0
        %485 = vmatpush1.msra.mxu0 0.0
        %486 = vmatprep.subr.mxu0 0.0
        %487 = vmatpush1.msra.mxu0 0.0
        %488 = vmatprep.subr.mxu0 0.0
        %489 = vmatpush1.msra.mxu0 0.0
        %490 = vmatprep.subr.mxu0 0.0
        %491 = vmatpush1.msra.mxu0 0.0
        %492 = vmatprep.subr.mxu0 0.0
        %493 = vmatpush1.msra.mxu0 0.0
        %494 = vmatprep.subr.mxu0 0.0
        %495 = vmatpush1.msra.mxu0 0.0
        %496 = vmatprep.subr.mxu0 0.0
        %497 = vmatpush1.msra.mxu0 0.0
        %498 = vmatprep.subr.mxu0 0.0
        %499 = vmatpush1.msra.mxu0 0.0
        %500 = vmatprep.subr.mxu0 0.0
        %501 = vmatpush1.msra.mxu0 0.0
        %502 = vmatprep.subr.mxu0 0.0
        %503 = vmatpush1.msra.mxu0 0.0
        %504 = vmatprep.subr.mxu0 0.0
        %505 = vmatpush1.msra.mxu0 0.0
        %506 = vmatprep.subr.mxu0 0.0
        %507 = vmatpush1.msra.mxu0 0.0
        %508 = vmatprep.subr.mxu0 0.0
        %509 = vmatpush1.msra.mxu0 0.0
        %510 = vmatprep.subr.mxu0 0.0
        %511 = vmatpush1.msra.mxu0 0.0
        %512 = vmatprep.subr.mxu0 0.0
        %513 = vmatpush1.msra.mxu0 0.0
        %514 = vmatprep.subr.mxu0 0.0
        %515 = vmatpush1.msra.mxu0 0.0
        %516 = vmatprep.subr.mxu0 0.0
        %517 = vmatpush1.msra.mxu0 0.0
        %518 = vmatprep.subr.mxu0 0.0
        %519 = vmatpush1.msra.mxu0 0.0
        %520 = vmatprep.subr.mxu0 0.0
        %521 = vmatpush1.msra.mxu0 0.0
        %522 = vmatprep.subr.mxu0 0.0
        %523 = vmatpush1.msra.mxu0 0.0
        %524 = vmatprep.subr.mxu0 0.0
        %525 = vmatpush1.msra.mxu0 0.0
        %526 = vmatprep.subr.mxu0 0.0
        %527 = vmatpush1.msra.mxu0 0.0
        %528 = vmatprep.subr.mxu0 0.0
        %529 = vmatpush1.msra.mxu0 0.0
        %530 = vmatprep.mubr.f32.mxu0 0.0
        %531 = vmatmul.mubr.f32.gmra.mrb[0].mxu0 %v464
        %v532 = vpop.f32.mrb[0].mxu0
        %v533 = vadd.f32 %v460, %v532
        %v534 = vpop.f32.mrb[0].mxu0
        %535 = vdwg.mxu0
        %v536 = vmul.f32 %v533, -5.0
        %v537 = vmul.f32 %v536, 1.442695
        %v538 = vpow.pop %v537
        %v539 = vadd.f32 %v538, 1.0
        %v540 = vrcp.pop %v539
        %v541 = vmul.f32 1.0, %v540
        %v542 = vadd.f32 %v541, 1e-05
        %v543 = vmul.f32 %v542, 1.0986123
        %v544 = vmul.f32 %v543, 1.442695
        %v545 = vpow.pop %v544
        %v546 = vsub.f32 %v545, 1.0
        %v547 = vld [vmem:[%s442] sm:$0xff]
        %549 = vset.pattern.permute.xlu0 0
        %550 = vperm.xlu0 %549, %v547
        %v551 = vpop.permute.xlu0 %550
        %v553 = vmul.f32 %v546, %v551
        %555 = vrot.lane.b32.xlu0 %v553, 32
        %v556 = vpop.permute.xlu0 %555
        %vm558 = vcmask 31744
        %559 = vst.msk [vmem:[%s448] sm:$0xff] %vm558, %v556
        %561 = vrot.lane.b32.xlu0 %v533, 120
        %v562 = vpop.permute.xlu0 %561
        %564 = vrot.lane.b32.xlu0 %v533, 112
        %v565 = vpop.permute.xlu0 %564
        %567 = vrot.lane.b32.xlu0 %v533, 104
        %v568 = vpop.permute.xlu0 %567
        %570 = vrot.lane.b32.xlu0 %v553, 127
        %v571 = vpop.permute.xlu0 %570
        %573 = vrot.lane.b32.xlu0 %v553, 126
        %v574 = vpop.permute.xlu0 %573
        %576 = vrot.lane.b32.xlu0 %v553, 125
        %v577 = vpop.permute.xlu0 %576
        %v579 = vpack.c.bf16 %v533, %v533
        %v580 = vpack.c.bf16 %v562, %v562
        %v581 = vpack.c.bf16 %v565, %v565
        %v582 = vpack.c.bf16 %v568, %v568
        %584 = vrot.lane.b32.xlu0 %v579, 96
        %v585 = vpop.permute.xlu0 %584
        %vm586 = vcmask 64512
        %v588 = vsel %vm586, %v579, 0
        %v591 = vsel %vm586, %v585, 0
        %593 = vmatprep.subr.bf16.mxu0 0
        %594 = vmatpush1.bf16.xpose.msra.mxu0 %v591
        %595 = vmatprep.subr.bf16.mxu0 0
        %596 = vmatpush1.bf16.xpose.msra.mxu0 0
        %597 = vmatprep.subr.bf16.mxu0 0
        %598 = vmatpush1.bf16.xpose.msra.mxu0 0
        %599 = vmatprep.subr.bf16.mxu0 0
        %600 = vmatpush1.bf16.xpose.msra.mxu0 0
        %601 = vmatprep.subr.bf16.mxu0 0
        %602 = vmatpush1.bf16.xpose.msra.mxu0 0
        %603 = vmatprep.subr.bf16.mxu0 0
        %604 = vmatpush1.bf16.xpose.msra.mxu0 0
        %605 = vmatprep.subr.bf16.mxu0 0
        %606 = vmatpush1.bf16.xpose.msra.mxu0 0
        %607 = vmatprep.subr.bf16.mxu0 0
        %608 = vmatpush1.bf16.xpose.msra.mxu0 0
        %609 = vmatprep.subr.bf16.mxu0 0
        %610 = vmatpush1.bf16.xpose.msra.mxu0 0
        %611 = vmatprep.subr.bf16.mxu0 0
        %612 = vmatpush1.bf16.xpose.msra.mxu0 0
        %613 = vmatprep.subr.bf16.mxu0 0
        %614 = vmatpush1.bf16.xpose.msra.mxu0 0
        %615 = vmatprep.subr.bf16.mxu0 0
        %616 = vmatpush1.bf16.xpose.msra.mxu0 0
        %617 = vmatprep.subr.bf16.mxu0 0
        %618 = vmatpush1.bf16.xpose.msra.mxu0 0
        %619 = vmatprep.subr.bf16.mxu0 0
        %620 = vmatpush1.bf16.xpose.msra.mxu0 0
        %621 = vmatprep.subr.bf16.mxu0 0
        %622 = vmatpush1.bf16.xpose.msra.mxu0 0
        %623 = vmatprep.subr.bf16.mxu0 0
        %624 = vmatpush1.bf16.xpose.msra.mxu0 0
        %625 = vmatprep.mubr.bf16.mxu0 0
        %626 = vmatmul.mubr.bf16.gmra.mrb[0].mxu0 %v588
        %v627 = vpop.f32.mrb[0].mxu0
        %v628 = vadd.f32 0.0, %v627
        %v629 = vpop.f32.mrb[0].mxu0
        %v630 = vpop.f32.mrb[0].mxu0
        %v631 = vpop.f32.mrb[0].mxu0
        %632 = vdwg.mxu0
        %634 = vrot.lane.b32.xlu0 %v580, 96
        %v635 = vpop.permute.xlu0 %634
        %v637 = vsel %vm586, %v580, 0
        %v640 = vsel %vm586, %v635, 0
        %642 = vmatprep.subr.bf16.mxu0 0
        %643 = vmatpush1.bf16.xpose.msra.mxu0 %v640
        %644 = vmatprep.subr.bf16.mxu0 0
        %645 = vmatpush1.bf16.xpose.msra.mxu0 0
        %646 = vmatprep.subr.bf16.mxu0 0
        %647 = vmatpush1.bf16.xpose.msra.mxu0 0
        %648 = vmatprep.subr.bf16.mxu0 0
        %649 = vmatpush1.bf16.xpose.msra.mxu0 0
        %650 = vmatprep.subr.bf16.mxu0 0
        %651 = vmatpush1.bf16.xpose.msra.mxu0 0
        %652 = vmatprep.subr.bf16.mxu0 0
        %653 = vmatpush1.bf16.xpose.msra.mxu0 0
        %654 = vmatprep.subr.bf16.mxu0 0
        %655 = vmatpush1.bf16.xpose.msra.mxu0 0
        %656 = vmatprep.subr.bf16.mxu0 0
        %657 = vmatpush1.bf16.xpose.msra.mxu0 0
        %658 = vmatprep.subr.bf16.mxu0 0
        %659 = vmatpush1.bf16.xpose.msra.mxu0 0
        %660 = vmatprep.subr.bf16.mxu0 0
        %661 = vmatpush1.bf16.xpose.msra.mxu0 0
        %662 = vmatprep.subr.bf16.mxu0 0
        %663 = vmatpush1.bf16.xpose.msra.mxu0 0
        %664 = vmatprep.subr.bf16.mxu0 0
        %665 = vmatpush1.bf16.xpose.msra.mxu0 0
        %666 = vmatprep.subr.bf16.mxu0 0
        %667 = vmatpush1.bf16.xpose.msra.mxu0 0
        %668 = vmatprep.subr.bf16.mxu0 0
        %669 = vmatpush1.bf16.xpose.msra.mxu0 0
        %670 = vmatprep.subr.bf16.mxu0 0
        %671 = vmatpush1.bf16.xpose.msra.mxu0 0
        %672 = vmatprep.subr.bf16.mxu0 0
        %673 = vmatpush1.bf16.xpose.msra.mxu0 0
        %674 = vmatprep.mubr.bf16.mxu0 0
        %675 = vmatmul.mubr.bf16.gmra.mrb[0].mxu0 %v637
        %v676 = vpop.f32.mrb[0].mxu0
        %v677 = vadd.f32 0.0, %v676
        %v678 = vpop.f32.mrb[0].mxu0
        %v679 = vpop.f32.mrb[0].mxu0
        %v680 = vpop.f32.mrb[0].mxu0
        %681 = vdwg.mxu0
        %683 = vrot.lane.b32.xlu0 %v581, 96
        %v684 = vpop.permute.xlu0 %683
        %v686 = vsel %vm586, %v581, 0
        %v689 = vsel %vm586, %v684, 0
        %691 = vmatprep.subr.bf16.mxu0 0
        %692 = vmatpush1.bf16.xpose.msra.mxu0 %v689
        %693 = vmatprep.subr.bf16.mxu0 0
        %694 = vmatpush1.bf16.xpose.msra.mxu0 0
        %695 = vmatprep.subr.bf16.mxu0 0
        %696 = vmatpush1.bf16.xpose.msra.mxu0 0
        %697 = vmatprep.subr.bf16.mxu0 0
        %698 = vmatpush1.bf16.xpose.msra.mxu0 0
        %699 = vmatprep.subr.bf16.mxu0 0
        %700 = vmatpush1.bf16.xpose.msra.mxu0 0
        %701 = vmatprep.subr.bf16.mxu0 0
        %702 = vmatpush1.bf16.xpose.msra.mxu0 0
        %703 = vmatprep.subr.bf16.mxu0 0
        %704 = vmatpush1.bf16.xpose.msra.mxu0 0
        %705 = vmatprep.subr.bf16.mxu0 0
        %706 = vmatpush1.bf16.xpose.msra.mxu0 0
        %707 = vmatprep.subr.bf16.mxu0 0
        %708 = vmatpush1.bf16.xpose.msra.mxu0 0
        %709 = vmatprep.subr.bf16.mxu0 0
        %710 = vmatpush1.bf16.xpose.msra.mxu0 0
        %711 = vmatprep.subr.bf16.mxu0 0
        %712 = vmatpush1.bf16.xpose.msra.mxu0 0
        %713 = vmatprep.subr.bf16.mxu0 0
        %714 = vmatpush1.bf16.xpose.msra.mxu0 0
        %715 = vmatprep.subr.bf16.mxu0 0
        %716 = vmatpush1.bf16.xpose.msra.mxu0 0
        %717 = vmatprep.subr.bf16.mxu0 0
        %718 = vmatpush1.bf16.xpose.msra.mxu0 0
        %719 = vmatprep.subr.bf16.mxu0 0
        %720 = vmatpush1.bf16.xpose.msra.mxu0 0
        %721 = vmatprep.subr.bf16.mxu0 0
        %722 = vmatpush1.bf16.xpose.msra.mxu0 0
        %723 = vmatprep.mubr.bf16.mxu0 0
        %724 = vmatmul.mubr.bf16.gmra.mrb[0].mxu0 %v686
        %v725 = vpop.f32.mrb[0].mxu0
        %v726 = vadd.f32 0.0, %v725
        %v727 = vpop.f32.mrb[0].mxu0
        %v728 = vpop.f32.mrb[0].mxu0
        %v729 = vpop.f32.mrb[0].mxu0
        %730 = vdwg.mxu0
        %732 = vrot.lane.b32.xlu0 %v582, 96
        %v733 = vpop.permute.xlu0 %732
        %v735 = vsel %vm586, %v582, 0
        %v738 = vsel %vm586, %v733, 0
        %740 = vmatprep.subr.bf16.mxu0 0
        %741 = vmatpush1.bf16.xpose.msra.mxu0 %v738
        %742 = vmatprep.subr.bf16.mxu0 0
        %743 = vmatpush1.bf16.xpose.msra.mxu0 0
        %744 = vmatprep.subr.bf16.mxu0 0
        %745 = vmatpush1.bf16.xpose.msra.mxu0 0
        %746 = vmatprep.subr.bf16.mxu0 0
        %747 = vmatpush1.bf16.xpose.msra.mxu0 0
        %748 = vmatprep.subr.bf16.mxu0 0
        %749 = vmatpush1.bf16.xpose.msra.mxu0 0
        %750 = vmatprep.subr.bf16.mxu0 0
        %751 = vmatpush1.bf16.xpose.msra.mxu0 0
        %752 = vmatprep.subr.bf16.mxu0 0
        %753 = vmatpush1.bf16.xpose.msra.mxu0 0
        %754 = vmatprep.subr.bf16.mxu0 0
        %755 = vmatpush1.bf16.xpose.msra.mxu0 0
        %756 = vmatprep.subr.bf16.mxu0 0
        %757 = vmatpush1.bf16.xpose.msra.mxu0 0
        %758 = vmatprep.subr.bf16.mxu0 0
        %759 = vmatpush1.bf16.xpose.msra.mxu0 0
        %760 = vmatprep.subr.bf16.mxu0 0
        %761 = vmatpush1.bf16.xpose.msra.mxu0 0
        %762 = vmatprep.subr.bf16.mxu0 0
        %763 = vmatpush1.bf16.xpose.msra.mxu0 0
        %764 = vmatprep.subr.bf16.mxu0 0
        %765 = vmatpush1.bf16.xpose.msra.mxu0 0
        %766 = vmatprep.subr.bf16.mxu0 0
        %767 = vmatpush1.bf16.xpose.msra.mxu0 0
        %768 = vmatprep.subr.bf16.mxu0 0
        %769 = vmatpush1.bf16.xpose.msra.mxu0 0
        %770 = vmatprep.subr.bf16.mxu0 0
        %771 = vmatpush1.bf16.xpose.msra.mxu0 0
        %772 = vmatprep.mubr.bf16.mxu0 0
        %773 = vmatmul.mubr.bf16.gmra.mrb[0].mxu0 %v735
        %v774 = vpop.f32.mrb[0].mxu0
        %v775 = vadd.f32 0.0, %v774
        %v776 = vpop.f32.mrb[0].mxu0
        %v777 = vpop.f32.mrb[0].mxu0
        %v778 = vpop.f32.mrb[0].mxu0
        %779 = vdwg.mxu0
        %v780 = vsel %vm586, %v628, -inf
        %781 = vmax.xlane.f32.xlu0 %v780
        %v782 = vpop.xlane.xlu0 %781
        %v783 = vsel %vm586, %v677, -inf
        %784 = vmax.xlane.f32.xlu0 %v783
        %v785 = vpop.xlane.xlu0 %784
        %v786 = vsel %vm586, %v726, -inf
        %787 = vmax.xlane.f32.xlu0 %v786
        %v788 = vpop.xlane.xlu0 %787
        %v789 = vsel %vm586, %v775, -inf
        %790 = vmax.xlane.f32.xlu0 %v789
        %v791 = vpop.xlane.xlu0 %790
        %v792 = vsub.f32 %v628, %v782
        %v793 = vsub.f32 %v677, %v785
        %v794 = vsub.f32 %v726, %v788
        %v795 = vsub.f32 %v775, %v791
        %v796 = vmul.f32 %v792, 1.442695
        %v797 = vpow.pop %v796
        %v798 = vmul.f32 %v793, 1.442695
        %v799 = vpow.pop %v798
        %v800 = vmul.f32 %v794, 1.442695
        %v801 = vpow.pop %v800
        %v802 = vmul.f32 %v795, 1.442695
        %v803 = vpow.pop %v802
        %v804 = vsel %vm586, %v797, 0.0
        %805 = vadd.xlane.f32.xlu0 %v804
        %v806 = vpop.xlane.xlu0 %805
        %v807 = vsel %vm586, %v799, 0.0
        %808 = vadd.xlane.f32.xlu0 %v807
        %v809 = vpop.xlane.xlu0 %808
        %v810 = vsel %vm586, %v801, 0.0
        %811 = vadd.xlane.f32.xlu0 %v810
        %v812 = vpop.xlane.xlu0 %811
        %v813 = vsel %vm586, %v803, 0.0
        %814 = vadd.xlane.f32.xlu0 %v813
        %v815 = vpop.xlane.xlu0 %814
        %v816 = vrcp.pop %v806
        %v817 = vrcp.pop %v809
        %v818 = vrcp.pop %v812
        %v819 = vrcp.pop %v815
        %v820 = vmul.f32 %v797, %v816
        %v821 = vmul.f32 %v799, %v817
        %v822 = vmul.f32 %v801, %v818
        %v823 = vmul.f32 %v803, %v819
        %v824 = vpack.c.bf16 %v820, %v820
        %v825 = vpack.c.bf16 %v821, %v821
        %v826 = vpack.c.bf16 %v822, %v822
        %v827 = vpack.c.bf16 %v823, %v823
        %vm828 = vcmask 60416
        %829 = vst.msk [vmem:[%s425] sm:$0xf] %vm828, %v824
        %830 = vst.msk [vmem:[%s425 + $0x4] sm:$0xf] %vm828, %v825
        %831 = vst.msk [vmem:[%s425 + $0x8] sm:$0xf] %vm828, %v826
        %832 = vst.msk [vmem:[%s425 + $0xc] sm:$0xf] %vm828, %v827
        %v833 = vrcp.pop %v553
        %v834 = vmul.f32 1.0, %v833
        %v835 = vrcp.pop %v571
        %v836 = vmul.f32 1.0, %v835
        %v837 = vrcp.pop %v574
        %v838 = vmul.f32 1.0, %v837
        %v839 = vrcp.pop %v577
        %v840 = vmul.f32 1.0, %v839
        %v841 = vmul.f32 %v834, 0.3989423
        %v842 = vmul.f32 %v836, 0.3989423
        %v843 = vmul.f32 %v838, 0.3989423
        %v844 = vmul.f32 %v840, 0.3989423
        %v845 = vld [vmem:[#allocation5] sm:$0xff]
        %v846 = vmul.f32 %v834, %v834
        %v847 = vmul.f32 %v836, %v836
        %v848 = vmul.f32 %v838, %v838
        %v849 = vmul.f32 %v840, %v840
        %851 = vset.pattern.permute.xlu0 96
        %852 = vperm.xlu0 %851, %v846
        %v853 = vpop.permute.xlu0 %852
        %856 = vset.pattern.permute.xlu0 96
        %857 = vperm.xlu0 %856, %v847
        %v858 = vpop.permute.xlu0 %857
        %861 = vset.pattern.permute.xlu0 96
        %862 = vperm.xlu0 %861, %v848
        %v863 = vpop.permute.xlu0 %862
        %866 = vset.pattern.permute.xlu0 96
        %867 = vperm.xlu0 %866, %v849
        %v868 = vpop.permute.xlu0 %867
        %v870 = vmul.f32 %v845, %v853
        %v871 = vmul.f32 %v845, %v858
        %v872 = vmul.f32 %v845, %v863
        %v873 = vmul.f32 %v845, %v868
        %v874 = vmul.f32 %v870, 1.442695
        %v875 = vpow.pop %v874
        %v876 = vmul.f32 %v871, 1.442695
        %v877 = vpow.pop %v876
        %v878 = vmul.f32 %v872, 1.442695
        %v879 = vpow.pop %v878
        %v880 = vmul.f32 %v873, 1.442695
        %v881 = vpow.pop %v880
        %883 = vset.pattern.permute.xlu0 96
        %884 = vperm.xlu0 %883, %v841
        %v885 = vpop.permute.xlu0 %884
        %888 = vset.pattern.permute.xlu0 96
        %889 = vperm.xlu0 %888, %v842
        %v890 = vpop.permute.xlu0 %889
        %893 = vset.pattern.permute.xlu0 96
        %894 = vperm.xlu0 %893, %v843
        %v895 = vpop.permute.xlu0 %894
        %898 = vset.pattern.permute.xlu0 96
        %899 = vperm.xlu0 %898, %v844
        %v900 = vpop.permute.xlu0 %899
        %v902 = vmul.f32 %v885, %v875
        %v903 = vmul.f32 %v890, %v877
        %v904 = vmul.f32 %v895, %v879
        %v905 = vmul.f32 %v900, %v881
        %v906 = vpack.c.bf16 %v902, %v902
        %v907 = vpack.c.bf16 %v903, %v903
        %v908 = vpack.c.bf16 %v904, %v904
        %v909 = vpack.c.bf16 %v905, %v905
        %910 = vst.msk [vmem:[%s432] sm:$0xf] %vm828, %v906
        %911 = vst.msk [vmem:[%s432 + $0x4] sm:$0xf] %vm828, %v907
        %912 = vst.msk [vmem:[%s432 + $0x8] sm:$0xf] %vm828, %v908
        %913 = vst.msk [vmem:[%s432 + $0xc] sm:$0xf] %vm828, %v909
        %914 = vrot.lane.b32.xlu0 %v579, 64
        %v915 = vpop.permute.xlu0 %914
        %v917 = vsel %vm586, %v824, 0
        %vm919 = vcmask 1043456
        %v921 = vsel %vm919, %v915, 0
        %923 = vmatprep.subr.bf16.mxu0 0
        %924 = vmatpush1.bf16.msra.mxu0 %v921
        %925 = vmatprep.subr.bf16.mxu0 0
        %926 = vmatpush1.bf16.msra.mxu0 0
        %927 = vmatprep.subr.bf16.mxu0 0
        %928 = vmatpush1.bf16.msra.mxu0 0
        %929 = vmatprep.subr.bf16.mxu0 0
        %930 = vmatpush1.bf16.msra.mxu0 0
        %931 = vmatprep.subr.bf16.mxu0 0
        %932 = vmatpush1.bf16.msra.mxu0 0
        %933 = vmatprep.subr.bf16.mxu0 0
        %934 = vmatpush1.bf16.msra.mxu0 0
        %935 = vmatprep.subr.bf16.mxu0 0
        %936 = vmatpush1.bf16.msra.mxu0 0
        %937 = vmatprep.subr.bf16.mxu0 0
        %938 = vmatpush1.bf16.msra.mxu0 0
        %939 = vmatprep.subr.bf16.mxu0 0
        %940 = vmatpush1.bf16.msra.mxu0 0
        %941 = vmatprep.subr.bf16.mxu0 0
        %942 = vmatpush1.bf16.msra.mxu0 0
        %943 = vmatprep.subr.bf16.mxu0 0
        %944 = vmatpush1.bf16.msra.mxu0 0
        %945 = vmatprep.subr.bf16.mxu0 0
        %946 = vmatpush1.bf16.msra.mxu0 0
        %947 = vmatprep.subr.bf16.mxu0 0
        %948 = vmatpush1.bf16.msra.mxu0 0
        %949 = vmatprep.subr.bf16.mxu0 0
        %950 = vmatpush1.bf16.msra.mxu0 0
        %951 = vmatprep.subr.bf16.mxu0 0
        %952 = vmatpush1.bf16.msra.mxu0 0
        %953 = vmatprep.subr.bf16.mxu0 0
        %954 = vmatpush1.bf16.msra.mxu0 0
        %955 = vmatprep.mubr.bf16.mxu0 0
        %956 = vmatmul.mubr.bf16.gmra.mrb[0].mxu0 %v917
        %v957 = vpop.f32.mrb[0].mxu0
        %v958 = vadd.f32 0.0, %v957
        %v959 = vpop.f32.mrb[0].mxu0
        %v960 = vpop.f32.mrb[0].mxu0
        %v961 = vpop.f32.mrb[0].mxu0
        %962 = vdwg.mxu0
        %963 = vrot.lane.b32.xlu0 %v580, 64
        %v964 = vpop.permute.xlu0 %963
        %v966 = vsel %vm586, %v825, 0
        %v969 = vsel %vm919, %v964, 0
        %971 = vmatprep.subr.bf16.mxu0 0
        %972 = vmatpush1.bf16.msra.mxu0 %v969
        %973 = vmatprep.subr.bf16.mxu0 0
        %974 = vmatpush1.bf16.msra.mxu0 0
        %975 = vmatprep.subr.bf16.mxu0 0
        %976 = vmatpush1.bf16.msra.mxu0 0
        %977 = vmatprep.subr.bf16.mxu0 0
        %978 = vmatpush1.bf16.msra.mxu0 0
        %979 = vmatprep.subr.bf16.mxu0 0
        %980 = vmatpush1.bf16.msra.mxu0 0
        %981 = vmatprep.subr.bf16.mxu0 0
        %982 = vmatpush1.bf16.msra.mxu0 0
        %983 = vmatprep.subr.bf16.mxu0 0
        %984 = vmatpush1.bf16.msra.mxu0 0
        %985 = vmatprep.subr.bf16.mxu0 0
        %986 = vmatpush1.bf16.msra.mxu0 0
        %987 = vmatprep.subr.bf16.mxu0 0
        %988 = vmatpush1.bf16.msra.mxu0 0
        %989 = vmatprep.subr.bf16.mxu0 0
        %990 = vmatpush1.bf16.msra.mxu0 0
        %991 = vmatprep.subr.bf16.mxu0 0
        %992 = vmatpush1.bf16.msra.mxu0 0
        %993 = vmatprep.subr.bf16.mxu0 0
        %994 = vmatpush1.bf16.msra.mxu0 0
        %995 = vmatprep.subr.bf16.mxu0 0
        %996 = vmatpush1.bf16.msra.mxu0 0
        %997 = vmatprep.subr.bf16.mxu0 0
        %998 = vmatpush1.bf16.msra.mxu0 0
        %999 = vmatprep.subr.bf16.mxu0 0
        %1000 = vmatpush1.bf16.msra.mxu0 0
        %1001 = vmatprep.subr.bf16.mxu0 0
        %1002 = vmatpush1.bf16.msra.mxu0 0
        %1003 = vmatprep.mubr.bf16.mxu0 0
        %1004 = vmatmul.mubr.bf16.gmra.mrb[0].mxu0 %v966
        %v1005 = vpop.f32.mrb[0].mxu0
        %v1006 = vadd.f32 0.0, %v1005
        %v1007 = vpop.f32.mrb[0].mxu0
        %v1008 = vpop.f32.mrb[0].mxu0
        %v1009 = vpop.f32.mrb[0].mxu0
        %1010 = vdwg.mxu0
        %1011 = vrot.lane.b32.xlu0 %v581, 64
        %v1012 = vpop.permute.xlu0 %1011
        %v1014 = vsel %vm586, %v826, 0
        %v1017 = vsel %vm919, %v1012, 0
        %1019 = vmatprep.subr.bf16.mxu0 0
        %1020 = vmatpush1.bf16.msra.mxu0 %v1017
        %1021 = vmatprep.subr.bf16.mxu0 0
        %1022 = vmatpush1.bf16.msra.mxu0 0
        %1023 = vmatprep.subr.bf16.mxu0 0
        %1024 = vmatpush1.bf16.msra.mxu0 0
        %1025 = vmatprep.subr.bf16.mxu0 0
        %1026 = vmatpush1.bf16.msra.mxu0 0
        %1027 = vmatprep.subr.bf16.mxu0 0
        %1028 = vmatpush1.bf16.msra.mxu0 0
        %1029 = vmatprep.subr.bf16.mxu0 0
        %1030 = vmatpush1.bf16.msra.mxu0 0
        %1031 = vmatprep.subr.bf16.mxu0 0
        %1032 = vmatpush1.bf16.msra.mxu0 0
        %1033 = vmatprep.subr.bf16.mxu0 0
        %1034 = vmatpush1.bf16.msra.mxu0 0
        %1035 = vmatprep.subr.bf16.mxu0 0
        %1036 = vmatpush1.bf16.msra.mxu0 0
        %1037 = vmatprep.subr.bf16.mxu0 0
        %1038 = vmatpush1.bf16.msra.mxu0 0
        %1039 = vmatprep.subr.bf16.mxu0 0
        %1040 = vmatpush1.bf16.msra.mxu0 0
        %1041 = vmatprep.subr.bf16.mxu0 0
        %1042 = vmatpush1.bf16.msra.mxu0 0
        %1043 = vmatprep.subr.bf16.mxu0 0
        %1044 = vmatpush1.bf16.msra.mxu0 0
        %1045 = vmatprep.subr.bf16.mxu0 0
        %1046 = vmatpush1.bf16.msra.mxu0 0
        %1047 = vmatprep.subr.bf16.mxu0 0
        %1048 = vmatpush1.bf16.msra.mxu0 0
        %1049 = vmatprep.subr.bf16.mxu0 0
        %1050 = vmatpush1.bf16.msra.mxu0 0
        %1051 = vmatprep.mubr.bf16.mxu0 0
        %1052 = vmatmul.mubr.bf16.gmra.mrb[0].mxu0 %v1014
        %v1053 = vpop.f32.mrb[0].mxu0
        %v1054 = vadd.f32 0.0, %v1053
        %v1055 = vpop.f32.mrb[0].mxu0
        %v1056 = vpop.f32.mrb[0].mxu0
        %v1057 = vpop.f32.mrb[0].mxu0
        %1058 = vdwg.mxu0
        %1059 = vrot.lane.b32.xlu0 %v582, 64
        %v1060 = vpop.permute.xlu0 %1059
        %v1062 = vsel %vm586, %v827, 0
        %v1065 = vsel %vm919, %v1060, 0
        %1067 = vmatprep.subr.bf16.mxu0 0
        %1068 = vmatpush1.bf16.msra.mxu0 %v1065
        %1069 = vmatprep.subr.bf16.mxu0 0
        %1070 = vmatpush1.bf16.msra.mxu0 0
        %1071 = vmatprep.subr.bf16.mxu0 0
        %1072 = vmatpush1.bf16.msra.mxu0 0
        %1073 = vmatprep.subr.bf16.mxu0 0
        %1074 = vmatpush1.bf16.msra.mxu0 0
        %1075 = vmatprep.subr.bf16.mxu0 0
        %1076 = vmatpush1.bf16.msra.mxu0 0
        %1077 = vmatprep.subr.bf16.mxu0 0
        %1078 = vmatpush1.bf16.msra.mxu0 0
        %1079 = vmatprep.subr.bf16.mxu0 0
        %1080 = vmatpush1.bf16.msra.mxu0 0
        %1081 = vmatprep.subr.bf16.mxu0 0
        %1082 = vmatpush1.bf16.msra.mxu0 0
        %1083 = vmatprep.subr.bf16.mxu0 0
        %1084 = vmatpush1.bf16.msra.mxu0 0
        %1085 = vmatprep.subr.bf16.mxu0 0
        %1086 = vmatpush1.bf16.msra.mxu0 0
        %1087 = vmatprep.subr.bf16.mxu0 0
        %1088 = vmatpush1.bf16.msra.mxu0 0
        %1089 = vmatprep.subr.bf16.mxu0 0
        %1090 = vmatpush1.bf16.msra.mxu0 0
        %1091 = vmatprep.subr.bf16.mxu0 0
        %1092 = vmatpush1.bf16.msra.mxu0 0
        %1093 = vmatprep.subr.bf16.mxu0 0
        %1094 = vmatpush1.bf16.msra.mxu0 0
        %1095 = vmatprep.subr.bf16.mxu0 0
        %1096 = vmatpush1.bf16.msra.mxu0 0
        %1097 = vmatprep.subr.bf16.mxu0 0
        %1098 = vmatpush1.bf16.msra.mxu0 0
        %1099 = vmatprep.mubr.bf16.mxu0 0
        %1100 = vmatmul.mubr.bf16.gmra.mrb[0].mxu0 %v1062
        %v1101 = vpop.f32.mrb[0].mxu0
        %v1102 = vadd.f32 0.0, %v1101
        %v1103 = vpop.f32.mrb[0].mxu0
        %v1104 = vpop.f32.mrb[0].mxu0
        %v1105 = vpop.f32.mrb[0].mxu0
        %1106 = vdwg.mxu0
        %v1107 = vld [vmem:[%s5] sm:$0xff]
        %v1108 = vld [vmem:[%s5 + $0x8] sm:$0xff]
        %v1109 = vld [vmem:[%s5 + $0x10] sm:$0xff]
        %v1110 = vld [vmem:[%s5 + $0x18] sm:$0xff]
        %v1112 = vsel %vm586, %v958, 0
        %1114 = vmatprep.subr.mxu0 0.0
        %1115 = vmatpush1.msra.mxu0 %v1107
        %1116 = vmatprep.subr.mxu0 0.0
        %1117 = vmatpush1.msra.mxu0 0.0
        %1118 = vmatprep.subr.mxu0 0.0
        %1119 = vmatpush1.msra.mxu0 0.0
        %1120 = vmatprep.subr.mxu0 0.0
        %1121 = vmatpush1.msra.mxu0 0.0
        %1122 = vmatprep.subr.mxu0 0.0
        %1123 = vmatpush1.msra.mxu0 0.0
        %1124 = vmatprep.subr.mxu0 0.0
        %1125 = vmatpush1.msra.mxu0 0.0
        %1126 = vmatprep.subr.mxu0 0.0
        %1127 = vmatpush1.msra.mxu0 0.0
        %1128 = vmatprep.subr.mxu0 0.0
        %1129 = vmatpush1.msra.mxu0 0.0
        %1130 = vmatprep.subr.mxu0 0.0
        %1131 = vmatpush1.msra.mxu0 0.0
        %1132 = vmatprep.subr.mxu0 0.0
        %1133 = vmatpush1.msra.mxu0 0.0
        %1134 = vmatprep.subr.mxu0 0.0
        %1135 = vmatpush1.msra.mxu0 0.0
        %1136 = vmatprep.subr.mxu0 0.0
        %1137 = vmatpush1.msra.mxu0 0.0
        %1138 = vmatprep.subr.mxu0 0.0
        %1139 = vmatpush1.msra.mxu0 0.0
        %1140 = vmatprep.subr.mxu0 0.0
        %1141 = vmatpush1.msra.mxu0 0.0
        %1142 = vmatprep.subr.mxu0 0.0
        %1143 = vmatpush1.msra.mxu0 0.0
        %1144 = vmatprep.subr.mxu0 0.0
        %1145 = vmatpush1.msra.mxu0 0.0
        %1146 = vmatprep.subr.mxu0 0.0
        %1147 = vmatpush1.msra.mxu0 0.0
        %1148 = vmatprep.subr.mxu0 0.0
        %1149 = vmatpush1.msra.mxu0 0.0
        %1150 = vmatprep.subr.mxu0 0.0
        %1151 = vmatpush1.msra.mxu0 0.0
        %1152 = vmatprep.subr.mxu0 0.0
        %1153 = vmatpush1.msra.mxu0 0.0
        %1154 = vmatprep.subr.mxu0 0.0
        %1155 = vmatpush1.msra.mxu0 0.0
        %1156 = vmatprep.subr.mxu0 0.0
        %1157 = vmatpush1.msra.mxu0 0.0
        %1158 = vmatprep.subr.mxu0 0.0
        %1159 = vmatpush1.msra.mxu0 0.0
        %1160 = vmatprep.subr.mxu0 0.0
        %1161 = vmatpush1.msra.mxu0 0.0
        %1162 = vmatprep.subr.mxu0 0.0
        %1163 = vmatpush1.msra.mxu0 0.0
        %1164 = vmatprep.subr.mxu0 0.0
        %1165 = vmatpush1.msra.mxu0 0.0
        %1166 = vmatprep.subr.mxu0 0.0
        %1167 = vmatpush1.msra.mxu0 0.0
        %1168 = vmatprep.subr.mxu0 0.0
        %1169 = vmatpush1.msra.mxu0 0.0
        %1170 = vmatprep.subr.mxu0 0.0
        %1171 = vmatpush1.msra.mxu0 0.0
        %1172 = vmatprep.subr.mxu0 0.0
        %1173 = vmatpush1.msra.mxu0 0.0
        %1174 = vmatprep.subr.mxu0 0.0
        %1175 = vmatpush1.msra.mxu0 0.0
        %1176 = vmatprep.subr.mxu0 0.0
        %1177 = vmatpush1.msra.mxu0 0.0
        %1178 = vmatprep.mubr.f32.mxu0 0.0
        %1179 = vmatmul.mubr.f32.gmra.mrb[0].mxu0 %v1112
        %v1180 = vpop.f32.mrb[0].mxu0
        %v1181 = vadd.f32 0.0, %v1180
        %v1182 = vpop.f32.mrb[0].mxu0
        %1183 = vdwg.mxu0
        %v1185 = vsel %vm586, %v1006, 0
        %1187 = vmatprep.subr.mxu0 0.0
        %1188 = vmatpush1.msra.mxu0 %v1108
        %1189 = vmatprep.subr.mxu0 0.0
        %1190 = vmatpush1.msra.mxu0 0.0
        %1191 = vmatprep.subr.mxu0 0.0
        %1192 = vmatpush1.msra.mxu0 0.0
        %1193 = vmatprep.subr.mxu0 0.0
        %1194 = vmatpush1.msra.mxu0 0.0
        %1195 = vmatprep.subr.mxu0 0.0
        %1196 = vmatpush1.msra.mxu0 0.0
        %1197 = vmatprep.subr.mxu0 0.0
        %1198 = vmatpush1.msra.mxu0 0.0
        %1199 = vmatprep.subr.mxu0 0.0
        %1200 = vmatpush1.msra.mxu0 0.0
        %1201 = vmatprep.subr.mxu0 0.0
        %1202 = vmatpush1.msra.mxu0 0.0
        %1203 = vmatprep.subr.mxu0 0.0
        %1204 = vmatpush1.msra.mxu0 0.0
        %1205 = vmatprep.subr.mxu0 0.0
        %1206 = vmatpush1.msra.mxu0 0.0
        %1207 = vmatprep.subr.mxu0 0.0
        %1208 = vmatpush1.msra.mxu0 0.0
        %1209 = vmatprep.subr.mxu0 0.0
        %1210 = vmatpush1.msra.mxu0 0.0
        %1211 = vmatprep.subr.mxu0 0.0
        %1212 = vmatpush1.msra.mxu0 0.0
        %1213 = vmatprep.subr.mxu0 0.0
        %1214 = vmatpush1.msra.mxu0 0.0
        %1215 = vmatprep.subr.mxu0 0.0
        %1216 = vmatpush1.msra.mxu0 0.0
        %1217 = vmatprep.subr.mxu0 0.0
        %1218 = vmatpush1.msra.mxu0 0.0
        %1219 = vmatprep.subr.mxu0 0.0
        %1220 = vmatpush1.msra.mxu0 0.0
        %1221 = vmatprep.subr.mxu0 0.0
        %1222 = vmatpush1.msra.mxu0 0.0
        %1223 = vmatprep.subr.mxu0 0.0
        %1224 = vmatpush1.msra.mxu0 0.0
        %1225 = vmatprep.subr.mxu0 0.0
        %1226 = vmatpush1.msra.mxu0 0.0
        %1227 = vmatprep.subr.mxu0 0.0
        %1228 = vmatpush1.msra.mxu0 0.0
        %1229 = vmatprep.subr.mxu0 0.0
        %1230 = vmatpush1.msra.mxu0 0.0
        %1231 = vmatprep.subr.mxu0 0.0
        %1232 = vmatpush1.msra.mxu0 0.0
        %1233 = vmatprep.subr.mxu0 0.0
        %1234 = vmatpush1.msra.mxu0 0.0
        %1235 = vmatprep.subr.mxu0 0.0
        %1236 = vmatpush1.msra.mxu0 0.0
        %1237 = vmatprep.subr.mxu0 0.0
        %1238 = vmatpush1.msra.mxu0 0.0
        %1239 = vmatprep.subr.mxu0 0.0
        %1240 = vmatpush1.msra.mxu0 0.0
        %1241 = vmatprep.subr.mxu0 0.0
        %1242 = vmatpush1.msra.mxu0 0.0
        %1243 = vmatprep.subr.mxu0 0.0
        %1244 = vmatpush1.msra.mxu0 0.0
        %1245 = vmatprep.subr.mxu0 0.0
        %1246 = vmatpush1.msra.mxu0 0.0
        %1247 = vmatprep.subr.mxu0 0.0
        %1248 = vmatpush1.msra.mxu0 0.0
        %1249 = vmatprep.subr.mxu0 0.0
        %1250 = vmatpush1.msra.mxu0 0.0
        %1251 = vmatprep.mubr.f32.mxu0 0.0
        %1252 = vmatmul.mubr.f32.gmra.mrb[0].mxu0 %v1185
        %v1253 = vpop.f32.mrb[0].mxu0
        %v1254 = vadd.f32 0.0, %v1253
        %v1255 = vpop.f32.mrb[0].mxu0
        %1256 = vdwg.mxu0
        %v1258 = vsel %vm586, %v1054, 0
        %1260 = vmatprep.subr.mxu0 0.0
        %1261 = vmatpush1.msra.mxu0 %v1109
        %1262 = vmatprep.subr.mxu0 0.0
        %1263 = vmatpush1.msra.mxu0 0.0
        %1264 = vmatprep.subr.mxu0 0.0
        %1265 = vmatpush1.msra.mxu0 0.0
        %1266 = vmatprep.subr.mxu0 0.0
        %1267 = vmatpush1.msra.mxu0 0.0
        %1268 = vmatprep.subr.mxu0 0.0
        %1269 = vmatpush1.msra.mxu0 0.0
        %1270 = vmatprep.subr.mxu0 0.0
        %1271 = vmatpush1.msra.mxu0 0.0
        %1272 = vmatprep.subr.mxu0 0.0
        %1273 = vmatpush1.msra.mxu0 0.0
        %1274 = vmatprep.subr.mxu0 0.0
        %1275 = vmatpush1.msra.mxu0 0.0
        %1276 = vmatprep.subr.mxu0 0.0
        %1277 = vmatpush1.msra.mxu0 0.0
        %1278 = vmatprep.subr.mxu0 0.0
        %1279 = vmatpush1.msra.mxu0 0.0
        %1280 = vmatprep.subr.mxu0 0.0
        %1281 = vmatpush1.msra.mxu0 0.0
        %1282 = vmatprep.subr.mxu0 0.0
        %1283 = vmatpush1.msra.mxu0 0.0
        %1284 = vmatprep.subr.mxu0 0.0
        %1285 = vmatpush1.msra.mxu0 0.0
        %1286 = vmatprep.subr.mxu0 0.0
        %1287 = vmatpush1.msra.mxu0 0.0
        %1288 = vmatprep.subr.mxu0 0.0
        %1289 = vmatpush1.msra.mxu0 0.0
        %1290 = vmatprep.subr.mxu0 0.0
        %1291 = vmatpush1.msra.mxu0 0.0
        %1292 = vmatprep.subr.mxu0 0.0
        %1293 = vmatpush1.msra.mxu0 0.0
        %1294 = vmatprep.subr.mxu0 0.0
        %1295 = vmatpush1.msra.mxu0 0.0
        %1296 = vmatprep.subr.mxu0 0.0
        %1297 = vmatpush1.msra.mxu0 0.0
        %1298 = vmatprep.subr.mxu0 0.0
        %1299 = vmatpush1.msra.mxu0 0.0
        %1300 = vmatprep.subr.mxu0 0.0
        %1301 = vmatpush1.msra.mxu0 0.0
        %1302 = vmatprep.subr.mxu0 0.0
        %1303 = vmatpush1.msra.mxu0 0.0
        %1304 = vmatprep.subr.mxu0 0.0
        %1305 = vmatpush1.msra.mxu0 0.0
        %1306 = vmatprep.subr.mxu0 0.0
        %1307 = vmatpush1.msra.mxu0 0.0
        %1308 = vmatprep.subr.mxu0 0.0
        %1309 = vmatpush1.msra.mxu0 0.0
        %1310 = vmatprep.subr.mxu0 0.0
        %1311 = vmatpush1.msra.mxu0 0.0
        %1312 = vmatprep.subr.mxu0 0.0
        %1313 = vmatpush1.msra.mxu0 0.0
        %1314 = vmatprep.subr.mxu0 0.0
        %1315 = vmatpush1.msra.mxu0 0.0
        %1316 = vmatprep.subr.mxu0 0.0
        %1317 = vmatpush1.msra.mxu0 0.0
        %1318 = vmatprep.subr.mxu0 0.0
        %1319 = vmatpush1.msra.mxu0 0.0
        %1320 = vmatprep.subr.mxu0 0.0
        %1321 = vmatpush1.msra.mxu0 0.0
        %1322 = vmatprep.subr.mxu0 0.0
        %1323 = vmatpush1.msra.mxu0 0.0
        %1324 = vmatprep.mubr.f32.mxu0 0.0
        %1325 = vmatmul.mubr.f32.gmra.mrb[0].mxu0 %v1258
        %v1326 = vpop.f32.mrb[0].mxu0
        %v1327 = vadd.f32 0.0, %v1326
        %v1328 = vpop.f32.mrb[0].mxu0
        %1329 = vdwg.mxu0
        %v1331 = vsel %vm586, %v1102, 0
        %1333 = vmatprep.subr.mxu0 0.0
        %1334 = vmatpush1.msra.mxu0 %v1110
        %1335 = vmatprep.subr.mxu0 0.0
        %1336 = vmatpush1.msra.mxu0 0.0
        %1337 = vmatprep.subr.mxu0 0.0
        %1338 = vmatpush1.msra.mxu0 0.0
        %1339 = vmatprep.subr.mxu0 0.0
        %1340 = vmatpush1.msra.mxu0 0.0
        %1341 = vmatprep.subr.mxu0 0.0
        %1342 = vmatpush1.msra.mxu0 0.0
        %1343 = vmatprep.subr.mxu0 0.0
        %1344 = vmatpush1.msra.mxu0 0.0
        %1345 = vmatprep.subr.mxu0 0.0
        %1346 = vmatpush1.msra.mxu0 0.0
        %1347 = vmatprep.subr.mxu0 0.0
        %1348 = vmatpush1.msra.mxu0 0.0
        %1349 = vmatprep.subr.mxu0 0.0
        %1350 = vmatpush1.msra.mxu0 0.0
        %1351 = vmatprep.subr.mxu0 0.0
        %1352 = vmatpush1.msra.mxu0 0.0
        %1353 = vmatprep.subr.mxu0 0.0
        %1354 = vmatpush1.msra.mxu0 0.0
        %1355 = vmatprep.subr.mxu0 0.0
        %1356 = vmatpush1.msra.mxu0 0.0
        %1357 = vmatprep.subr.mxu0 0.0
        %1358 = vmatpush1.msra.mxu0 0.0
        %1359 = vmatprep.subr.mxu0 0.0
        %1360 = vmatpush1.msra.mxu0 0.0
        %1361 = vmatprep.subr.mxu0 0.0
        %1362 = vmatpush1.msra.mxu0 0.0
        %1363 = vmatprep.subr.mxu0 0.0
        %1364 = vmatpush1.msra.mxu0 0.0
        %1365 = vmatprep.subr.mxu0 0.0
        %1366 = vmatpush1.msra.mxu0 0.0
        %1367 = vmatprep.subr.mxu0 0.0
        %1368 = vmatpush1.msra.mxu0 0.0
        %1369 = vmatprep.subr.mxu0 0.0
        %1370 = vmatpush1.msra.mxu0 0.0
        %1371 = vmatprep.subr.mxu0 0.0
        %1372 = vmatpush1.msra.mxu0 0.0
        %1373 = vmatprep.subr.mxu0 0.0
        %1374 = vmatpush1.msra.mxu0 0.0
        %1375 = vmatprep.subr.mxu0 0.0
        %1376 = vmatpush1.msra.mxu0 0.0
        %1377 = vmatprep.subr.mxu0 0.0
        %1378 = vmatpush1.msra.mxu0 0.0
        %1379 = vmatprep.subr.mxu0 0.0
        %1380 = vmatpush1.msra.mxu0 0.0
        %1381 = vmatprep.subr.mxu0 0.0
        %1382 = vmatpush1.msra.mxu0 0.0
        %1383 = vmatprep.subr.mxu0 0.0
        %1384 = vmatpush1.msra.mxu0 0.0
        %1385 = vmatprep.subr.mxu0 0.0
        %1386 = vmatpush1.msra.mxu0 0.0
        %1387 = vmatprep.subr.mxu0 0.0
        %1388 = vmatpush1.msra.mxu0 0.0
        %1389 = vmatprep.subr.mxu0 0.0
        %1390 = vmatpush1.msra.mxu0 0.0
        %1391 = vmatprep.subr.mxu0 0.0
        %1392 = vmatpush1.msra.mxu0 0.0
        %1393 = vmatprep.subr.mxu0 0.0
        %1394 = vmatpush1.msra.mxu0 0.0
        %1395 = vmatprep.subr.mxu0 0.0
        %1396 = vmatpush1.msra.mxu0 0.0
        %1397 = vmatprep.mubr.f32.mxu0 0.0
        %1398 = vmatmul.mubr.f32.gmra.mrb[0].mxu0 %v1331
        %v1399 = vpop.f32.mrb[0].mxu0
        %v1400 = vadd.f32 0.0, %v1399
        %v1401 = vpop.f32.mrb[0].mxu0
        %1402 = vdwg.mxu0
        %v1403 = vsel %vm462, %v1181, 0.0
        %v1404 = vsel %vm462, %v1254, 0.0
        %v1405 = vadd.f32 %v1403, %v1404
        %v1406 = vsel %vm462, %v1327, 0.0
        %v1407 = vadd.f32 %v1405, %v1406
        %v1408 = vsel %vm462, %v1400, 0.0
        %v1409 = vadd.f32 %v1407, %v1408
        %v1410 = vld [vmem:[%s6] sm:$0x1]
        %v1412 = vlaneseq
        %v1413 = vshrl.u32 %v1412, 7
        %v1414 = vsub.s32 0, %v1413
        %v1415 = vrot.slane %v1410, %v1414
        %v1417 = vadd.f32 %v1409, %v1415
        %1418 = vst.msk [vmem:[%s418] sm:$0xff] %vm462, %v1417
        %s1419 = sand.u32 %s197, 1
        %s1420 = scalar_lea.sflag [#allocation4], %s1419
        %s1421 = sand.u32 %s197, 1
        %s1422 = smul.addr %s1421, 8
        %s1423 = scalar_lea.vmem [#allocation8], %s1422
        %s1424 = sand.u32 %s32, 1
        %s1425 = scalar_lea.sflag [#allocation10], %s1424
        %s1426 = sand.u32 %s223, 1
        %s1427 = smul.addr %s1426, 16
        %s1428 = scalar_lea.vmem [#allocation9], %s1427
        %s1429 = sand.u32 %s32, 1
        %s1430 = scalar_lea.sflag [#allocation10], %s1429
        %s1431 = sand.u32 %s249, 1
        %s1432 = smul.addr %s1431, 16
        %s1433 = scalar_lea.vmem [#allocation11], %s1432
        %p1434 = scmp.lt.s32.totalorder %s32, 1
        %s1435 = scalar_select %p1434, %s32, 1
        %s1436 = smul.addr %s1435, 8
        %s1437 = scalar_lea.vmem %s10, %s1436
        // Predicated region
        $region61: #{tpu_custom_call.1} parent=47 // pred_check
          %p1438 = pneg %p207
        $region62: #{tpu_custom_call.1} parent=47 // pred_check_branch
          %1440 = sbr.rel (%p1438) target = $region64
        $region63: #{tpu_custom_call.1} parent=47 // pred_region
          %s1442 = ssub.s32 128, 128
          %1443 = vsyncadd %s1420, %s1442
          %s1444 = smul.addr %s32, 128
          %s1445 = scalar_lea.hbm %s7, %s1444
          %s1447 = sshll.u32 %s1423, 4
          %s1448 = int_to_ptr.vmem [resolvable:$true] %s1447
          %1450 = dma.vmem_to_hbm [thread:$0]  %s1448, 128, %s1445, %s1420
        $region64: #{tpu_custom_call.1} parent=47 // pred_fallthru
          _
        // Predicated region
        $region65: #{tpu_custom_call.1} parent=47 // pred_check
          %p1451 = pneg %p233
        $region66: #{tpu_custom_call.1} parent=47 // pred_check_branch
          %1453 = sbr.rel (%p1451) target = $region68
        $region67: #{tpu_custom_call.1} parent=47 // pred_region
          %s1454 = smul.u32 4, %s32
          %s1456 = ssub.s32 256, 256
          %1457 = vsyncadd %s1425, %s1456
          %s1458 = smul.addr %s1454, 64
          %s1459 = scalar_lea.hbm %s8, %s1458
          %s1460 = sshll.u32 %s1428, 4
          %s1461 = int_to_ptr.vmem [resolvable:$true] %s1460
          %1466 = dma.vmem_to_hbm [thread:$0]  %s1461, 256, %s1459, %s1425, 64, 64, 4
        $region68: #{tpu_custom_call.1} parent=47 // pred_fallthru
          _
        // Predicated region
        $region69: #{tpu_custom_call.1} parent=47 // pred_check
          %p1467 = pneg %p259
        $region70: #{tpu_custom_call.1} parent=47 // pred_check_branch
          %1469 = sbr.rel (%p1467) target = $region72
        $region71: #{tpu_custom_call.1} parent=47 // pred_region
          %s1470 = smul.u32 4, %s32
          %s1472 = ssub.s32 256, 256
          %1473 = vsyncadd %s1430, %s1472
          %s1474 = smul.addr %s1470, 64
          %s1475 = scalar_lea.hbm %s9, %s1474
          %s1476 = sshll.u32 %s1433, 4
          %s1477 = int_to_ptr.vmem [resolvable:$true] %s1476
          %1482 = dma.vmem_to_hbm [thread:$0]  %s1477, 256, %s1475, %s1430, 64, 64, 4
        $region72: #{tpu_custom_call.1} parent=47 // pred_fallthru
          _
        // Predicated region
        $region73: #{tpu_custom_call.1} parent=47 // pred_check
          %p1483 = pneg %p285
        $region74: #{tpu_custom_call.1} parent=47 // pred_check_branch
          %1485 = sbr.rel (%p1483) target = $region76
        $region75: #{tpu_custom_call.1} parent=47 // pred_region
          _
        $region76: #{tpu_custom_call.1} parent=47 // pred_fallthru
          _
      $region48: #{tpu_custom_call.1} parent=5 // pred_fallthru
        _
      %p1486 = scmp.le.s32.totalorder 2, %s27
      // Predicated region
      $region77: #{tpu_custom_call.1} parent=5 // pred_check
        %p1487 = pneg %p1486
      $region78: #{tpu_custom_call.1} parent=5 // pred_check_branch
        %1489 = sbr.rel (%p1487) target = $region80
      $region79: #{tpu_custom_call.1} parent=5 // pred_region
        %s1490 = ssub.s32 %s27, 2
        // Predicated region
        $region81: #{tpu_custom_call.1} parent=79 // pred_check
          %p1491 = pneg %p213
        $region82: #{tpu_custom_call.1} parent=79 // pred_check_branch
          %1493 = sbr.rel (%p1491) target = $region84
        $region83: #{tpu_custom_call.1} parent=79 // pred_region
          %s1494 = sand.u32 %s198, 1
          %s1495 = scalar_lea.sflag [#allocation4], %s1494
          %s1496 = sand.u32 %s198, 1
          %s1497 = smul.addr %s1496, 8
          %s1498 = scalar_lea.vmem [#allocation8], %s1497
          %1499 = dma.done %s1495, 128
        $region84: #{tpu_custom_call.1} parent=79 // pred_fallthru
          _
        // Predicated region
        $region85: #{tpu_custom_call.1} parent=79 // pred_check
          %p1500 = pneg %p239
        $region86: #{tpu_custom_call.1} parent=79 // pred_check_branch
          %1502 = sbr.rel (%p1500) target = $region88
        $region87: #{tpu_custom_call.1} parent=79 // pred_region
          %s1503 = sand.u32 %s33, 1
          %s1504 = scalar_lea.sflag [#allocation10], %s1503
          %s1505 = sand.u32 %s224, 1
          %s1506 = smul.addr %s1505, 16
          %s1507 = scalar_lea.vmem [#allocation9], %s1506
          %1508 = dma.done %s1504, 256
        $region88: #{tpu_custom_call.1} parent=79 // pred_fallthru
          _
        // Predicated region
        $region89: #{tpu_custom_call.1} parent=79 // pred_check
          %p1509 = pneg %p265
        $region90: #{tpu_custom_call.1} parent=79 // pred_check_branch
          %1511 = sbr.rel (%p1509) target = $region92
        $region91: #{tpu_custom_call.1} parent=79 // pred_region
          %s1512 = sand.u32 %s33, 1
          %s1513 = scalar_lea.sflag [#allocation10], %s1512
          %s1514 = sand.u32 %s250, 1
          %s1515 = smul.addr %s1514, 16
          %s1516 = scalar_lea.vmem [#allocation11], %s1515
          %1517 = dma.done %s1513, 256
        $region92: #{tpu_custom_call.1} parent=79 // pred_fallthru
          _
        // Predicated region
        $region93: #{tpu_custom_call.1} parent=79 // pred_check
          %p1518 = pneg %p291
        $region94: #{tpu_custom_call.1} parent=79 // pred_check_branch
          %1520 = sbr.rel (%p1518) target = $region96
        $region95: #{tpu_custom_call.1} parent=79 // pred_region
          %p1521 = scmp.lt.s32.totalorder %s33, 1
          %s1522 = scalar_select %p1521, %s33, 1
          %s1523 = smul.addr %s1522, 8
          %s1524 = scalar_lea.vmem %s10, %s1523
        $region96: #{tpu_custom_call.1} parent=79 // pred_fallthru
          _
      $region80: #{tpu_custom_call.1} parent=5 // pred_fallthru
        _
    $region6: #{tpu_custom_call.1} parent=1 // loop_footer
      %s31 = sadd.s32 1, %s27
    $region7: #{tpu_custom_call.1} parent=1 // loop_footer_branch
      %26 = sbr.rel target = $region3
    $region8: #{tpu_custom_call.1} parent=1 // loop_exit
      _
    %1525 = vsyncpa [#allocation3], 1
    %s1526 = scalar_lea.sflag [#allocation3], 1
    %1527 = vsyncpa %s1526, 1
    %1528 = vsyncpa [#allocation6], 1
    %1529 = vsyncpa [#allocation4], 1
    %s1530 = scalar_lea.sflag [#allocation4], 1
    %1531 = vsyncpa %s1530, 1
    %1532 = vsyncpa [#allocation10], 1
    %s1533 = scalar_lea.sflag [#allocation10], 1
    %1534 = vsyncpa %s1533, 1

</llo_original>
